<compile_context>
chip_gen: v7x
topology: tpu7x:2x2x1
jax: 0.10.0
libtpu: 0.0.40
codegen_flags: <defaults>
</compile_context>

<pallas_src>
import functools

import jax
import jax.numpy as jnp
from jax.experimental import pallas as pl
from jax.experimental.pallas import tpu as pltpu


_DEC_CHANNELS = ((256, 128), (128, 64), (64, 32), (32, 1))
_LATENT_WIDTH = 64


# ----------------------------------------------------------------------------
# Pallas kernel: fused matmul + bias (+ optional ReLU), bf16 in / f32 out
# ----------------------------------------------------------------------------
def _matmul_bias_kernel(x_ref, w_ref, b_ref, o_ref, *, relu):
    acc = jnp.dot(x_ref[...], w_ref[...], preferred_element_type=jnp.float32)
    acc = acc + b_ref[...]                     # bias + ReLU in f32 (v5e-safe)
    if relu:
        acc = jnp.maximum(acc, 0.0)
    o_ref[...] = acc.astype(o_ref.dtype)


def matmul_bias(x, w, b, relu=False, tm_cap=256):
    """relu?(x @ w + b).  x:(M,K) any float, w:(K,N) bf16, b:(N,) f32.

    N must be a multiple of 128 (lane-dense stores).  Rows are tiled at most
    `tm_cap` at a time; the only padding path is the tiny FC input (M=2->8).
    """
    M, K = x.shape
    K2, N = w.shape
    assert K == K2 and N % 128 == 0, (x.shape, w.shape)

    x = x.astype(jnp.bfloat16)                 # bf16 operands, f32 accumulate
    if M <= tm_cap:
        tm = ((M + 7) // 8) * 8                # single block, sublane-aligned
    else:
        tm = tm_cap                            # bounded tiles + cdiv grid
    mp = pl.cdiv(M, tm) * tm
    if mp != M:                                # only hits the (2, 64) FC input
        x = jnp.pad(x, ((0, mp - M), (0, 0)))

    out = pl.pallas_call(
        functools.partial(_matmul_bias_kernel, relu=relu),
        out_shape=jax.ShapeDtypeStruct((mp, N), jnp.float32),
        grid=(mp // tm,),
        in_specs=[
            pl.BlockSpec((tm, K), lambda i: (i, 0)),
            pl.BlockSpec((K, N), lambda i: (0, 0)),
            pl.BlockSpec((1, N), lambda i: (0, 0)),
        ],
        out_specs=pl.BlockSpec((tm, N), lambda i: (i, 0)),
        compiler_params=pltpu.CompilerParams(
            dimension_semantics=("parallel",)),
    )(x, w, b.reshape(1, N))
    return out[:M] if mp != M else out


# ----------------------------------------------------------------------------
# ConvTranspose2d(k=3, s=2, p=1, output_padding=1) via parity decomposition
# ----------------------------------------------------------------------------
def _shifted_cat(x):
    """x:(B,H,W,C) NHWC -> (B*H*W, 4C) = [x(m,n)|x(m,n+1)|x(m+1,n)|x(m+1,n+1)]
    with zero fill past the high edges (the only padding the transposed conv
    needs)."""
    B, H, W, C = x.shape
    xp = jnp.pad(x, ((0, 0), (0, 1), (0, 1), (0, 0)))
    x4 = jnp.concatenate(
        [xp[:, :H, :W, :], xp[:, :H, 1:, :], xp[:, 1:, :W, :], xp[:, 1:, 1:, :]],
        axis=-1)
    return x4.reshape(B * H * W, 4 * C)


def _depth_to_space(y, B, H, W, cout_pad, cout):
    """y:(B*H*W, 4*cout_pad) with lane order (row-parity, col-parity, channel)
    -> (B, 2H, 2W, cout) NHWC.  Only the middle transpose moves data."""
    y = y.reshape(B, H, W, 2, 2, cout_pad)
    y = jnp.transpose(y, (0, 1, 3, 2, 4, 5))           # (B, H, 2, W, 2, Cp)
    y = y.reshape(B, 2 * H, 2 * W, cout_pad)
    return y[..., :cout] if cout_pad != cout else y


def conv_transpose2d_s2(x, w_all, b_all, cout, relu):
    """PyTorch ConvTranspose2d(3, stride=2, padding=1, output_padding=1) on
    NHWC input, with the 9 taps pre-packed into `w_all` (see _pack_deconv)."""
    B, H, W, _ = x.shape
    cout_pad = b_all.shape[0] // 4
    y = matmul_bias(_shifted_cat(x), w_all, b_all, relu=relu)
    return _depth_to_space(y, B, H, W, cout_pad, cout)


# ----------------------------------------------------------------------------
# Parameter init (PyTorch layouts) and one-time packing into kernel layouts
# ----------------------------------------------------------------------------
def init_raw_params(latent_width=_LATENT_WIDTH):
    """Synthetic weights in PyTorch's native layouts:
       Linear.weight (out, in), Linear.bias (out,);
       ConvTranspose2d.weight (Cin, Cout, 3, 3), .bias (Cout,)."""
    keys = jax.random.split(jax.random.PRNGKey(42), 5)

    def lin(key, fin, fout):
        kw_, kb_ = jax.random.split(key)
        w = jax.random.normal(kw_, (fout, fin), jnp.float32) / jnp.sqrt(float(fin))
        b = jax.random.normal(kb_, (fout,), jnp.float32) * 0.01
        return w, b

    def deconv(key, cin, cout):
        kw_, kb_ = jax.random.split(key)
        w = jax.random.normal(kw_, (cin, cout, 3, 3), jnp.float32) / jnp.sqrt(9.0 * cin)
        b = jax.random.normal(kb_, (cout,), jnp.float32) * 0.01
        return w, b

    raw = {"fc": lin(keys[0], latent_width, 256 * 2 * 2)}
    raw["deconv"] = [deconv(keys[1 + i], ci, co)
                     for i, (ci, co) in enumerate(_DEC_CHANNELS)]
    return raw


def _pack_fc(w, b):
    """Linear (out,in)/(out,) -> (in,out) matmul weight whose output columns
    are permuted so the FC directly emits the NHWC-flattened bottleneck:
    PyTorch column c*4 + i*2 + j  ->  new column (i*2 + j)*256 + c.
    This folds einops 'b (c w h) -> b c w h' plus the NCHW->NHWC transpose
    into the weight at zero runtime cost."""
    wt = jnp.transpose(w, (1, 0))                              # (in, out)
    perm = (jnp.arange(256 * 2 * 2).reshape(256, 2, 2)         # [c, i, j]
            .transpose(1, 2, 0).reshape(-1))                   # order (i, j, c)
    return wt[:, perm].astype(jnp.bfloat16), b[perm].astype(jnp.float32)


def _pack_deconv(w, b, cout_pad):
    """ConvTranspose2d weight (Cin, Cout, 3, 3) -> block matrix
    W_all[(shift s, cin), (parity, cout_pad)] implementing the four
    output-parity sub-convolutions of a stride-2/pad-1/output_padding-1
    transposed conv.

    Scatter semantics out[2h-1+p, 2w-1+q] += x[h, w] * w[cin, cout, p, q] give
      parity (0,0): x(m,n)   tap (1,1)
      parity (0,1): x(m,n+1) tap (1,0);  x(m,n)   tap (1,2)
      parity (1,0): x(m+1,n) tap (0,1);  x(m,n)   tap (2,1)
      parity (1,1): x(m+1,n+1)(0,0); x(m+1,n)(0,2); x(m,n+1)(2,0); x(m,n)(2,2)
    Taps come straight from the PyTorch weight -> no spatial-flip hazard."""
    cin, cout = w.shape[:2]
    wa = jnp.zeros((4, cin, 4, cout_pad), jnp.float32)
    taps = {  # (shift s in [x00,x01,x10,x11], parity pr*2+pc) -> (p, q)
        (0, 0): (1, 1),
        (1, 1): (1, 0), (0, 1): (1, 2),
        (2, 2): (0, 1), (0, 2): (2, 1),
        (3, 3): (0, 0), (2, 3): (0, 2), (1, 3): (2, 0), (0, 3): (2, 2),
    }
    for (s, par), (p, q) in taps.items():
        wa = wa.at[s, :, par, :cout].set(w[:, :, p, q])
    wa = wa.reshape(4 * cin, 4 * cout_pad).astype(jnp.bfloat16)
    ba = jnp.zeros((4, cout_pad), jnp.float32).at[:, :cout].set(b[None, :])
    return wa, ba.reshape(-1)


def prepare_params(raw):
    params = {"fc": _pack_fc(*raw["fc"]), "deconv": []}
    for w, b in raw["deconv"]:
        cout = w.shape[1]
        cout_pad = max(cout, 32)        # keep N = 4*cout_pad a multiple of 128
        params["deconv"].append(_pack_deconv(w, b, cout_pad))
    return params


# ----------------------------------------------------------------------------
# Decoder forward:  (B, latent_width) -> (B, 1, 32, 32)
# ----------------------------------------------------------------------------
def decoder_forward(params, latent):
    B = latent.shape[0]
    fc_w, fc_b = params["fc"]
    h = matmul_bias(latent, fc_w, fc_b, relu=False)     # (B, 1024), NHWC cols
    x = h.reshape(B, 2, 2, 256)                         # free reshape -> NHWC

    n_layers = len(params["deconv"])
    for i, (w_all, b_all) in enumerate(params["deconv"]):
        cout = _DEC_CHANNELS[i][1]
        x = conv_transpose2d_s2(x, w_all, b_all, cout, relu=(i < n_layers - 1))
        # 2x2 -> 4x4 -> 8x8 -> 16x16 -> 32x32

    # (B, 32, 32, 1) NHWC -> (B, 1, 32, 32) NCHW: free because C == 1.
    return x.reshape(B, 1, 32, 32)


if __name__ == "__main__":
    latent = jax.random.normal(jax.random.PRNGKey(0), (2, _LATENT_WIDTH),
                               jnp.float32)
    params = prepare_params(init_raw_params(latent_width=_LATENT_WIDTH))

    decoded = jax.jit(decoder_forward)(params, latent)
    jax.block_until_ready(decoded)

    assert decoded.shape == (2, 1, 32, 32), decoded.shape
    assert bool(jnp.all(jnp.isfinite(decoded)))
    print("KERNEL_OK")
</pallas_src>

<mosaic_0001>
module attributes {stable_mosaic.version = 11 : i64} {
  func.func @_matmul_bias_kernel(%arg0: i32, %arg1: memref<8x64xbf16, #tpu.memory_space<vmem>>, %arg2: memref<64x1024xbf16, #tpu.memory_space<vmem>>, %arg3: memref<1x1024xf32, #tpu.memory_space<vmem>>, %arg4: memref<8x1024xf32, #tpu.memory_space<vmem>>) attributes {dimension_semantics = [#tpu.dimension_semantics<parallel>], iteration_bounds = array<i64: 1>, scalar_prefetch = 0 : i64, scratch_operands = 0 : i64, tpu.core_type = #tpu.core_type<tc>, window_params = [{transform_indices = @transform_0, window_bounds = array<i64: 8, 64>}, {pipeline_mode = #tpu.pipeline_mode<synchronous>, transform_indices = @transform_1, window_bounds = array<i64: 64, 1024>}, {pipeline_mode = #tpu.pipeline_mode<synchronous>, transform_indices = @transform_2, window_bounds = array<i64: 1, 1024>}, {transform_indices = @transform_3, window_bounds = array<i64: 8, 1024>}]} {
    %c0 = arith.constant 0 : index
    %c0_0 = arith.constant 0 : index
    %0 = vector.load %arg1[%c0, %c0_0] : memref<8x64xbf16, #tpu.memory_space<vmem>>, vector<8x64xbf16>
    %c0_1 = arith.constant 0 : index
    %c0_2 = arith.constant 0 : index
    %1 = vector.load %arg2[%c0_1, %c0_2] : memref<64x1024xbf16, #tpu.memory_space<vmem>>, vector<64x1024xbf16>
    %cst = arith.constant dense<0.000000e+00> : vector<8x1024xf32>
    %2 = tpu.matmul %0, %1, %cst {dimension_numbers = #tpu.dot_dimension_numbers<[1], [0], [0], [1], [0, 0, 1, 1], [], []>} : vector<8x64xbf16>, vector<64x1024xbf16>, vector<8x1024xf32> -> vector<8x1024xf32>
    %c0_3 = arith.constant 0 : index
    %c0_4 = arith.constant 0 : index
    %3 = vector.load %arg3[%c0_3, %c0_4] : memref<1x1024xf32, #tpu.memory_space<vmem>>, vector<1x1024xf32>
    %4 = vector.broadcast %3 : vector<1x1024xf32> to vector<8x1024xf32>
    %5 = arith.addf %2, %4 : vector<8x1024xf32>
    %c0_5 = arith.constant 0 : index
    %c0_6 = arith.constant 0 : index
    %6 = vector.load %arg4[%c0_5, %c0_6] : memref<8x1024xf32, #tpu.memory_space<vmem>>, vector<8x1024xf32>
    tpu.vector_store %arg4[%c0_5, %c0_6], %5 {strides = array<i32>} : memref<8x1024xf32, #tpu.memory_space<vmem>>, vector<8x1024xf32>,
    return
  }
  func.func @transform_0(%arg0: i32) -> (i32, i32) {
    %c0_i32 = arith.constant 0 : i32
    %c0_i32_0 = arith.constant 0 : i32
    return %arg0, %c0_i32 : i32, i32
  }
  func.func @transform_1(%arg0: i32) -> (i32, i32) {
    %c0_i32 = arith.constant 0 : i32
    %c0_i32_0 = arith.constant 0 : i32
    %c0_i32_1 = arith.constant 0 : i32
    return %c0_i32, %c0_i32_0 : i32, i32
  }
  func.func @transform_2(%arg0: i32) -> (i32, i32) {
    %c0_i32 = arith.constant 0 : i32
    %c0_i32_0 = arith.constant 0 : i32
    %c0_i32_1 = arith.constant 0 : i32
    return %c0_i32, %c0_i32_0 : i32, i32
  }
  func.func @transform_3(%arg0: i32) -> (i32, i32) {
    %c0_i32 = arith.constant 0 : i32
    %c0_i32_0 = arith.constant 0 : i32
    return %arg0, %c0_i32 : i32, i32
  }
}

module attributes {stable_mosaic.version = 11 : i64} {
  func.func @_matmul_bias_kernel(%arg0: i32, %arg1: memref<8x1024xbf16, #tpu.memory_space<vmem>>, %arg2: memref<1024x512xbf16, #tpu.memory_space<vmem>>, %arg3: memref<1x512xf32, #tpu.memory_space<vmem>>, %arg4: memref<8x512xf32, #tpu.memory_space<vmem>>) attributes {dimension_semantics = [#tpu.dimension_semantics<parallel>], iteration_bounds = array<i64: 1>, scalar_prefetch = 0 : i64, scratch_operands = 0 : i64, tpu.core_type = #tpu.core_type<tc>, window_params = [{transform_indices = @transform_0, window_bounds = array<i64: 8, 1024>}, {pipeline_mode = #tpu.pipeline_mode<synchronous>, transform_indices = @transform_1, window_bounds = array<i64: 1024, 512>}, {pipeline_mode = #tpu.pipeline_mode<synchronous>, transform_indices = @transform_2, window_bounds = array<i64: 1, 512>}, {transform_indices = @transform_3, window_bounds = array<i64: 8, 512>}]} {
    %c0 = arith.constant 0 : index
    %c0_0 = arith.constant 0 : index
    %0 = vector.load %arg1[%c0, %c0_0] : memref<8x1024xbf16, #tpu.memory_space<vmem>>, vector<8x1024xbf16>
    %c0_1 = arith.constant 0 : index
    %c0_2 = arith.constant 0 : index
    %1 = vector.load %arg2[%c0_1, %c0_2] : memref<1024x512xbf16, #tpu.memory_space<vmem>>, vector<1024x512xbf16>
    %cst = arith.constant dense<0.000000e+00> : vector<8x512xf32>
    %2 = tpu.matmul %0, %1, %cst {dimension_numbers = #tpu.dot_dimension_numbers<[1], [0], [0], [1], [0, 0, 1, 1], [], []>} : vector<8x1024xbf16>, vector<1024x512xbf16>, vector<8x512xf32> -> vector<8x512xf32>
    %c0_3 = arith.constant 0 : index
    %c0_4 = arith.constant 0 : index
    %3 = vector.load %arg3[%c0_3, %c0_4] : memref<1x512xf32, #tpu.memory_space<vmem>>, vector<1x512xf32>
    %4 = vector.broadcast %3 : vector<1x512xf32> to vector<8x512xf32>
    %5 = arith.addf %2, %4 : vector<8x512xf32>
    %cst_5 = arith.constant 0.000000e+00 : f32
    %6 = vector.broadcast %cst_5 : f32 to vector<8x512xf32>
    %7 = arith.maximumf %5, %6 : vector<8x512xf32>
    %c0_6 = arith.constant 0 : index
    %c0_7 = arith.constant 0 : index
    %8 = vector.load %arg4[%c0_6, %c0_7] : memref<8x512xf32, #tpu.memory_space<vmem>>, vector<8x512xf32>
    tpu.vector_store %arg4[%c0_6, %c0_7], %7 {strides = array<i32>} : memref<8x512xf32, #tpu.memory_space<vmem>>, vector<8x512xf32>,
    return
  }
  func.func @transform_0(%arg0: i32) -> (i32, i32) {
    %c0_i32 = arith.constant 0 : i32
    %c0_i32_0 = arith.constant 0 : i32
    return %arg0, %c0_i32 : i32, i32
  }
  func.func @transform_1(%arg0: i32) -> (i32, i32) {
    %c0_i32 = arith.constant 0 : i32
    %c0_i32_0 = arith.constant 0 : i32
    %c0_i32_1 = arith.constant 0 : i32
    return %c0_i32, %c0_i32_0 : i32, i32
  }
  func.func @transform_2(%arg0: i32) -> (i32, i32) {
    %c0_i32 = arith.constant 0 : i32
    %c0_i32_0 = arith.constant 0 : i32
    %c0_i32_1 = arith.constant 0 : i32
    return %c0_i32, %c0_i32_0 : i32, i32
  }
  func.func @transform_3(%arg0: i32) -> (i32, i32) {
    %c0_i32 = arith.constant 0 : i32
    %c0_i32_0 = arith.constant 0 : i32
    return %arg0, %c0_i32 : i32, i32
  }
}

module attributes {stable_mosaic.version = 11 : i64} {
  func.func @_matmul_bias_kernel(%arg0: i32, %arg1: memref<32x512xbf16, #tpu.memory_space<vmem>>, %arg2: memref<512x256xbf16, #tpu.memory_space<vmem>>, %arg3: memref<1x256xf32, #tpu.memory_space<vmem>>, %arg4: memref<32x256xf32, #tpu.memory_space<vmem>>) attributes {dimension_semantics = [#tpu.dimension_semantics<parallel>], iteration_bounds = array<i64: 1>, scalar_prefetch = 0 : i64, scratch_operands = 0 : i64, tpu.core_type = #tpu.core_type<tc>, window_params = [{transform_indices = @transform_0, window_bounds = array<i64: 32, 512>}, {pipeline_mode = #tpu.pipeline_mode<synchronous>, transform_indices = @transform_1, window_bounds = array<i64: 512, 256>}, {pipeline_mode = #tpu.pipeline_mode<synchronous>, transform_indices = @transform_2, window_bounds = array<i64: 1, 256>}, {transform_indices = @transform_3, window_bounds = array<i64: 32, 256>}]} {
    %c0 = arith.constant 0 : index
    %c0_0 = arith.constant 0 : index
    %0 = vector.load %arg1[%c0, %c0_0] : memref<32x512xbf16, #tpu.memory_space<vmem>>, vector<32x512xbf16>
    %c0_1 = arith.constant 0 : index
    %c0_2 = arith.constant 0 : index
    %1 = vector.load %arg2[%c0_1, %c0_2] : memref<512x256xbf16, #tpu.memory_space<vmem>>, vector<512x256xbf16>
    %cst = arith.constant dense<0.000000e+00> : vector<32x256xf32>
    %2 = tpu.matmul %0, %1, %cst {dimension_numbers = #tpu.dot_dimension_numbers<[1], [0], [0], [1], [0, 0, 1, 1], [], []>} : vector<32x512xbf16>, vector<512x256xbf16>, vector<32x256xf32> -> vector<32x256xf32>
    %c0_3 = arith.constant 0 : index
    %c0_4 = arith.constant 0 : index
    %3 = vector.load %arg3[%c0_3, %c0_4] : memref<1x256xf32, #tpu.memory_space<vmem>>, vector<1x256xf32>
    %4 = vector.broadcast %3 : vector<1x256xf32> to vector<32x256xf32>
    %5 = arith.addf %2, %4 : vector<32x256xf32>
    %cst_5 = arith.constant 0.000000e+00 : f32
    %6 = vector.broadcast %cst_5 : f32 to vector<32x256xf32>
    %7 = arith.maximumf %5, %6 : vector<32x256xf32>
    %c0_6 = arith.constant 0 : index
    %c0_7 = arith.constant 0 : index
    %8 = vector.load %arg4[%c0_6, %c0_7] : memref<32x256xf32, #tpu.memory_space<vmem>>, vector<32x256xf32>
    tpu.vector_store %arg4[%c0_6, %c0_7], %7 {strides = array<i32>} : memref<32x256xf32, #tpu.memory_space<vmem>>, vector<32x256xf32>,
    return
  }
  func.func @transform_0(%arg0: i32) -> (i32, i32) {
    %c0_i32 = arith.constant 0 : i32
    %c0_i32_0 = arith.constant 0 : i32
    return %arg0, %c0_i32 : i32, i32
  }
  func.func @transform_1(%arg0: i32) -> (i32, i32) {
    %c0_i32 = arith.constant 0 : i32
    %c0_i32_0 = arith.constant 0 : i32
    %c0_i32_1 = arith.constant 0 : i32
    return %c0_i32, %c0_i32_0 : i32, i32
  }
  func.func @transform_2(%arg0: i32) -> (i32, i32) {
    %c0_i32 = arith.constant 0 : i32
    %c0_i32_0 = arith.constant 0 : i32
    %c0_i32_1 = arith.constant 0 : i32
    return %c0_i32, %c0_i32_0 : i32, i32
  }
  func.func @transform_3(%arg0: i32) -> (i32, i32) {
    %c0_i32 = arith.constant 0 : i32
    %c0_i32_0 = arith.constant 0 : i32
    return %arg0, %c0_i32 : i32, i32
  }
}

module attributes {stable_mosaic.version = 11 : i64} {
  func.func @_matmul_bias_kernel(%arg0: i32, %arg1: memref<128x256xbf16, #tpu.memory_space<vmem>>, %arg2: memref<256x128xbf16, #tpu.memory_space<vmem>>, %arg3: memref<1x128xf32, #tpu.memory_space<vmem>>, %arg4: memref<128x128xf32, #tpu.memory_space<vmem>>) attributes {dimension_semantics = [#tpu.dimension_semantics<parallel>], iteration_bounds = array<i64: 1>, scalar_prefetch = 0 : i64, scratch_operands = 0 : i64, tpu.core_type = #tpu.core_type<tc>, window_params = [{transform_indices = @transform_0, window_bounds = array<i64: 128, 256>}, {pipeline_mode = #tpu.pipeline_mode<synchronous>, transform_indices = @transform_1, window_bounds = array<i64: 256, 128>}, {pipeline_mode = #tpu.pipeline_mode<synchronous>, transform_indices = @transform_2, window_bounds = array<i64: 1, 128>}, {transform_indices = @transform_3, window_bounds = array<i64: 128, 128>}]} {
    %c0 = arith.constant 0 : index
    %c0_0 = arith.constant 0 : index
    %0 = vector.load %arg1[%c0, %c0_0] : memref<128x256xbf16, #tpu.memory_space<vmem>>, vector<128x256xbf16>
    %c0_1 = arith.constant 0 : index
    %c0_2 = arith.constant 0 : index
    %1 = vector.load %arg2[%c0_1, %c0_2] : memref<256x128xbf16, #tpu.memory_space<vmem>>, vector<256x128xbf16>
    %cst = arith.constant dense<0.000000e+00> : vector<128x128xf32>
    %2 = tpu.matmul %0, %1, %cst {dimension_numbers = #tpu.dot_dimension_numbers<[1], [0], [0], [1], [0, 0, 1, 1], [], []>} : vector<128x256xbf16>, vector<256x128xbf16>, vector<128x128xf32> -> vector<128x128xf32>
    %c0_3 = arith.constant 0 : index
    %c0_4 = arith.constant 0 : index
    %3 = vector.load %arg3[%c0_3, %c0_4] : memref<1x128xf32, #tpu.memory_space<vmem>>, vector<1x128xf32>
    %4 = vector.broadcast %3 : vector<1x128xf32> to vector<128x128xf32>
    %5 = arith.addf %2, %4 : vector<128x128xf32>
    %cst_5 = arith.constant 0.000000e+00 : f32
    %6 = vector.broadcast %cst_5 : f32 to vector<128x128xf32>
    %7 = arith.maximumf %5, %6 : vector<128x128xf32>
    %c0_6 = arith.constant 0 : index
    %c0_7 = arith.constant 0 : index
    %8 = vector.load %arg4[%c0_6, %c0_7] : memref<128x128xf32, #tpu.memory_space<vmem>>, vector<128x128xf32>
    tpu.vector_store %arg4[%c0_6, %c0_7], %7 {strides = array<i32>} : memref<128x128xf32, #tpu.memory_space<vmem>>, vector<128x128xf32>,
    return
  }
  func.func @transform_0(%arg0: i32) -> (i32, i32) {
    %c0_i32 = arith.constant 0 : i32
    %c0_i32_0 = arith.constant 0 : i32
    return %arg0, %c0_i32 : i32, i32
  }
  func.func @transform_1(%arg0: i32) -> (i32, i32) {
    %c0_i32 = arith.constant 0 : i32
    %c0_i32_0 = arith.constant 0 : i32
    %c0_i32_1 = arith.constant 0 : i32
    return %c0_i32, %c0_i32_0 : i32, i32
  }
  func.func @transform_2(%arg0: i32) -> (i32, i32) {
    %c0_i32 = arith.constant 0 : i32
    %c0_i32_0 = arith.constant 0 : i32
    %c0_i32_1 = arith.constant 0 : i32
    return %c0_i32, %c0_i32_0 : i32, i32
  }
  func.func @transform_3(%arg0: i32) -> (i32, i32) {
    %c0_i32 = arith.constant 0 : i32
    %c0_i32_0 = arith.constant 0 : i32
    return %arg0, %c0_i32 : i32, i32
  }
}

module attributes {stable_mosaic.version = 11 : i64} {
  func.func @_matmul_bias_kernel(%arg0: i32, %arg1: memref<256x128xbf16, #tpu.memory_space<vmem>>, %arg2: memref<128x128xbf16, #tpu.memory_space<vmem>>, %arg3: memref<1x128xf32, #tpu.memory_space<vmem>>, %arg4: memref<256x128xf32, #tpu.memory_space<vmem>>) attributes {dimension_semantics = [#tpu.dimension_semantics<parallel>], iteration_bounds = array<i64: 2>, scalar_prefetch = 0 : i64, scratch_operands = 0 : i64, tpu.core_type = #tpu.core_type<tc>, window_params = [{transform_indices = @transform_0, window_bounds = array<i64: 256, 128>}, {pipeline_mode = #tpu.pipeline_mode<synchronous>, transform_indices = @transform_1, window_bounds = array<i64: 128, 128>}, {pipeline_mode = #tpu.pipeline_mode<synchronous>, transform_indices = @transform_2, window_bounds = array<i64: 1, 128>}, {transform_indices = @transform_3, window_bounds = array<i64: 256, 128>}]} {
    %c0 = arith.constant 0 : index
    %c0_0 = arith.constant 0 : index
    %0 = vector.load %arg1[%c0, %c0_0] : memref<256x128xbf16, #tpu.memory_space<vmem>>, vector<256x128xbf16>
    %c0_1 = arith.constant 0 : index
    %c0_2 = arith.constant 0 : index
    %1 = vector.load %arg2[%c0_1, %c0_2] : memref<128x128xbf16, #tpu.memory_space<vmem>>, vector<128x128xbf16>
    %cst = arith.constant dense<0.000000e+00> : vector<256x128xf32>
    %2 = tpu.matmul %0, %1, %cst {dimension_numbers = #tpu.dot_dimension_numbers<[1], [0], [0], [1], [0, 0, 1, 1], [], []>} : vector<256x128xbf16>, vector<128x128xbf16>, vector<256x128xf32> -> vector<256x128xf32>
    %c0_3 = arith.constant 0 : index
    %c0_4 = arith.constant 0 : index
    %3 = vector.load %arg3[%c0_3, %c0_4] : memref<1x128xf32, #tpu.memory_space<vmem>>, vector<1x128xf32>
    %4 = vector.broadcast %3 : vector<1x128xf32> to vector<256x128xf32>
    %5 = arith.addf %2, %4 : vector<256x128xf32>
    %c0_5 = arith.constant 0 : index
    %c0_6 = arith.constant 0 : index
    %6 = vector.load %arg4[%c0_5, %c0_6] : memref<256x128xf32, #tpu.memory_space<vmem>>, vector<256x128xf32>
    tpu.vector_store %arg4[%c0_5, %c0_6], %5 {strides = array<i32>} : memref<256x128xf32, #tpu.memory_space<vmem>>, vector<256x128xf32>,
    return
  }
  func.func @transform_0(%arg0: i32) -> (i32, i32) {
    %c0_i32 = arith.constant 0 : i32
    %c0_i32_0 = arith.constant 0 : i32
    return %arg0, %c0_i32 : i32, i32
  }
  func.func @transform_1(%arg0: i32) -> (i32, i32) {
    %c0_i32 = arith.constant 0 : i32
    %c0_i32_0 = arith.constant 0 : i32
    %c0_i32_1 = arith.constant 0 : i32
    return %c0_i32, %c0_i32_0 : i32, i32
  }
  func.func @transform_2(%arg0: i32) -> (i32, i32) {
    %c0_i32 = arith.constant 0 : i32
    %c0_i32_0 = arith.constant 0 : i32
    %c0_i32_1 = arith.constant 0 : i32
    return %c0_i32, %c0_i32_0 : i32, i32
  }
  func.func @transform_3(%arg0: i32) -> (i32, i32) {
    %c0_i32 = arith.constant 0 : i32
    %c0_i32_0 = arith.constant 0 : i32
    return %arg0, %c0_i32 : i32, i32
  }
}

</mosaic_0001>

<llo_original>
// kernel: decoder_forward.5
$region0: #{decoder_forward.5}
  #allocation0 [shape = 'u32[]', space=smem, size = 0x4, offset = 0x4, fixed_abs, tag = 'smem constant byte address 0x4 - core index']
  #allocation1 [shape = 'u32[144,128]{1,0:T(1,128)}', space=vmem, size = 0x12000, scoped, tag = 'internal scratch']
  %s0 = inlined_call_operand.vmem [shape: bf16[8,64], index: 0, kind: input, shape index: {}]
  %s1 = inlined_call_operand.hbm [shape: bf16[64,1024], index: 1, kind: input, shape index: {}]
  %s2 = inlined_call_operand.vmem [shape: f32[1,1024], index: 2, kind: input, shape index: {}]
  %s3 = inlined_call_operand.vmem [shape: f32[8,1024], index: 3, kind: output, shape index: {}]
  %s4 = sld [smem:[#allocation0]]
  $region26: #{decoder_forward.5} parent=0
    _
  %s6 = ssub.s32 1, %s4
  %s7 = scalar_select 0, %s6, %s4
  $region1: #{decoder_forward.5} parent=0
    #allocation2 [shape = 'u8[131072]{0}', space=vmem, size = 0x20000, scoped, tag = 'input window, operand 1, single buffered']
    #allocation3 [shape = 's32[1]{0}', space=sflag, size = 0x4, scoped, tag = 'scoped memory for decoder_forward.5']
    %8 = vsyncpa [#allocation3], 0
    // Predicated region
    $region2: #{decoder_forward.5} parent=1 // pred_check
      _
    $region3: #{decoder_forward.5} parent=1 // pred_check_branch
      %10 = sbr.rel (0) target = $region5
    $region4: #{decoder_forward.5} parent=1 // pred_region
      _
    $region5: #{decoder_forward.5} parent=1 // pred_fallthru
      _
    // Predicated region
    $region6: #{decoder_forward.5} parent=1 // pred_check
      _
    $region7: #{decoder_forward.5} parent=1 // pred_check_branch
      %12 = sbr.rel (0) target = $region9
    $region8: #{decoder_forward.5} parent=1 // pred_region
      %s14 = ssub.s32 4096, 4096
      %15 = vsyncadd [#allocation3], %s14
      %s16 = sshll.u32 [#allocation2], 4
      %s17 = int_to_ptr.vmem [resolvable:$true] %s16
      %22 = dma.hbm_to_vmem [thread:$0]  %s1, 4096, %s17, [#allocation3], 512, 512, 32
    $region9: #{decoder_forward.5} parent=1 // pred_fallthru
      _
    // Predicated region
    $region10: #{decoder_forward.5} parent=1 // pred_check
      _
    $region11: #{decoder_forward.5} parent=1 // pred_check_branch
      %24 = sbr.rel (0) target = $region13
    $region12: #{decoder_forward.5} parent=1 // pred_region
      _
    $region13: #{decoder_forward.5} parent=1 // pred_fallthru
      _
    // Predicated region
    $region14: #{decoder_forward.5} parent=1 // pred_check
      _
    $region15: #{decoder_forward.5} parent=1 // pred_check_branch
      %26 = sbr.rel (0) target = $region17
    $region16: #{decoder_forward.5} parent=1 // pred_region
      %27 = dma.done [#allocation3], 4096
    $region17: #{decoder_forward.5} parent=1 // pred_fallthru
      _
    %v29 = vld [vmem:[%s0] sm:$0xf]
    %v30 = vld [vmem:[#allocation2] sm:$0xff]
    %v31 = vld [vmem:[#allocation2 + $0x8] sm:$0xff]
    %v32 = vld [vmem:[#allocation2 + $0x10] sm:$0xff]
    %v33 = vld [vmem:[#allocation2 + $0x18] sm:$0xff]
    %v34 = vld [vmem:[#allocation2 + $0x20] sm:$0xff]
    %v35 = vld [vmem:[#allocation2 + $0x28] sm:$0xff]
    %v36 = vld [vmem:[#allocation2 + $0x30] sm:$0xff]
    %v37 = vld [vmem:[#allocation2 + $0x38] sm:$0xff]
    %v38 = vld [vmem:[#allocation2 + $0x40] sm:$0xff]
    %v39 = vld [vmem:[#allocation2 + $0x48] sm:$0xff]
    %v40 = vld [vmem:[#allocation2 + $0x50] sm:$0xff]
    %v41 = vld [vmem:[#allocation2 + $0x58] sm:$0xff]
    %v42 = vld [vmem:[#allocation2 + $0x60] sm:$0xff]
    %v43 = vld [vmem:[#allocation2 + $0x68] sm:$0xff]
    %v44 = vld [vmem:[#allocation2 + $0x70] sm:$0xff]
    %v45 = vld [vmem:[#allocation2 + $0x78] sm:$0xff]
    %v46 = vld [vmem:[#allocation2 + $0x80] sm:$0xff]
    %v47 = vld [vmem:[#allocation2 + $0x88] sm:$0xff]
    %v48 = vld [vmem:[#allocation2 + $0x90] sm:$0xff]
    %v49 = vld [vmem:[#allocation2 + $0x98] sm:$0xff]
    %v50 = vld [vmem:[#allocation2 + $0xa0] sm:$0xff]
    %v51 = vld [vmem:[#allocation2 + $0xa8] sm:$0xff]
    %v52 = vld [vmem:[#allocation2 + $0xb0] sm:$0xff]
    %v53 = vld [vmem:[#allocation2 + $0xb8] sm:$0xff]
    %v54 = vld [vmem:[#allocation2 + $0xc0] sm:$0xff]
    %v55 = vld [vmem:[#allocation2 + $0xc8] sm:$0xff]
    %v56 = vld [vmem:[#allocation2 + $0xd0] sm:$0xff]
    %v57 = vld [vmem:[#allocation2 + $0xd8] sm:$0xff]
    %v58 = vld [vmem:[#allocation2 + $0xe0] sm:$0xff]
    %v59 = vld [vmem:[#allocation2 + $0xe8] sm:$0xff]
    %v60 = vld [vmem:[#allocation2 + $0xf0] sm:$0xff]
    %v61 = vld [vmem:[#allocation2 + $0xf8] sm:$0xff]
    %v62 = vld [vmem:[%s2] sm:$0xff]
    %v64 = vlaneseq
    %v65 = vshrl.u32 %v64, 7
    %v66 = vsub.s32 0, %v65
    %v67 = vrot.slane %v62, %v66
    %v68 = vlaneseq
    %v69 = vshrl.u32 %v68, 7
    %v70 = vsub.s32 1, %v69
    %v71 = vrot.slane %v62, %v70
    %v72 = vlaneseq
    %v73 = vshrl.u32 %v72, 7
    %v74 = vsub.s32 2, %v73
    %v75 = vrot.slane %v62, %v74
    %v76 = vlaneseq
    %v77 = vshrl.u32 %v76, 7
    %v78 = vsub.s32 3, %v77
    %v79 = vrot.slane %v62, %v78
    %v80 = vlaneseq
    %v81 = vshrl.u32 %v80, 7
    %v82 = vsub.s32 4, %v81
    %v83 = vrot.slane %v62, %v82
    %v84 = vlaneseq
    %v85 = vshrl.u32 %v84, 7
    %v86 = vsub.s32 5, %v85
    %v87 = vrot.slane %v62, %v86
    %v88 = vlaneseq
    %v89 = vshrl.u32 %v88, 7
    %v90 = vsub.s32 6, %v89
    %v91 = vrot.slane %v62, %v90
    %v92 = vlaneseq
    %v93 = vshrl.u32 %v92, 7
    %v94 = vsub.s32 7, %v93
    %v95 = vrot.slane %v62, %v94
    %v136 = vunpack.c.l.b16 %v30
    %v137 = vunpack.c.h.b16 %v30
    %v138 = vunpack.c.l.b16 %v31
    %v139 = vunpack.c.h.b16 %v31
    %v140 = vunpack.c.l.b16 %v32
    %v141 = vunpack.c.h.b16 %v32
    %v142 = vunpack.c.l.b16 %v33
    %v143 = vunpack.c.h.b16 %v33
    %v144 = vunpack.c.l.b16 %v34
    %v145 = vunpack.c.h.b16 %v34
    %v146 = vunpack.c.l.b16 %v35
    %v147 = vunpack.c.h.b16 %v35
    %v148 = vunpack.c.l.b16 %v36
    %v149 = vunpack.c.h.b16 %v36
    %v150 = vunpack.c.l.b16 %v37
    %v151 = vunpack.c.h.b16 %v37
    %v152 = vunpack.c.l.b16 %v38
    %v153 = vunpack.c.h.b16 %v38
    %v154 = vunpack.c.l.b16 %v39
    %v155 = vunpack.c.h.b16 %v39
    %v156 = vunpack.c.l.b16 %v40
    %v157 = vunpack.c.h.b16 %v40
    %v158 = vunpack.c.l.b16 %v41
    %v159 = vunpack.c.h.b16 %v41
    %v160 = vunpack.c.l.b16 %v42
    %v161 = vunpack.c.h.b16 %v42
    %v162 = vunpack.c.l.b16 %v43
    %v163 = vunpack.c.h.b16 %v43
    %v164 = vunpack.c.l.b16 %v44
    %v165 = vunpack.c.h.b16 %v44
    %v166 = vunpack.c.l.b16 %v45
    %v167 = vunpack.c.h.b16 %v45
    %v168 = vunpack.c.l.b16 %v46
    %v169 = vunpack.c.h.b16 %v46
    %v170 = vunpack.c.l.b16 %v47
    %v171 = vunpack.c.h.b16 %v47
    %v172 = vunpack.c.l.b16 %v48
    %v173 = vunpack.c.h.b16 %v48
    %v174 = vunpack.c.l.b16 %v49
    %v175 = vunpack.c.h.b16 %v49
    %v176 = vunpack.c.l.b16 %v50
    %v177 = vunpack.c.h.b16 %v50
    %v178 = vunpack.c.l.b16 %v51
    %v179 = vunpack.c.h.b16 %v51
    %v180 = vunpack.c.l.b16 %v52
    %v181 = vunpack.c.h.b16 %v52
    %v182 = vunpack.c.l.b16 %v53
    %v183 = vunpack.c.h.b16 %v53
    %v184 = vunpack.c.l.b16 %v54
    %v185 = vunpack.c.h.b16 %v54
    %v186 = vunpack.c.l.b16 %v55
    %v187 = vunpack.c.h.b16 %v55
    %v188 = vunpack.c.l.b16 %v56
    %v189 = vunpack.c.h.b16 %v56
    %v190 = vunpack.c.l.b16 %v57
    %v191 = vunpack.c.h.b16 %v57
    %v192 = vunpack.c.l.b16 %v58
    %v193 = vunpack.c.h.b16 %v58
    %v194 = vunpack.c.l.b16 %v59
    %v195 = vunpack.c.h.b16 %v59
    %v196 = vunpack.c.l.b16 %v60
    %v197 = vunpack.c.h.b16 %v60
    %v198 = vunpack.c.l.b16 %v61
    %v199 = vunpack.c.h.b16 %v61
    %v200 = vpack.c.b16 %v144, %v136
    %v201 = vpack.c.b16 %v145, %v137
    %v202 = vpack.c.b16 %v146, %v138
    %v203 = vpack.c.b16 %v147, %v139
    %v204 = vpack.c.b16 %v148, %v140
    %v205 = vpack.c.b16 %v149, %v141
    %v206 = vpack.c.b16 %v150, %v142
    %v207 = vpack.c.b16 %v151, %v143
    %v208 = vpack.c.b16 %v160, %v152
    %v209 = vpack.c.b16 %v161, %v153
    %v210 = vpack.c.b16 %v162, %v154
    %v211 = vpack.c.b16 %v163, %v155
    %v212 = vpack.c.b16 %v164, %v156
    %v213 = vpack.c.b16 %v165, %v157
    %v214 = vpack.c.b16 %v166, %v158
    %v215 = vpack.c.b16 %v167, %v159
    %v216 = vpack.c.b16 %v176, %v168
    %v217 = vpack.c.b16 %v177, %v169
    %v218 = vpack.c.b16 %v178, %v170
    %v219 = vpack.c.b16 %v179, %v171
    %v220 = vpack.c.b16 %v180, %v172
    %v221 = vpack.c.b16 %v181, %v173
    %v222 = vpack.c.b16 %v182, %v174
    %v223 = vpack.c.b16 %v183, %v175
    %v224 = vpack.c.b16 %v192, %v184
    %v225 = vpack.c.b16 %v193, %v185
    %v226 = vpack.c.b16 %v194, %v186
    %v227 = vpack.c.b16 %v195, %v187
    %v228 = vpack.c.b16 %v196, %v188
    %v229 = vpack.c.b16 %v197, %v189
    %v230 = vpack.c.b16 %v198, %v190
    %v231 = vpack.c.b16 %v199, %v191
    %vm264 = vcmask 523264
    %v266 = vsel %vm264, %v29, 0
    %268 = vmatprep.subr.bf16.mxu0 %v201
    %269 = vmatpush1.bf16.msra.mxu0 %v200
    %270 = vmatprep.subr.bf16.mxu0 %v209
    %271 = vmatpush1.bf16.msra.mxu0 %v208
    %272 = vmatprep.subr.bf16.mxu0 %v217
    %273 = vmatpush1.bf16.msra.mxu0 %v216
    %274 = vmatprep.subr.bf16.mxu0 %v225
    %275 = vmatpush1.bf16.msra.mxu0 %v224
    %276 = vmatprep.subr.bf16.mxu0 0
    %277 = vmatpush1.bf16.msra.mxu0 0
    %278 = vmatprep.subr.bf16.mxu0 0
    %279 = vmatpush1.bf16.msra.mxu0 0
    %280 = vmatprep.subr.bf16.mxu0 0
    %281 = vmatpush1.bf16.msra.mxu0 0
    %282 = vmatprep.subr.bf16.mxu0 0
    %283 = vmatpush1.bf16.msra.mxu0 0
    %284 = vmatprep.subr.bf16.mxu0 0
    %285 = vmatpush1.bf16.msra.mxu0 0
    %286 = vmatprep.subr.bf16.mxu0 0
    %287 = vmatpush1.bf16.msra.mxu0 0
    %288 = vmatprep.subr.bf16.mxu0 0
    %289 = vmatpush1.bf16.msra.mxu0 0
    %290 = vmatprep.subr.bf16.mxu0 0
    %291 = vmatpush1.bf16.msra.mxu0 0
    %292 = vmatprep.subr.bf16.mxu0 0
    %293 = vmatpush1.bf16.msra.mxu0 0
    %294 = vmatprep.subr.bf16.mxu0 0
    %295 = vmatpush1.bf16.msra.mxu0 0
    %296 = vmatprep.subr.bf16.mxu0 0
    %297 = vmatpush1.bf16.msra.mxu0 0
    %298 = vmatprep.subr.bf16.mxu0 0
    %299 = vmatpush1.bf16.msra.mxu0 0
    %300 = vmatprep.mubr.bf16.mxu0 0
    %301 = vmatmul.mubr.bf16.gmra.mrb[0].mxu0 %v266
    %v302 = vpop.f32.mrb[0].mxu0
    %v303 = vadd.f32 %v67, %v302
    %v304 = vpop.f32.mrb[0].mxu0
    %v305 = vadd.f32 %v71, %v304
    %v306 = vpop.f32.mrb[0].mxu0
    %v307 = vpop.f32.mrb[0].mxu0
    %308 = vdwg.mxu0
    %309 = vmatprep.subr.bf16.mxu0 %v203
    %310 = vmatpush1.bf16.msra.mxu0 %v202
    %311 = vmatprep.subr.bf16.mxu0 %v211
    %312 = vmatpush1.bf16.msra.mxu0 %v210
    %313 = vmatprep.subr.bf16.mxu0 %v219
    %314 = vmatpush1.bf16.msra.mxu0 %v218
    %315 = vmatprep.subr.bf16.mxu0 %v227
    %316 = vmatpush1.bf16.msra.mxu0 %v226
    %317 = vmatprep.subr.bf16.mxu0 0
    %318 = vmatpush1.bf16.msra.mxu0 0
    %319 = vmatprep.subr.bf16.mxu0 0
    %320 = vmatpush1.bf16.msra.mxu0 0
    %321 = vmatprep.subr.bf16.mxu0 0
    %322 = vmatpush1.bf16.msra.mxu0 0
    %323 = vmatprep.subr.bf16.mxu0 0
    %324 = vmatpush1.bf16.msra.mxu0 0
    %325 = vmatprep.subr.bf16.mxu0 0
    %326 = vmatpush1.bf16.msra.mxu0 0
    %327 = vmatprep.subr.bf16.mxu0 0
    %328 = vmatpush1.bf16.msra.mxu0 0
    %329 = vmatprep.subr.bf16.mxu0 0
    %330 = vmatpush1.bf16.msra.mxu0 0
    %331 = vmatprep.subr.bf16.mxu0 0
    %332 = vmatpush1.bf16.msra.mxu0 0
    %333 = vmatprep.subr.bf16.mxu0 0
    %334 = vmatpush1.bf16.msra.mxu0 0
    %335 = vmatprep.subr.bf16.mxu0 0
    %336 = vmatpush1.bf16.msra.mxu0 0
    %337 = vmatprep.subr.bf16.mxu0 0
    %338 = vmatpush1.bf16.msra.mxu0 0
    %339 = vmatprep.subr.bf16.mxu0 0
    %340 = vmatpush1.bf16.msra.mxu0 0
    %341 = vmatprep.mubr.bf16.mxu0 0
    %342 = vmatmul.mubr.bf16.gmra.mrb[0].mxu0 %v266
    %v343 = vpop.f32.mrb[0].mxu0
    %v344 = vadd.f32 %v75, %v343
    %v345 = vpop.f32.mrb[0].mxu0
    %v346 = vadd.f32 %v79, %v345
    %v347 = vpop.f32.mrb[0].mxu0
    %v348 = vpop.f32.mrb[0].mxu0
    %349 = vdwg.mxu0
    %350 = vmatprep.subr.bf16.mxu0 %v205
    %351 = vmatpush1.bf16.msra.mxu0 %v204
    %352 = vmatprep.subr.bf16.mxu0 %v213
    %353 = vmatpush1.bf16.msra.mxu0 %v212
    %354 = vmatprep.subr.bf16.mxu0 %v221
    %355 = vmatpush1.bf16.msra.mxu0 %v220
    %356 = vmatprep.subr.bf16.mxu0 %v229
    %357 = vmatpush1.bf16.msra.mxu0 %v228
    %358 = vmatprep.subr.bf16.mxu0 0
    %359 = vmatpush1.bf16.msra.mxu0 0
    %360 = vmatprep.subr.bf16.mxu0 0
    %361 = vmatpush1.bf16.msra.mxu0 0
    %362 = vmatprep.subr.bf16.mxu0 0
    %363 = vmatpush1.bf16.msra.mxu0 0
    %364 = vmatprep.subr.bf16.mxu0 0
    %365 = vmatpush1.bf16.msra.mxu0 0
    %366 = vmatprep.subr.bf16.mxu0 0
    %367 = vmatpush1.bf16.msra.mxu0 0
    %368 = vmatprep.subr.bf16.mxu0 0
    %369 = vmatpush1.bf16.msra.mxu0 0
    %370 = vmatprep.subr.bf16.mxu0 0
    %371 = vmatpush1.bf16.msra.mxu0 0
    %372 = vmatprep.subr.bf16.mxu0 0
    %373 = vmatpush1.bf16.msra.mxu0 0
    %374 = vmatprep.subr.bf16.mxu0 0
    %375 = vmatpush1.bf16.msra.mxu0 0
    %376 = vmatprep.subr.bf16.mxu0 0
    %377 = vmatpush1.bf16.msra.mxu0 0
    %378 = vmatprep.subr.bf16.mxu0 0
    %379 = vmatpush1.bf16.msra.mxu0 0
    %380 = vmatprep.subr.bf16.mxu0 0
    %381 = vmatpush1.bf16.msra.mxu0 0
    %382 = vmatprep.mubr.bf16.mxu0 0
    %383 = vmatmul.mubr.bf16.gmra.mrb[0].mxu0 %v266
    %v384 = vpop.f32.mrb[0].mxu0
    %v385 = vadd.f32 %v83, %v384
    %v386 = vpop.f32.mrb[0].mxu0
    %v387 = vadd.f32 %v87, %v386
    %v388 = vpop.f32.mrb[0].mxu0
    %v389 = vpop.f32.mrb[0].mxu0
    %390 = vdwg.mxu0
    %391 = vmatprep.subr.bf16.mxu0 %v207
    %392 = vmatpush1.bf16.msra.mxu0 %v206
    %393 = vmatprep.subr.bf16.mxu0 %v215
    %394 = vmatpush1.bf16.msra.mxu0 %v214
    %395 = vmatprep.subr.bf16.mxu0 %v223
    %396 = vmatpush1.bf16.msra.mxu0 %v222
    %397 = vmatprep.subr.bf16.mxu0 %v231
    %398 = vmatpush1.bf16.msra.mxu0 %v230
    %399 = vmatprep.subr.bf16.mxu0 0
    %400 = vmatpush1.bf16.msra.mxu0 0
    %401 = vmatprep.subr.bf16.mxu0 0
    %402 = vmatpush1.bf16.msra.mxu0 0
    %403 = vmatprep.subr.bf16.mxu0 0
    %404 = vmatpush1.bf16.msra.mxu0 0
    %405 = vmatprep.subr.bf16.mxu0 0
    %406 = vmatpush1.bf16.msra.mxu0 0
    %407 = vmatprep.subr.bf16.mxu0 0
    %408 = vmatpush1.bf16.msra.mxu0 0
    %409 = vmatprep.subr.bf16.mxu0 0
    %410 = vmatpush1.bf16.msra.mxu0 0
    %411 = vmatprep.subr.bf16.mxu0 0
    %412 = vmatpush1.bf16.msra.mxu0 0
    %413 = vmatprep.subr.bf16.mxu0 0
    %414 = vmatpush1.bf16.msra.mxu0 0
    %415 = vmatprep.subr.bf16.mxu0 0
    %416 = vmatpush1.bf16.msra.mxu0 0
    %417 = vmatprep.subr.bf16.mxu0 0
    %418 = vmatpush1.bf16.msra.mxu0 0
    %419 = vmatprep.subr.bf16.mxu0 0
    %420 = vmatpush1.bf16.msra.mxu0 0
    %421 = vmatprep.subr.bf16.mxu0 0
    %422 = vmatpush1.bf16.msra.mxu0 0
    %423 = vmatprep.mubr.bf16.mxu0 0
    %424 = vmatmul.mubr.bf16.gmra.mrb[0].mxu0 %v266
    %v425 = vpop.f32.mrb[0].mxu0
    %v426 = vadd.f32 %v91, %v425
    %v427 = vpop.f32.mrb[0].mxu0
    %v428 = vadd.f32 %v95, %v427
    %v429 = vpop.f32.mrb[0].mxu0
    %v430 = vpop.f32.mrb[0].mxu0
    %431 = vdwg.mxu0
    %432 = vst [vmem:[%s3] sm:$0xff] %v303
    %433 = vst [vmem:[%s3 + $0x8] sm:$0xff] %v305
    %434 = vst [vmem:[%s3 + $0x10] sm:$0xff] %v344
    %435 = vst [vmem:[%s3 + $0x18] sm:$0xff] %v346
    %436 = vst [vmem:[%s3 + $0x20] sm:$0xff] %v385
    %437 = vst [vmem:[%s3 + $0x28] sm:$0xff] %v387
    %438 = vst [vmem:[%s3 + $0x30] sm:$0xff] %v426
    %439 = vst [vmem:[%s3 + $0x38] sm:$0xff] %v428
    // Predicated region
    $region18: #{decoder_forward.5} parent=1 // pred_check
      _
    $region19: #{decoder_forward.5} parent=1 // pred_check_branch
      %441 = sbr.rel (0) target = $region21
    $region20: #{decoder_forward.5} parent=1 // pred_region
      _
    $region21: #{decoder_forward.5} parent=1 // pred_fallthru
      _
    // Predicated region
    $region22: #{decoder_forward.5} parent=1 // pred_check
      _
    $region23: #{decoder_forward.5} parent=1 // pred_check_branch
      %443 = sbr.rel (0) target = $region25
    $region24: #{decoder_forward.5} parent=1 // pred_region
      _
    $region25: #{decoder_forward.5} parent=1 // pred_fallthru
      _
    %444 = vsyncpa [#allocation3], 1

// kernel: decoder_forward.7
$region0: #{decoder_forward.7}
  #allocation0 [shape = 'u32[]', space=smem, size = 0x4, offset = 0x4, fixed_abs, tag = 'smem constant byte address 0x4 - core index']
  #allocation1 [shape = 'u32[144,128]{1,0:T(1,128)}', space=vmem, size = 0x12000, scoped, tag = 'internal scratch']
  %s0 = inlined_call_operand.vmem [shape: bf16[32,512], index: 0, kind: input, shape index: {}]
  %s1 = inlined_call_operand.vmem [shape: bf16[512,256], index: 1, kind: input, shape index: {}]
  %s2 = inlined_call_operand.vmem [shape: f32[1,256], index: 2, kind: input, shape index: {}]
  %s3 = inlined_call_operand.vmem [shape: f32[32,256], index: 3, kind: output, shape index: {}]
  %s4 = sld [smem:[#allocation0]]
  $region22: #{decoder_forward.7} parent=0
    _
  %s6 = ssub.s32 1, %s4
  %s7 = scalar_select 0, %s6, %s4
  // Predicated region
  $region2: #{decoder_forward.7} parent=0 // pred_check
    _
  $region3: #{decoder_forward.7} parent=0 // pred_check_branch
    %9 = sbr.rel (0) target = $region5
  $region4: #{decoder_forward.7} parent=0 // pred_region
    _
  $region5: #{decoder_forward.7} parent=0 // pred_fallthru
    _
  // Predicated region
  $region6: #{decoder_forward.7} parent=0 // pred_check
    _
  $region7: #{decoder_forward.7} parent=0 // pred_check_branch
    %11 = sbr.rel (0) target = $region9
  $region8: #{decoder_forward.7} parent=0 // pred_region
    _
  $region9: #{decoder_forward.7} parent=0 // pred_fallthru
    _
  // Predicated region
  $region10: #{decoder_forward.7} parent=0 // pred_check
    _
  $region11: #{decoder_forward.7} parent=0 // pred_check_branch
    %13 = sbr.rel (0) target = $region13
  $region12: #{decoder_forward.7} parent=0 // pred_region
    _
  $region13: #{decoder_forward.7} parent=0 // pred_fallthru
    _
  %v14 = vld [vmem:[%s0] sm:$0xff]
  %v15 = vld [vmem:[%s0 + $0x8] sm:$0xff]
  %v16 = vld [vmem:[%s0 + $0x10] sm:$0xff]
  %v17 = vld [vmem:[%s0 + $0x18] sm:$0xff]
  %v18 = vld [vmem:[%s0 + $0x20] sm:$0xff]
  %v19 = vld [vmem:[%s0 + $0x28] sm:$0xff]
  %v20 = vld [vmem:[%s0 + $0x30] sm:$0xff]
  %v21 = vld [vmem:[%s0 + $0x38] sm:$0xff]
  %v22 = vld [vmem:[%s1] sm:$0xff]
  %v23 = vld [vmem:[%s1 + $0x8] sm:$0xff]
  %v24 = vld [vmem:[%s1 + $0x10] sm:$0xff]
  %v25 = vld [vmem:[%s1 + $0x18] sm:$0xff]
  %v26 = vld [vmem:[%s1 + $0x20] sm:$0xff]
  %v27 = vld [vmem:[%s1 + $0x28] sm:$0xff]
  %v28 = vld [vmem:[%s1 + $0x30] sm:$0xff]
  %v29 = vld [vmem:[%s1 + $0x38] sm:$0xff]
  %v30 = vld [vmem:[%s1 + $0x40] sm:$0xff]
  %v31 = vld [vmem:[%s1 + $0x48] sm:$0xff]
  %v32 = vld [vmem:[%s1 + $0x50] sm:$0xff]
  %v33 = vld [vmem:[%s1 + $0x58] sm:$0xff]
  %v34 = vld [vmem:[%s1 + $0x60] sm:$0xff]
  %v35 = vld [vmem:[%s1 + $0x68] sm:$0xff]
  %v36 = vld [vmem:[%s1 + $0x70] sm:$0xff]
  %v37 = vld [vmem:[%s1 + $0x78] sm:$0xff]
  %v38 = vld [vmem:[%s1 + $0x80] sm:$0xff]
  %v39 = vld [vmem:[%s1 + $0x88] sm:$0xff]
  %v40 = vld [vmem:[%s1 + $0x90] sm:$0xff]
  %v41 = vld [vmem:[%s1 + $0x98] sm:$0xff]
  %v42 = vld [vmem:[%s1 + $0xa0] sm:$0xff]
  %v43 = vld [vmem:[%s1 + $0xa8] sm:$0xff]
  %v44 = vld [vmem:[%s1 + $0xb0] sm:$0xff]
  %v45 = vld [vmem:[%s1 + $0xb8] sm:$0xff]
  %v46 = vld [vmem:[%s1 + $0xc0] sm:$0xff]
  %v47 = vld [vmem:[%s1 + $0xc8] sm:$0xff]
  %v48 = vld [vmem:[%s1 + $0xd0] sm:$0xff]
  %v49 = vld [vmem:[%s1 + $0xd8] sm:$0xff]
  %v50 = vld [vmem:[%s1 + $0xe0] sm:$0xff]
  %v51 = vld [vmem:[%s1 + $0xe8] sm:$0xff]
  %v52 = vld [vmem:[%s1 + $0xf0] sm:$0xff]
  %v53 = vld [vmem:[%s1 + $0xf8] sm:$0xff]
  %v54 = vld [vmem:[%s1 + $0x100] sm:$0xff]
  %v55 = vld [vmem:[%s1 + $0x108] sm:$0xff]
  %v56 = vld [vmem:[%s1 + $0x110] sm:$0xff]
  %v57 = vld [vmem:[%s1 + $0x118] sm:$0xff]
  %v58 = vld [vmem:[%s1 + $0x120] sm:$0xff]
  %v59 = vld [vmem:[%s1 + $0x128] sm:$0xff]
  %v60 = vld [vmem:[%s1 + $0x130] sm:$0xff]
  %v61 = vld [vmem:[%s1 + $0x138] sm:$0xff]
  %v62 = vld [vmem:[%s1 + $0x140] sm:$0xff]
  %v63 = vld [vmem:[%s1 + $0x148] sm:$0xff]
  %v64 = vld [vmem:[%s1 + $0x150] sm:$0xff]
  %v65 = vld [vmem:[%s1 + $0x158] sm:$0xff]
  %v66 = vld [vmem:[%s1 + $0x160] sm:$0xff]
  %v67 = vld [vmem:[%s1 + $0x168] sm:$0xff]
  %v68 = vld [vmem:[%s1 + $0x170] sm:$0xff]
  %v69 = vld [vmem:[%s1 + $0x178] sm:$0xff]
  %v70 = vld [vmem:[%s1 + $0x180] sm:$0xff]
  %v71 = vld [vmem:[%s1 + $0x188] sm:$0xff]
  %v72 = vld [vmem:[%s1 + $0x190] sm:$0xff]
  %v73 = vld [vmem:[%s1 + $0x198] sm:$0xff]
  %v74 = vld [vmem:[%s1 + $0x1a0] sm:$0xff]
  %v75 = vld [vmem:[%s1 + $0x1a8] sm:$0xff]
  %v76 = vld [vmem:[%s1 + $0x1b0] sm:$0xff]
  %v77 = vld [vmem:[%s1 + $0x1b8] sm:$0xff]
  %v78 = vld [vmem:[%s1 + $0x1c0] sm:$0xff]
  %v79 = vld [vmem:[%s1 + $0x1c8] sm:$0xff]
  %v80 = vld [vmem:[%s1 + $0x1d0] sm:$0xff]
  %v81 = vld [vmem:[%s1 + $0x1d8] sm:$0xff]
  %v82 = vld [vmem:[%s1 + $0x1e0] sm:$0xff]
  %v83 = vld [vmem:[%s1 + $0x1e8] sm:$0xff]
  %v84 = vld [vmem:[%s1 + $0x1f0] sm:$0xff]
  %v85 = vld [vmem:[%s1 + $0x1f8] sm:$0xff]
  %v86 = vld [vmem:[%s2] sm:$0x3]
  %v88 = vlaneseq
  %v89 = vshrl.u32 %v88, 7
  %v90 = vsub.s32 0, %v89
  %v91 = vrot.slane %v86, %v90
  %v92 = vlaneseq
  %v93 = vshrl.u32 %v92, 7
  %v94 = vsub.s32 1, %v93
  %v95 = vrot.slane %v86, %v94
  %v106 = vunpack.c.l.b16 %v14
  %v107 = vunpack.c.h.b16 %v14
  %v108 = vunpack.c.l.b16 %v15
  %v109 = vunpack.c.h.b16 %v15
  %v110 = vunpack.c.l.b16 %v16
  %v111 = vunpack.c.h.b16 %v16
  %v112 = vunpack.c.l.b16 %v17
  %v113 = vunpack.c.h.b16 %v17
  %v114 = vunpack.c.l.b16 %v18
  %v115 = vunpack.c.h.b16 %v18
  %v116 = vunpack.c.l.b16 %v19
  %v117 = vunpack.c.h.b16 %v19
  %v118 = vunpack.c.l.b16 %v20
  %v119 = vunpack.c.h.b16 %v20
  %v120 = vunpack.c.l.b16 %v21
  %v121 = vunpack.c.h.b16 %v21
  %v122 = vpack.c.b16 %v110, %v106
  %v123 = vpack.c.b16 %v111, %v107
  %v124 = vpack.c.b16 %v112, %v108
  %v125 = vpack.c.b16 %v113, %v109
  %v126 = vpack.c.b16 %v118, %v114
  %v127 = vpack.c.b16 %v119, %v115
  %v128 = vpack.c.b16 %v120, %v116
  %v129 = vpack.c.b16 %v121, %v117
  %v202 = vunpack.c.l.b16 %v22
  %v203 = vunpack.c.h.b16 %v22
  %v204 = vunpack.c.l.b16 %v23
  %v205 = vunpack.c.h.b16 %v23
  %v206 = vunpack.c.l.b16 %v24
  %v207 = vunpack.c.h.b16 %v24
  %v208 = vunpack.c.l.b16 %v25
  %v209 = vunpack.c.h.b16 %v25
  %v210 = vunpack.c.l.b16 %v26
  %v211 = vunpack.c.h.b16 %v26
  %v212 = vunpack.c.l.b16 %v27
  %v213 = vunpack.c.h.b16 %v27
  %v214 = vunpack.c.l.b16 %v28
  %v215 = vunpack.c.h.b16 %v28
  %v216 = vunpack.c.l.b16 %v29
  %v217 = vunpack.c.h.b16 %v29
  %v218 = vunpack.c.l.b16 %v30
  %v219 = vunpack.c.h.b16 %v30
  %v220 = vunpack.c.l.b16 %v31
  %v221 = vunpack.c.h.b16 %v31
  %v222 = vunpack.c.l.b16 %v32
  %v223 = vunpack.c.h.b16 %v32
  %v224 = vunpack.c.l.b16 %v33
  %v225 = vunpack.c.h.b16 %v33
  %v226 = vunpack.c.l.b16 %v34
  %v227 = vunpack.c.h.b16 %v34
  %v228 = vunpack.c.l.b16 %v35
  %v229 = vunpack.c.h.b16 %v35
  %v230 = vunpack.c.l.b16 %v36
  %v231 = vunpack.c.h.b16 %v36
  %v232 = vunpack.c.l.b16 %v37
  %v233 = vunpack.c.h.b16 %v37
  %v234 = vunpack.c.l.b16 %v38
  %v235 = vunpack.c.h.b16 %v38
  %v236 = vunpack.c.l.b16 %v39
  %v237 = vunpack.c.h.b16 %v39
  %v238 = vunpack.c.l.b16 %v40
  %v239 = vunpack.c.h.b16 %v40
  %v240 = vunpack.c.l.b16 %v41
  %v241 = vunpack.c.h.b16 %v41
  %v242 = vunpack.c.l.b16 %v42
  %v243 = vunpack.c.h.b16 %v42
  %v244 = vunpack.c.l.b16 %v43
  %v245 = vunpack.c.h.b16 %v43
  %v246 = vunpack.c.l.b16 %v44
  %v247 = vunpack.c.h.b16 %v44
  %v248 = vunpack.c.l.b16 %v45
  %v249 = vunpack.c.h.b16 %v45
  %v250 = vunpack.c.l.b16 %v46
  %v251 = vunpack.c.h.b16 %v46
  %v252 = vunpack.c.l.b16 %v47
  %v253 = vunpack.c.h.b16 %v47
  %v254 = vunpack.c.l.b16 %v48
  %v255 = vunpack.c.h.b16 %v48
  %v256 = vunpack.c.l.b16 %v49
  %v257 = vunpack.c.h.b16 %v49
  %v258 = vunpack.c.l.b16 %v50
  %v259 = vunpack.c.h.b16 %v50
  %v260 = vunpack.c.l.b16 %v51
  %v261 = vunpack.c.h.b16 %v51
  %v262 = vunpack.c.l.b16 %v52
  %v263 = vunpack.c.h.b16 %v52
  %v264 = vunpack.c.l.b16 %v53
  %v265 = vunpack.c.h.b16 %v53
  %v266 = vunpack.c.l.b16 %v54
  %v267 = vunpack.c.h.b16 %v54
  %v268 = vunpack.c.l.b16 %v55
  %v269 = vunpack.c.h.b16 %v55
  %v270 = vunpack.c.l.b16 %v56
  %v271 = vunpack.c.h.b16 %v56
  %v272 = vunpack.c.l.b16 %v57
  %v273 = vunpack.c.h.b16 %v57
  %v274 = vunpack.c.l.b16 %v58
  %v275 = vunpack.c.h.b16 %v58
  %v276 = vunpack.c.l.b16 %v59
  %v277 = vunpack.c.h.b16 %v59
  %v278 = vunpack.c.l.b16 %v60
  %v279 = vunpack.c.h.b16 %v60
  %v280 = vunpack.c.l.b16 %v61
  %v281 = vunpack.c.h.b16 %v61
  %v282 = vunpack.c.l.b16 %v62
  %v283 = vunpack.c.h.b16 %v62
  %v284 = vunpack.c.l.b16 %v63
  %v285 = vunpack.c.h.b16 %v63
  %v286 = vunpack.c.l.b16 %v64
  %v287 = vunpack.c.h.b16 %v64
  %v288 = vunpack.c.l.b16 %v65
  %v289 = vunpack.c.h.b16 %v65
  %v290 = vunpack.c.l.b16 %v66
  %v291 = vunpack.c.h.b16 %v66
  %v292 = vunpack.c.l.b16 %v67
  %v293 = vunpack.c.h.b16 %v67
  %v294 = vunpack.c.l.b16 %v68
  %v295 = vunpack.c.h.b16 %v68
  %v296 = vunpack.c.l.b16 %v69
  %v297 = vunpack.c.h.b16 %v69
  %v298 = vunpack.c.l.b16 %v70
  %v299 = vunpack.c.h.b16 %v70
  %v300 = vunpack.c.l.b16 %v71
  %v301 = vunpack.c.h.b16 %v71
  %v302 = vunpack.c.l.b16 %v72
  %v303 = vunpack.c.h.b16 %v72
  %v304 = vunpack.c.l.b16 %v73
  %v305 = vunpack.c.h.b16 %v73
  %v306 = vunpack.c.l.b16 %v74
  %v307 = vunpack.c.h.b16 %v74
  %v308 = vunpack.c.l.b16 %v75
  %v309 = vunpack.c.h.b16 %v75
  %v310 = vunpack.c.l.b16 %v76
  %v311 = vunpack.c.h.b16 %v76
  %v312 = vunpack.c.l.b16 %v77
  %v313 = vunpack.c.h.b16 %v77
  %v314 = vunpack.c.l.b16 %v78
  %v315 = vunpack.c.h.b16 %v78
  %v316 = vunpack.c.l.b16 %v79
  %v317 = vunpack.c.h.b16 %v79
  %v318 = vunpack.c.l.b16 %v80
  %v319 = vunpack.c.h.b16 %v80
  %v320 = vunpack.c.l.b16 %v81
  %v321 = vunpack.c.h.b16 %v81
  %v322 = vunpack.c.l.b16 %v82
  %v323 = vunpack.c.h.b16 %v82
  %v324 = vunpack.c.l.b16 %v83
  %v325 = vunpack.c.h.b16 %v83
  %v326 = vunpack.c.l.b16 %v84
  %v327 = vunpack.c.h.b16 %v84
  %v328 = vunpack.c.l.b16 %v85
  %v329 = vunpack.c.h.b16 %v85
  %v330 = vpack.c.b16 %v204, %v202
  %v331 = vpack.c.b16 %v205, %v203
  %v332 = vpack.c.b16 %v208, %v206
  %v333 = vpack.c.b16 %v209, %v207
  %v334 = vpack.c.b16 %v212, %v210
  %v335 = vpack.c.b16 %v213, %v211
  %v336 = vpack.c.b16 %v216, %v214
  %v337 = vpack.c.b16 %v217, %v215
  %v338 = vpack.c.b16 %v220, %v218
  %v339 = vpack.c.b16 %v221, %v219
  %v340 = vpack.c.b16 %v224, %v222
  %v341 = vpack.c.b16 %v225, %v223
  %v342 = vpack.c.b16 %v228, %v226
  %v343 = vpack.c.b16 %v229, %v227
  %v344 = vpack.c.b16 %v232, %v230
  %v345 = vpack.c.b16 %v233, %v231
  %v346 = vpack.c.b16 %v236, %v234
  %v347 = vpack.c.b16 %v237, %v235
  %v348 = vpack.c.b16 %v240, %v238
  %v349 = vpack.c.b16 %v241, %v239
  %v350 = vpack.c.b16 %v244, %v242
  %v351 = vpack.c.b16 %v245, %v243
  %v352 = vpack.c.b16 %v248, %v246
  %v353 = vpack.c.b16 %v249, %v247
  %v354 = vpack.c.b16 %v252, %v250
  %v355 = vpack.c.b16 %v253, %v251
  %v356 = vpack.c.b16 %v256, %v254
  %v357 = vpack.c.b16 %v257, %v255
  %v358 = vpack.c.b16 %v260, %v258
  %v359 = vpack.c.b16 %v261, %v259
  %v360 = vpack.c.b16 %v264, %v262
  %v361 = vpack.c.b16 %v265, %v263
  %v362 = vpack.c.b16 %v268, %v266
  %v363 = vpack.c.b16 %v269, %v267
  %v364 = vpack.c.b16 %v272, %v270
  %v365 = vpack.c.b16 %v273, %v271
  %v366 = vpack.c.b16 %v276, %v274
  %v367 = vpack.c.b16 %v277, %v275
  %v368 = vpack.c.b16 %v280, %v278
  %v369 = vpack.c.b16 %v281, %v279
  %v370 = vpack.c.b16 %v284, %v282
  %v371 = vpack.c.b16 %v285, %v283
  %v372 = vpack.c.b16 %v288, %v286
  %v373 = vpack.c.b16 %v289, %v287
  %v374 = vpack.c.b16 %v292, %v290
  %v375 = vpack.c.b16 %v293, %v291
  %v376 = vpack.c.b16 %v296, %v294
  %v377 = vpack.c.b16 %v297, %v295
  %v378 = vpack.c.b16 %v300, %v298
  %v379 = vpack.c.b16 %v301, %v299
  %v380 = vpack.c.b16 %v304, %v302
  %v381 = vpack.c.b16 %v305, %v303
  %v382 = vpack.c.b16 %v308, %v306
  %v383 = vpack.c.b16 %v309, %v307
  %v384 = vpack.c.b16 %v312, %v310
  %v385 = vpack.c.b16 %v313, %v311
  %v386 = vpack.c.b16 %v316, %v314
  %v387 = vpack.c.b16 %v317, %v315
  %v388 = vpack.c.b16 %v320, %v318
  %v389 = vpack.c.b16 %v321, %v319
  %v390 = vpack.c.b16 %v324, %v322
  %v391 = vpack.c.b16 %v325, %v323
  %v392 = vpack.c.b16 %v328, %v326
  %v393 = vpack.c.b16 %v329, %v327
  %458 = vmatprep.subr.bf16.mxu0 %v331
  %459 = vmatpush1.bf16.msra.mxu0 %v330
  %460 = vmatprep.subr.bf16.mxu0 %v333
  %461 = vmatpush1.bf16.msra.mxu0 %v332
  %462 = vmatprep.subr.bf16.mxu0 %v335
  %463 = vmatpush1.bf16.msra.mxu0 %v334
  %464 = vmatprep.subr.bf16.mxu0 %v337
  %465 = vmatpush1.bf16.msra.mxu0 %v336
  %466 = vmatprep.subr.bf16.mxu0 %v339
  %467 = vmatpush1.bf16.msra.mxu0 %v338
  %468 = vmatprep.subr.bf16.mxu0 %v341
  %469 = vmatpush1.bf16.msra.mxu0 %v340
  %470 = vmatprep.subr.bf16.mxu0 %v343
  %471 = vmatpush1.bf16.msra.mxu0 %v342
  %472 = vmatprep.subr.bf16.mxu0 %v345
  %473 = vmatpush1.bf16.msra.mxu0 %v344
  %474 = vmatprep.subr.bf16.mxu0 %v347
  %475 = vmatpush1.bf16.msra.mxu0 %v346
  %476 = vmatprep.subr.bf16.mxu0 %v349
  %477 = vmatpush1.bf16.msra.mxu0 %v348
  %478 = vmatprep.subr.bf16.mxu0 %v351
  %479 = vmatpush1.bf16.msra.mxu0 %v350
  %480 = vmatprep.subr.bf16.mxu0 %v353
  %481 = vmatpush1.bf16.msra.mxu0 %v352
  %482 = vmatprep.subr.bf16.mxu0 %v355
  %483 = vmatpush1.bf16.msra.mxu0 %v354
  %484 = vmatprep.subr.bf16.mxu0 %v357
  %485 = vmatpush1.bf16.msra.mxu0 %v356
  %486 = vmatprep.subr.bf16.mxu0 %v359
  %487 = vmatpush1.bf16.msra.mxu0 %v358
  %488 = vmatprep.subr.bf16.mxu0 %v361
  %489 = vmatpush1.bf16.msra.mxu0 %v360
  %490 = vmatprep.mubr.bf16.mxu0 %v123
  %491 = vmatmul.mubr.bf16.gmra.mrb[0].mxu0 %v122
  %v492 = vpop.f32.mrb[0].mxu0
  %v493 = vadd.f32 %v91, %v492
  %v494 = vpop.f32.mrb[0].mxu0
  %v495 = vadd.f32 %v95, %v494
  %v496 = vpop.f32.mrb[0].mxu0
  %v497 = vadd.f32 %v91, %v496
  %v498 = vpop.f32.mrb[0].mxu0
  %v499 = vadd.f32 %v95, %v498
  %500 = vmatprep.mubr.bf16.mxu0 %v127
  %501 = vmatmul.mubr.bf16.gmra.mrb[0].mxu0 %v126
  %v502 = vpop.f32.mrb[0].mxu0
  %v503 = vadd.f32 %v91, %v502
  %v504 = vpop.f32.mrb[0].mxu0
  %v505 = vadd.f32 %v95, %v504
  %v506 = vpop.f32.mrb[0].mxu0
  %v507 = vadd.f32 %v91, %v506
  %v508 = vpop.f32.mrb[0].mxu0
  %v509 = vadd.f32 %v95, %v508
  %510 = vdwg.mxu0
  %511 = vmatprep.subr.bf16.mxu0 %v363
  %512 = vmatpush1.bf16.msra.mxu0 %v362
  %513 = vmatprep.subr.bf16.mxu0 %v365
  %514 = vmatpush1.bf16.msra.mxu0 %v364
  %515 = vmatprep.subr.bf16.mxu0 %v367
  %516 = vmatpush1.bf16.msra.mxu0 %v366
  %517 = vmatprep.subr.bf16.mxu0 %v369
  %518 = vmatpush1.bf16.msra.mxu0 %v368
  %519 = vmatprep.subr.bf16.mxu0 %v371
  %520 = vmatpush1.bf16.msra.mxu0 %v370
  %521 = vmatprep.subr.bf16.mxu0 %v373
  %522 = vmatpush1.bf16.msra.mxu0 %v372
  %523 = vmatprep.subr.bf16.mxu0 %v375
  %524 = vmatpush1.bf16.msra.mxu0 %v374
  %525 = vmatprep.subr.bf16.mxu0 %v377
  %526 = vmatpush1.bf16.msra.mxu0 %v376
  %527 = vmatprep.subr.bf16.mxu0 %v379
  %528 = vmatpush1.bf16.msra.mxu0 %v378
  %529 = vmatprep.subr.bf16.mxu0 %v381
  %530 = vmatpush1.bf16.msra.mxu0 %v380
  %531 = vmatprep.subr.bf16.mxu0 %v383
  %532 = vmatpush1.bf16.msra.mxu0 %v382
  %533 = vmatprep.subr.bf16.mxu0 %v385
  %534 = vmatpush1.bf16.msra.mxu0 %v384
  %535 = vmatprep.subr.bf16.mxu0 %v387
  %536 = vmatpush1.bf16.msra.mxu0 %v386
  %537 = vmatprep.subr.bf16.mxu0 %v389
  %538 = vmatpush1.bf16.msra.mxu0 %v388
  %539 = vmatprep.subr.bf16.mxu0 %v391
  %540 = vmatpush1.bf16.msra.mxu0 %v390
  %541 = vmatprep.subr.bf16.mxu0 %v393
  %542 = vmatpush1.bf16.msra.mxu0 %v392
  %543 = vmatprep.mubr.bf16.mxu0 %v125
  %544 = vmatmul.mubr.bf16.gmra.mrb[0].mxu0 %v124
  %v545 = vpop.f32.mrb[0].mxu0
  %v546 = vadd.f32 %v493, %v545
  %v547 = vpop.f32.mrb[0].mxu0
  %v548 = vadd.f32 %v495, %v547
  %v549 = vpop.f32.mrb[0].mxu0
  %v550 = vadd.f32 %v497, %v549
  %v551 = vpop.f32.mrb[0].mxu0
  %v552 = vadd.f32 %v499, %v551
  %553 = vmatprep.mubr.bf16.mxu0 %v129
  %554 = vmatmul.mubr.bf16.gmra.mrb[0].mxu0 %v128
  %v555 = vpop.f32.mrb[0].mxu0
  %v556 = vadd.f32 %v503, %v555
  %v557 = vpop.f32.mrb[0].mxu0
  %v558 = vadd.f32 %v505, %v557
  %v559 = vpop.f32.mrb[0].mxu0
  %v560 = vadd.f32 %v507, %v559
  %v561 = vpop.f32.mrb[0].mxu0
  %v562 = vadd.f32 %v509, %v561
  %563 = vdwg.mxu0
  %v564 = vmax.f32 %v546, 0.0
  %v565 = vmax.f32 %v548, 0.0
  %v566 = vmax.f32 %v550, 0.0
  %v567 = vmax.f32 %v552, 0.0
  %v568 = vmax.f32 %v556, 0.0
  %v569 = vmax.f32 %v558, 0.0
  %v570 = vmax.f32 %v560, 0.0
  %v571 = vmax.f32 %v562, 0.0
  %572 = vst [vmem:[%s3] sm:$0xff] %v564
  %573 = vst [vmem:[%s3 + $0x8] sm:$0xff] %v565
  %574 = vst [vmem:[%s3 + $0x10] sm:$0xff] %v566
  %575 = vst [vmem:[%s3 + $0x18] sm:$0xff] %v567
  %576 = vst [vmem:[%s3 + $0x20] sm:$0xff] %v568
  %577 = vst [vmem:[%s3 + $0x28] sm:$0xff] %v569
  %578 = vst [vmem:[%s3 + $0x30] sm:$0xff] %v570
  %579 = vst [vmem:[%s3 + $0x38] sm:$0xff] %v571
  // Predicated region
  $region14: #{decoder_forward.7} parent=0 // pred_check
    _
  $region15: #{decoder_forward.7} parent=0 // pred_check_branch
    %581 = sbr.rel (0) target = $region17
  $region16: #{decoder_forward.7} parent=0 // pred_region
    _
  $region17: #{decoder_forward.7} parent=0 // pred_fallthru
    _
  // Predicated region
  $region18: #{decoder_forward.7} parent=0 // pred_check
    _
  $region19: #{decoder_forward.7} parent=0 // pred_check_branch
    %583 = sbr.rel (0) target = $region21
  $region20: #{decoder_forward.7} parent=0 // pred_region
    _
  $region21: #{decoder_forward.7} parent=0 // pred_fallthru
    _

// kernel: decoder_forward.6
$region0: #{decoder_forward.6}
  #allocation0 [shape = 'u32[]', space=smem, size = 0x4, offset = 0x4, fixed_abs, tag = 'smem constant byte address 0x4 - core index']
  #allocation1 [shape = 'u32[144,128]{1,0:T(1,128)}', space=vmem, size = 0x12000, scoped, tag = 'internal scratch']
  %s0 = inlined_call_operand.vmem [shape: bf16[8,1024], index: 0, kind: input, shape index: {}]
  %s1 = inlined_call_operand.hbm [shape: bf16[1024,512], index: 1, kind: input, shape index: {}]
  %s2 = inlined_call_operand.vmem [shape: f32[1,512], index: 2, kind: input, shape index: {}]
  %s3 = inlined_call_operand.vmem [shape: f32[8,512], index: 3, kind: output, shape index: {}]
  %s4 = sld [smem:[#allocation0]]
  $region26: #{decoder_forward.6} parent=0
    _
  %s6 = ssub.s32 1, %s4
  %s7 = scalar_select 0, %s6, %s4
  $region1: #{decoder_forward.6} parent=0
    #allocation2 [shape = 'u8[1048576]{0}', space=vmem, size = 0x100000, scoped, tag = 'input window, operand 1, single buffered']
    #allocation3 [shape = 's32[1]{0}', space=sflag, size = 0x4, scoped, tag = 'scoped memory for decoder_forward.6']
    %8 = vsyncpa [#allocation3], 0
    // Predicated region
    $region2: #{decoder_forward.6} parent=1 // pred_check
      _
    $region3: #{decoder_forward.6} parent=1 // pred_check_branch
      %10 = sbr.rel (0) target = $region5
    $region4: #{decoder_forward.6} parent=1 // pred_region
      _
    $region5: #{decoder_forward.6} parent=1 // pred_fallthru
      _
    // Predicated region
    $region6: #{decoder_forward.6} parent=1 // pred_check
      _
    $region7: #{decoder_forward.6} parent=1 // pred_check_branch
      %12 = sbr.rel (0) target = $region9
    $region8: #{decoder_forward.6} parent=1 // pred_region
      %s14 = ssub.s32 32768, 32768
      %15 = vsyncadd [#allocation3], %s14
      %s16 = sshll.u32 [#allocation2], 4
      %s17 = int_to_ptr.vmem [resolvable:$true] %s16
      %22 = dma.hbm_to_vmem [thread:$0]  %s1, 32768, %s17, [#allocation3], 256, 256, 16
    $region9: #{decoder_forward.6} parent=1 // pred_fallthru
      _
    // Predicated region
    $region10: #{decoder_forward.6} parent=1 // pred_check
      _
    $region11: #{decoder_forward.6} parent=1 // pred_check_branch
      %24 = sbr.rel (0) target = $region13
    $region12: #{decoder_forward.6} parent=1 // pred_region
      _
    $region13: #{decoder_forward.6} parent=1 // pred_fallthru
      _
    // Predicated region
    $region14: #{decoder_forward.6} parent=1 // pred_check
      _
    $region15: #{decoder_forward.6} parent=1 // pred_check_branch
      %26 = sbr.rel (0) target = $region17
    $region16: #{decoder_forward.6} parent=1 // pred_region
      %27 = dma.done [#allocation3], 32768
    $region17: #{decoder_forward.6} parent=1 // pred_fallthru
      _
    %v28 = vld [vmem:[%s0] sm:$0xff]
    %v29 = vld [vmem:[%s0 + $0x8] sm:$0xff]
    %v30 = vld [vmem:[%s0 + $0x10] sm:$0xff]
    %v31 = vld [vmem:[%s0 + $0x18] sm:$0xff]
    %v32 = vld [vmem:[#allocation2] sm:$0xff]
    %v33 = vld [vmem:[#allocation2 + $0x8] sm:$0xff]
    %v34 = vld [vmem:[#allocation2 + $0x10] sm:$0xff]
    %v35 = vld [vmem:[#allocation2 + $0x18] sm:$0xff]
    %v36 = vld [vmem:[#allocation2 + $0x20] sm:$0xff]
    %v37 = vld [vmem:[#allocation2 + $0x28] sm:$0xff]
    %v38 = vld [vmem:[#allocation2 + $0x30] sm:$0xff]
    %v39 = vld [vmem:[#allocation2 + $0x38] sm:$0xff]
    %v40 = vld [vmem:[#allocation2 + $0x40] sm:$0xff]
    %v41 = vld [vmem:[#allocation2 + $0x48] sm:$0xff]
    %v42 = vld [vmem:[#allocation2 + $0x50] sm:$0xff]
    %v43 = vld [vmem:[#allocation2 + $0x58] sm:$0xff]
    %v44 = vld [vmem:[#allocation2 + $0x60] sm:$0xff]
    %v45 = vld [vmem:[#allocation2 + $0x68] sm:$0xff]
    %v46 = vld [vmem:[#allocation2 + $0x70] sm:$0xff]
    %v47 = vld [vmem:[#allocation2 + $0x78] sm:$0xff]
    %v48 = vld [vmem:[#allocation2 + $0x80] sm:$0xff]
    %v49 = vld [vmem:[#allocation2 + $0x88] sm:$0xff]
    %v50 = vld [vmem:[#allocation2 + $0x90] sm:$0xff]
    %v51 = vld [vmem:[#allocation2 + $0x98] sm:$0xff]
    %v52 = vld [vmem:[#allocation2 + $0xa0] sm:$0xff]
    %v53 = vld [vmem:[#allocation2 + $0xa8] sm:$0xff]
    %v54 = vld [vmem:[#allocation2 + $0xb0] sm:$0xff]
    %v55 = vld [vmem:[#allocation2 + $0xb8] sm:$0xff]
    %v56 = vld [vmem:[#allocation2 + $0xc0] sm:$0xff]
    %v57 = vld [vmem:[#allocation2 + $0xc8] sm:$0xff]
    %v58 = vld [vmem:[#allocation2 + $0xd0] sm:$0xff]
    %v59 = vld [vmem:[#allocation2 + $0xd8] sm:$0xff]
    %v60 = vld [vmem:[#allocation2 + $0xe0] sm:$0xff]
    %v61 = vld [vmem:[#allocation2 + $0xe8] sm:$0xff]
    %v62 = vld [vmem:[#allocation2 + $0xf0] sm:$0xff]
    %v63 = vld [vmem:[#allocation2 + $0xf8] sm:$0xff]
    %v64 = vld [vmem:[#allocation2 + $0x100] sm:$0xff]
    %v65 = vld [vmem:[#allocation2 + $0x108] sm:$0xff]
    %v66 = vld [vmem:[#allocation2 + $0x110] sm:$0xff]
    %v67 = vld [vmem:[#allocation2 + $0x118] sm:$0xff]
    %v68 = vld [vmem:[#allocation2 + $0x120] sm:$0xff]
    %v69 = vld [vmem:[#allocation2 + $0x128] sm:$0xff]
    %v70 = vld [vmem:[#allocation2 + $0x130] sm:$0xff]
    %v71 = vld [vmem:[#allocation2 + $0x138] sm:$0xff]
    %v72 = vld [vmem:[#allocation2 + $0x140] sm:$0xff]
    %v73 = vld [vmem:[#allocation2 + $0x148] sm:$0xff]
    %v74 = vld [vmem:[#allocation2 + $0x150] sm:$0xff]
    %v75 = vld [vmem:[#allocation2 + $0x158] sm:$0xff]
    %v76 = vld [vmem:[#allocation2 + $0x160] sm:$0xff]
    %v77 = vld [vmem:[#allocation2 + $0x168] sm:$0xff]
    %v78 = vld [vmem:[#allocation2 + $0x170] sm:$0xff]
    %v79 = vld [vmem:[#allocation2 + $0x178] sm:$0xff]
    %v80 = vld [vmem:[#allocation2 + $0x180] sm:$0xff]
    %v81 = vld [vmem:[#allocation2 + $0x188] sm:$0xff]
    %v82 = vld [vmem:[#allocation2 + $0x190] sm:$0xff]
    %v83 = vld [vmem:[#allocation2 + $0x198] sm:$0xff]
    %v84 = vld [vmem:[#allocation2 + $0x1a0] sm:$0xff]
    %v85 = vld [vmem:[#allocation2 + $0x1a8] sm:$0xff]
    %v86 = vld [vmem:[#allocation2 + $0x1b0] sm:$0xff]
    %v87 = vld [vmem:[#allocation2 + $0x1b8] sm:$0xff]
    %v88 = vld [vmem:[#allocation2 + $0x1c0] sm:$0xff]
    %v89 = vld [vmem:[#allocation2 + $0x1c8] sm:$0xff]
    %v90 = vld [vmem:[#allocation2 + $0x1d0] sm:$0xff]
    %v91 = vld [vmem:[#allocation2 + $0x1d8] sm:$0xff]
    %v92 = vld [vmem:[#allocation2 + $0x1e0] sm:$0xff]
    %v93 = vld [vmem:[#allocation2 + $0x1e8] sm:$0xff]
    %v94 = vld [vmem:[#allocation2 + $0x1f0] sm:$0xff]
    %v95 = vld [vmem:[#allocation2 + $0x1f8] sm:$0xff]
    %v96 = vld [vmem:[#allocation2 + $0x200] sm:$0xff]
    %v97 = vld [vmem:[#allocation2 + $0x208] sm:$0xff]
    %v98 = vld [vmem:[#allocation2 + $0x210] sm:$0xff]
    %v99 = vld [vmem:[#allocation2 + $0x218] sm:$0xff]
    %v100 = vld [vmem:[#allocation2 + $0x220] sm:$0xff]
    %v101 = vld [vmem:[#allocation2 + $0x228] sm:$0xff]
    %v102 = vld [vmem:[#allocation2 + $0x230] sm:$0xff]
    %v103 = vld [vmem:[#allocation2 + $0x238] sm:$0xff]
    %v104 = vld [vmem:[#allocation2 + $0x240] sm:$0xff]
    %v105 = vld [vmem:[#allocation2 + $0x248] sm:$0xff]
    %v106 = vld [vmem:[#allocation2 + $0x250] sm:$0xff]
    %v107 = vld [vmem:[#allocation2 + $0x258] sm:$0xff]
    %v108 = vld [vmem:[#allocation2 + $0x260] sm:$0xff]
    %v109 = vld [vmem:[#allocation2 + $0x268] sm:$0xff]
    %v110 = vld [vmem:[#allocation2 + $0x270] sm:$0xff]
    %v111 = vld [vmem:[#allocation2 + $0x278] sm:$0xff]
    %v112 = vld [vmem:[#allocation2 + $0x280] sm:$0xff]
    %v113 = vld [vmem:[#allocation2 + $0x288] sm:$0xff]
    %v114 = vld [vmem:[#allocation2 + $0x290] sm:$0xff]
    %v115 = vld [vmem:[#allocation2 + $0x298] sm:$0xff]
    %v116 = vld [vmem:[#allocation2 + $0x2a0] sm:$0xff]
    %v117 = vld [vmem:[#allocation2 + $0x2a8] sm:$0xff]
    %v118 = vld [vmem:[#allocation2 + $0x2b0] sm:$0xff]
    %v119 = vld [vmem:[#allocation2 + $0x2b8] sm:$0xff]
    %v120 = vld [vmem:[#allocation2 + $0x2c0] sm:$0xff]
    %v121 = vld [vmem:[#allocation2 + $0x2c8] sm:$0xff]
    %v122 = vld [vmem:[#allocation2 + $0x2d0] sm:$0xff]
    %v123 = vld [vmem:[#allocation2 + $0x2d8] sm:$0xff]
    %v124 = vld [vmem:[#allocation2 + $0x2e0] sm:$0xff]
    %v125 = vld [vmem:[#allocation2 + $0x2e8] sm:$0xff]
    %v126 = vld [vmem:[#allocation2 + $0x2f0] sm:$0xff]
    %v127 = vld [vmem:[#allocation2 + $0x2f8] sm:$0xff]
    %v128 = vld [vmem:[#allocation2 + $0x300] sm:$0xff]
    %v129 = vld [vmem:[#allocation2 + $0x308] sm:$0xff]
    %v130 = vld [vmem:[#allocation2 + $0x310] sm:$0xff]
    %v131 = vld [vmem:[#allocation2 + $0x318] sm:$0xff]
    %v132 = vld [vmem:[#allocation2 + $0x320] sm:$0xff]
    %v133 = vld [vmem:[#allocation2 + $0x328] sm:$0xff]
    %v134 = vld [vmem:[#allocation2 + $0x330] sm:$0xff]
    %v135 = vld [vmem:[#allocation2 + $0x338] sm:$0xff]
    %v136 = vld [vmem:[#allocation2 + $0x340] sm:$0xff]
    %v137 = vld [vmem:[#allocation2 + $0x348] sm:$0xff]
    %v138 = vld [vmem:[#allocation2 + $0x350] sm:$0xff]
    %v139 = vld [vmem:[#allocation2 + $0x358] sm:$0xff]
    %v140 = vld [vmem:[#allocation2 + $0x360] sm:$0xff]
    %v141 = vld [vmem:[#allocation2 + $0x368] sm:$0xff]
    %v142 = vld [vmem:[#allocation2 + $0x370] sm:$0xff]
    %v143 = vld [vmem:[#allocation2 + $0x378] sm:$0xff]
    %v144 = vld [vmem:[#allocation2 + $0x380] sm:$0xff]
    %v145 = vld [vmem:[#allocation2 + $0x388] sm:$0xff]
    %v146 = vld [vmem:[#allocation2 + $0x390] sm:$0xff]
    %v147 = vld [vmem:[#allocation2 + $0x398] sm:$0xff]
    %v148 = vld [vmem:[#allocation2 + $0x3a0] sm:$0xff]
    %v149 = vld [vmem:[#allocation2 + $0x3a8] sm:$0xff]
    %v150 = vld [vmem:[#allocation2 + $0x3b0] sm:$0xff]
    %v151 = vld [vmem:[#allocation2 + $0x3b8] sm:$0xff]
    %v152 = vld [vmem:[#allocation2 + $0x3c0] sm:$0xff]
    %v153 = vld [vmem:[#allocation2 + $0x3c8] sm:$0xff]
    %v154 = vld [vmem:[#allocation2 + $0x3d0] sm:$0xff]
    %v155 = vld [vmem:[#allocation2 + $0x3d8] sm:$0xff]
    %v156 = vld [vmem:[#allocation2 + $0x3e0] sm:$0xff]
    %v157 = vld [vmem:[#allocation2 + $0x3e8] sm:$0xff]
    %v158 = vld [vmem:[#allocation2 + $0x3f0] sm:$0xff]
    %v159 = vld [vmem:[#allocation2 + $0x3f8] sm:$0xff]
    %v160 = vld [vmem:[#allocation2 + $0x400] sm:$0xff]
    %v161 = vld [vmem:[#allocation2 + $0x408] sm:$0xff]
    %v162 = vld [vmem:[#allocation2 + $0x410] sm:$0xff]
    %v163 = vld [vmem:[#allocation2 + $0x418] sm:$0xff]
    %v164 = vld [vmem:[#allocation2 + $0x420] sm:$0xff]
    %v165 = vld [vmem:[#allocation2 + $0x428] sm:$0xff]
    %v166 = vld [vmem:[#allocation2 + $0x430] sm:$0xff]
    %v167 = vld [vmem:[#allocation2 + $0x438] sm:$0xff]
    %v168 = vld [vmem:[#allocation2 + $0x440] sm:$0xff]
    %v169 = vld [vmem:[#allocation2 + $0x448] sm:$0xff]
    %v170 = vld [vmem:[#allocation2 + $0x450] sm:$0xff]
    %v171 = vld [vmem:[#allocation2 + $0x458] sm:$0xff]
    %v172 = vld [vmem:[#allocation2 + $0x460] sm:$0xff]
    %v173 = vld [vmem:[#allocation2 + $0x468] sm:$0xff]
    %v174 = vld [vmem:[#allocation2 + $0x470] sm:$0xff]
    %v175 = vld [vmem:[#allocation2 + $0x478] sm:$0xff]
    %v176 = vld [vmem:[#allocation2 + $0x480] sm:$0xff]
    %v177 = vld [vmem:[#allocation2 + $0x488] sm:$0xff]
    %v178 = vld [vmem:[#allocation2 + $0x490] sm:$0xff]
    %v179 = vld [vmem:[#allocation2 + $0x498] sm:$0xff]
    %v180 = vld [vmem:[#allocation2 + $0x4a0] sm:$0xff]
    %v181 = vld [vmem:[#allocation2 + $0x4a8] sm:$0xff]
    %v182 = vld [vmem:[#allocation2 + $0x4b0] sm:$0xff]
    %v183 = vld [vmem:[#allocation2 + $0x4b8] sm:$0xff]
    %v184 = vld [vmem:[#allocation2 + $0x4c0] sm:$0xff]
    %v185 = vld [vmem:[#allocation2 + $0x4c8] sm:$0xff]
    %v186 = vld [vmem:[#allocation2 + $0x4d0] sm:$0xff]
    %v187 = vld [vmem:[#allocation2 + $0x4d8] sm:$0xff]
    %v188 = vld [vmem:[#allocation2 + $0x4e0] sm:$0xff]
    %v189 = vld [vmem:[#allocation2 + $0x4e8] sm:$0xff]
    %v190 = vld [vmem:[#allocation2 + $0x4f0] sm:$0xff]
    %v191 = vld [vmem:[#allocation2 + $0x4f8] sm:$0xff]
    %v192 = vld [vmem:[#allocation2 + $0x500] sm:$0xff]
    %v193 = vld [vmem:[#allocation2 + $0x508] sm:$0xff]
    %v194 = vld [vmem:[#allocation2 + $0x510] sm:$0xff]
    %v195 = vld [vmem:[#allocation2 + $0x518] sm:$0xff]
    %v196 = vld [vmem:[#allocation2 + $0x520] sm:$0xff]
    %v197 = vld [vmem:[#allocation2 + $0x528] sm:$0xff]
    %v198 = vld [vmem:[#allocation2 + $0x530] sm:$0xff]
    %v199 = vld [vmem:[#allocation2 + $0x538] sm:$0xff]
    %v200 = vld [vmem:[#allocation2 + $0x540] sm:$0xff]
    %v201 = vld [vmem:[#allocation2 + $0x548] sm:$0xff]
    %v202 = vld [vmem:[#allocation2 + $0x550] sm:$0xff]
    %v203 = vld [vmem:[#allocation2 + $0x558] sm:$0xff]
    %v204 = vld [vmem:[#allocation2 + $0x560] sm:$0xff]
    %v205 = vld [vmem:[#allocation2 + $0x568] sm:$0xff]
    %v206 = vld [vmem:[#allocation2 + $0x570] sm:$0xff]
    %v207 = vld [vmem:[#allocation2 + $0x578] sm:$0xff]
    %v208 = vld [vmem:[#allocation2 + $0x580] sm:$0xff]
    %v209 = vld [vmem:[#allocation2 + $0x588] sm:$0xff]
    %v210 = vld [vmem:[#allocation2 + $0x590] sm:$0xff]
    %v211 = vld [vmem:[#allocation2 + $0x598] sm:$0xff]
    %v212 = vld [vmem:[#allocation2 + $0x5a0] sm:$0xff]
    %v213 = vld [vmem:[#allocation2 + $0x5a8] sm:$0xff]
    %v214 = vld [vmem:[#allocation2 + $0x5b0] sm:$0xff]
    %v215 = vld [vmem:[#allocation2 + $0x5b8] sm:$0xff]
    %v216 = vld [vmem:[#allocation2 + $0x5c0] sm:$0xff]
    %v217 = vld [vmem:[#allocation2 + $0x5c8] sm:$0xff]
    %v218 = vld [vmem:[#allocation2 + $0x5d0] sm:$0xff]
    %v219 = vld [vmem:[#allocation2 + $0x5d8] sm:$0xff]
    %v220 = vld [vmem:[#allocation2 + $0x5e0] sm:$0xff]
    %v221 = vld [vmem:[#allocation2 + $0x5e8] sm:$0xff]
    %v222 = vld [vmem:[#allocation2 + $0x5f0] sm:$0xff]
    %v223 = vld [vmem:[#allocation2 + $0x5f8] sm:$0xff]
    %v224 = vld [vmem:[#allocation2 + $0x600] sm:$0xff]
    %v225 = vld [vmem:[#allocation2 + $0x608] sm:$0xff]
    %v226 = vld [vmem:[#allocation2 + $0x610] sm:$0xff]
    %v227 = vld [vmem:[#allocation2 + $0x618] sm:$0xff]
    %v228 = vld [vmem:[#allocation2 + $0x620] sm:$0xff]
    %v229 = vld [vmem:[#allocation2 + $0x628] sm:$0xff]
    %v230 = vld [vmem:[#allocation2 + $0x630] sm:$0xff]
    %v231 = vld [vmem:[#allocation2 + $0x638] sm:$0xff]
    %v232 = vld [vmem:[#allocation2 + $0x640] sm:$0xff]
    %v233 = vld [vmem:[#allocation2 + $0x648] sm:$0xff]
    %v234 = vld [vmem:[#allocation2 + $0x650] sm:$0xff]
    %v235 = vld [vmem:[#allocation2 + $0x658] sm:$0xff]
    %v236 = vld [vmem:[#allocation2 + $0x660] sm:$0xff]
    %v237 = vld [vmem:[#allocation2 + $0x668] sm:$0xff]
    %v238 = vld [vmem:[#allocation2 + $0x670] sm:$0xff]
    %v239 = vld [vmem:[#allocation2 + $0x678] sm:$0xff]
    %v240 = vld [vmem:[#allocation2 + $0x680] sm:$0xff]
    %v241 = vld [vmem:[#allocation2 + $0x688] sm:$0xff]
    %v242 = vld [vmem:[#allocation2 + $0x690] sm:$0xff]
    %v243 = vld [vmem:[#allocation2 + $0x698] sm:$0xff]
    %v244 = vld [vmem:[#allocation2 + $0x6a0] sm:$0xff]
    %v245 = vld [vmem:[#allocation2 + $0x6a8] sm:$0xff]
    %v246 = vld [vmem:[#allocation2 + $0x6b0] sm:$0xff]
    %v247 = vld [vmem:[#allocation2 + $0x6b8] sm:$0xff]
    %v248 = vld [vmem:[#allocation2 + $0x6c0] sm:$0xff]
    %v249 = vld [vmem:[#allocation2 + $0x6c8] sm:$0xff]
    %v250 = vld [vmem:[#allocation2 + $0x6d0] sm:$0xff]
    %v251 = vld [vmem:[#allocation2 + $0x6d8] sm:$0xff]
    %v252 = vld [vmem:[#allocation2 + $0x6e0] sm:$0xff]
    %v253 = vld [vmem:[#allocation2 + $0x6e8] sm:$0xff]
    %v254 = vld [vmem:[#allocation2 + $0x6f0] sm:$0xff]
    %v255 = vld [vmem:[#allocation2 + $0x6f8] sm:$0xff]
    %v256 = vld [vmem:[#allocation2 + $0x700] sm:$0xff]
    %v257 = vld [vmem:[#allocation2 + $0x708] sm:$0xff]
    %v258 = vld [vmem:[#allocation2 + $0x710] sm:$0xff]
    %v259 = vld [vmem:[#allocation2 + $0x718] sm:$0xff]
    %v260 = vld [vmem:[#allocation2 + $0x720] sm:$0xff]
    %v261 = vld [vmem:[#allocation2 + $0x728] sm:$0xff]
    %v262 = vld [vmem:[#allocation2 + $0x730] sm:$0xff]
    %v263 = vld [vmem:[#allocation2 + $0x738] sm:$0xff]
    %v264 = vld [vmem:[#allocation2 + $0x740] sm:$0xff]
    %v265 = vld [vmem:[#allocation2 + $0x748] sm:$0xff]
    %v266 = vld [vmem:[#allocation2 + $0x750] sm:$0xff]
    %v267 = vld [vmem:[#allocation2 + $0x758] sm:$0xff]
    %v268 = vld [vmem:[#allocation2 + $0x760] sm:$0xff]
    %v269 = vld [vmem:[#allocation2 + $0x768] sm:$0xff]
    %v270 = vld [vmem:[#allocation2 + $0x770] sm:$0xff]
    %v271 = vld [vmem:[#allocation2 + $0x778] sm:$0xff]
    %v272 = vld [vmem:[#allocation2 + $0x780] sm:$0xff]
    %v273 = vld [vmem:[#allocation2 + $0x788] sm:$0xff]
    %v274 = vld [vmem:[#allocation2 + $0x790] sm:$0xff]
    %v275 = vld [vmem:[#allocation2 + $0x798] sm:$0xff]
    %v276 = vld [vmem:[#allocation2 + $0x7a0] sm:$0xff]
    %v277 = vld [vmem:[#allocation2 + $0x7a8] sm:$0xff]
    %v278 = vld [vmem:[#allocation2 + $0x7b0] sm:$0xff]
    %v279 = vld [vmem:[#allocation2 + $0x7b8] sm:$0xff]
    %v280 = vld [vmem:[#allocation2 + $0x7c0] sm:$0xff]
    %v281 = vld [vmem:[#allocation2 + $0x7c8] sm:$0xff]
    %v282 = vld [vmem:[#allocation2 + $0x7d0] sm:$0xff]
    %v283 = vld [vmem:[#allocation2 + $0x7d8] sm:$0xff]
    %v284 = vld [vmem:[#allocation2 + $0x7e0] sm:$0xff]
    %v285 = vld [vmem:[#allocation2 + $0x7e8] sm:$0xff]
    %v286 = vld [vmem:[#allocation2 + $0x7f0] sm:$0xff]
    %v287 = vld [vmem:[#allocation2 + $0x7f8] sm:$0xff]
    %v288 = vld [vmem:[%s2] sm:$0xf]
    %v290 = vlaneseq
    %v291 = vshrl.u32 %v290, 7
    %v292 = vsub.s32 0, %v291
    %v293 = vrot.slane %v288, %v292
    %v294 = vlaneseq
    %v295 = vshrl.u32 %v294, 7
    %v296 = vsub.s32 1, %v295
    %v297 = vrot.slane %v288, %v296
    %v298 = vlaneseq
    %v299 = vshrl.u32 %v298, 7
    %v300 = vsub.s32 2, %v299
    %v301 = vrot.slane %v288, %v300
    %v302 = vlaneseq
    %v303 = vshrl.u32 %v302, 7
    %v304 = vsub.s32 3, %v303
    %v305 = vrot.slane %v288, %v304
    %v314 = vunpack.c.l.b16 %v28
    %v315 = vunpack.c.h.b16 %v28
    %v316 = vunpack.c.l.b16 %v29
    %v317 = vunpack.c.h.b16 %v29
    %v318 = vunpack.c.l.b16 %v30
    %v319 = vunpack.c.h.b16 %v30
    %v320 = vunpack.c.l.b16 %v31
    %v321 = vunpack.c.h.b16 %v31
    %v322 = vpack.c.b16 %v314, %v314
    %v323 = vpack.c.b16 %v315, %v315
    %v324 = vpack.c.b16 %v316, %v316
    %v325 = vpack.c.b16 %v317, %v317
    %v326 = vpack.c.b16 %v318, %v318
    %v327 = vpack.c.b16 %v319, %v319
    %v328 = vpack.c.b16 %v320, %v320
    %v329 = vpack.c.b16 %v321, %v321
    %v594 = vunpack.c.l.b16 %v32
    %v595 = vunpack.c.h.b16 %v32
    %v596 = vunpack.c.l.b16 %v33
    %v597 = vunpack.c.h.b16 %v33
    %v598 = vunpack.c.l.b16 %v34
    %v599 = vunpack.c.h.b16 %v34
    %v600 = vunpack.c.l.b16 %v35
    %v601 = vunpack.c.h.b16 %v35
    %v602 = vunpack.c.l.b16 %v36
    %v603 = vunpack.c.h.b16 %v36
    %v604 = vunpack.c.l.b16 %v37
    %v605 = vunpack.c.h.b16 %v37
    %v606 = vunpack.c.l.b16 %v38
    %v607 = vunpack.c.h.b16 %v38
    %v608 = vunpack.c.l.b16 %v39
    %v609 = vunpack.c.h.b16 %v39
    %v610 = vunpack.c.l.b16 %v40
    %v611 = vunpack.c.h.b16 %v40
    %v612 = vunpack.c.l.b16 %v41
    %v613 = vunpack.c.h.b16 %v41
    %v614 = vunpack.c.l.b16 %v42
    %v615 = vunpack.c.h.b16 %v42
    %v616 = vunpack.c.l.b16 %v43
    %v617 = vunpack.c.h.b16 %v43
    %v618 = vunpack.c.l.b16 %v44
    %v619 = vunpack.c.h.b16 %v44
    %v620 = vunpack.c.l.b16 %v45
    %v621 = vunpack.c.h.b16 %v45
    %v622 = vunpack.c.l.b16 %v46
    %v623 = vunpack.c.h.b16 %v46
    %v624 = vunpack.c.l.b16 %v47
    %v625 = vunpack.c.h.b16 %v47
    %v626 = vunpack.c.l.b16 %v48
    %v627 = vunpack.c.h.b16 %v48
    %v628 = vunpack.c.l.b16 %v49
    %v629 = vunpack.c.h.b16 %v49
    %v630 = vunpack.c.l.b16 %v50
    %v631 = vunpack.c.h.b16 %v50
    %v632 = vunpack.c.l.b16 %v51
    %v633 = vunpack.c.h.b16 %v51
    %v634 = vunpack.c.l.b16 %v52
    %v635 = vunpack.c.h.b16 %v52
    %v636 = vunpack.c.l.b16 %v53
    %v637 = vunpack.c.h.b16 %v53
    %v638 = vunpack.c.l.b16 %v54
    %v639 = vunpack.c.h.b16 %v54
    %v640 = vunpack.c.l.b16 %v55
    %v641 = vunpack.c.h.b16 %v55
    %v642 = vunpack.c.l.b16 %v56
    %v643 = vunpack.c.h.b16 %v56
    %v644 = vunpack.c.l.b16 %v57
    %v645 = vunpack.c.h.b16 %v57
    %v646 = vunpack.c.l.b16 %v58
    %v647 = vunpack.c.h.b16 %v58
    %v648 = vunpack.c.l.b16 %v59
    %v649 = vunpack.c.h.b16 %v59
    %v650 = vunpack.c.l.b16 %v60
    %v651 = vunpack.c.h.b16 %v60
    %v652 = vunpack.c.l.b16 %v61
    %v653 = vunpack.c.h.b16 %v61
    %v654 = vunpack.c.l.b16 %v62
    %v655 = vunpack.c.h.b16 %v62
    %v656 = vunpack.c.l.b16 %v63
    %v657 = vunpack.c.h.b16 %v63
    %v658 = vunpack.c.l.b16 %v64
    %v659 = vunpack.c.h.b16 %v64
    %v660 = vunpack.c.l.b16 %v65
    %v661 = vunpack.c.h.b16 %v65
    %v662 = vunpack.c.l.b16 %v66
    %v663 = vunpack.c.h.b16 %v66
    %v664 = vunpack.c.l.b16 %v67
    %v665 = vunpack.c.h.b16 %v67
    %v666 = vunpack.c.l.b16 %v68
    %v667 = vunpack.c.h.b16 %v68
    %v668 = vunpack.c.l.b16 %v69
    %v669 = vunpack.c.h.b16 %v69
    %v670 = vunpack.c.l.b16 %v70
    %v671 = vunpack.c.h.b16 %v70
    %v672 = vunpack.c.l.b16 %v71
    %v673 = vunpack.c.h.b16 %v71
    %v674 = vunpack.c.l.b16 %v72
    %v675 = vunpack.c.h.b16 %v72
    %v676 = vunpack.c.l.b16 %v73
    %v677 = vunpack.c.h.b16 %v73
    %v678 = vunpack.c.l.b16 %v74
    %v679 = vunpack.c.h.b16 %v74
    %v680 = vunpack.c.l.b16 %v75
    %v681 = vunpack.c.h.b16 %v75
    %v682 = vunpack.c.l.b16 %v76
    %v683 = vunpack.c.h.b16 %v76
    %v684 = vunpack.c.l.b16 %v77
    %v685 = vunpack.c.h.b16 %v77
    %v686 = vunpack.c.l.b16 %v78
    %v687 = vunpack.c.h.b16 %v78
    %v688 = vunpack.c.l.b16 %v79
    %v689 = vunpack.c.h.b16 %v79
    %v690 = vunpack.c.l.b16 %v80
    %v691 = vunpack.c.h.b16 %v80
    %v692 = vunpack.c.l.b16 %v81
    %v693 = vunpack.c.h.b16 %v81
    %v694 = vunpack.c.l.b16 %v82
    %v695 = vunpack.c.h.b16 %v82
    %v696 = vunpack.c.l.b16 %v83
    %v697 = vunpack.c.h.b16 %v83
    %v698 = vunpack.c.l.b16 %v84
    %v699 = vunpack.c.h.b16 %v84
    %v700 = vunpack.c.l.b16 %v85
    %v701 = vunpack.c.h.b16 %v85
    %v702 = vunpack.c.l.b16 %v86
    %v703 = vunpack.c.h.b16 %v86
    %v704 = vunpack.c.l.b16 %v87
    %v705 = vunpack.c.h.b16 %v87
    %v706 = vunpack.c.l.b16 %v88
    %v707 = vunpack.c.h.b16 %v88
    %v708 = vunpack.c.l.b16 %v89
    %v709 = vunpack.c.h.b16 %v89
    %v710 = vunpack.c.l.b16 %v90
    %v711 = vunpack.c.h.b16 %v90
    %v712 = vunpack.c.l.b16 %v91
    %v713 = vunpack.c.h.b16 %v91
    %v714 = vunpack.c.l.b16 %v92
    %v715 = vunpack.c.h.b16 %v92
    %v716 = vunpack.c.l.b16 %v93
    %v717 = vunpack.c.h.b16 %v93
    %v718 = vunpack.c.l.b16 %v94
    %v719 = vunpack.c.h.b16 %v94
    %v720 = vunpack.c.l.b16 %v95
    %v721 = vunpack.c.h.b16 %v95
    %v722 = vunpack.c.l.b16 %v96
    %v723 = vunpack.c.h.b16 %v96
    %v724 = vunpack.c.l.b16 %v97
    %v725 = vunpack.c.h.b16 %v97
    %v726 = vunpack.c.l.b16 %v98
    %v727 = vunpack.c.h.b16 %v98
    %v728 = vunpack.c.l.b16 %v99
    %v729 = vunpack.c.h.b16 %v99
    %v730 = vunpack.c.l.b16 %v100
    %v731 = vunpack.c.h.b16 %v100
    %v732 = vunpack.c.l.b16 %v101
    %v733 = vunpack.c.h.b16 %v101
    %v734 = vunpack.c.l.b16 %v102
    %v735 = vunpack.c.h.b16 %v102
    %v736 = vunpack.c.l.b16 %v103
    %v737 = vunpack.c.h.b16 %v103
    %v738 = vunpack.c.l.b16 %v104
    %v739 = vunpack.c.h.b16 %v104
    %v740 = vunpack.c.l.b16 %v105
    %v741 = vunpack.c.h.b16 %v105
    %v742 = vunpack.c.l.b16 %v106
    %v743 = vunpack.c.h.b16 %v106
    %v744 = vunpack.c.l.b16 %v107
    %v745 = vunpack.c.h.b16 %v107
    %v746 = vunpack.c.l.b16 %v108
    %v747 = vunpack.c.h.b16 %v108
    %v748 = vunpack.c.l.b16 %v109
    %v749 = vunpack.c.h.b16 %v109
    %v750 = vunpack.c.l.b16 %v110
    %v751 = vunpack.c.h.b16 %v110
    %v752 = vunpack.c.l.b16 %v111
    %v753 = vunpack.c.h.b16 %v111
    %v754 = vunpack.c.l.b16 %v112
    %v755 = vunpack.c.h.b16 %v112
    %v756 = vunpack.c.l.b16 %v113
    %v757 = vunpack.c.h.b16 %v113
    %v758 = vunpack.c.l.b16 %v114
    %v759 = vunpack.c.h.b16 %v114
    %v760 = vunpack.c.l.b16 %v115
    %v761 = vunpack.c.h.b16 %v115
    %v762 = vunpack.c.l.b16 %v116
    %v763 = vunpack.c.h.b16 %v116
    %v764 = vunpack.c.l.b16 %v117
    %v765 = vunpack.c.h.b16 %v117
    %v766 = vunpack.c.l.b16 %v118
    %v767 = vunpack.c.h.b16 %v118
    %v768 = vunpack.c.l.b16 %v119
    %v769 = vunpack.c.h.b16 %v119
    %v770 = vunpack.c.l.b16 %v120
    %v771 = vunpack.c.h.b16 %v120
    %v772 = vunpack.c.l.b16 %v121
    %v773 = vunpack.c.h.b16 %v121
    %v774 = vunpack.c.l.b16 %v122
    %v775 = vunpack.c.h.b16 %v122
    %v776 = vunpack.c.l.b16 %v123
    %v777 = vunpack.c.h.b16 %v123
    %v778 = vunpack.c.l.b16 %v124
    %v779 = vunpack.c.h.b16 %v124
    %v780 = vunpack.c.l.b16 %v125
    %v781 = vunpack.c.h.b16 %v125
    %v782 = vunpack.c.l.b16 %v126
    %v783 = vunpack.c.h.b16 %v126
    %v784 = vunpack.c.l.b16 %v127
    %v785 = vunpack.c.h.b16 %v127
    %v786 = vunpack.c.l.b16 %v128
    %v787 = vunpack.c.h.b16 %v128
    %v788 = vunpack.c.l.b16 %v129
    %v789 = vunpack.c.h.b16 %v129
    %v790 = vunpack.c.l.b16 %v130
    %v791 = vunpack.c.h.b16 %v130
    %v792 = vunpack.c.l.b16 %v131
    %v793 = vunpack.c.h.b16 %v131
    %v794 = vunpack.c.l.b16 %v132
    %v795 = vunpack.c.h.b16 %v132
    %v796 = vunpack.c.l.b16 %v133
    %v797 = vunpack.c.h.b16 %v133
    %v798 = vunpack.c.l.b16 %v134
    %v799 = vunpack.c.h.b16 %v134
    %v800 = vunpack.c.l.b16 %v135
    %v801 = vunpack.c.h.b16 %v135
    %v802 = vunpack.c.l.b16 %v136
    %v803 = vunpack.c.h.b16 %v136
    %v804 = vunpack.c.l.b16 %v137
    %v805 = vunpack.c.h.b16 %v137
    %v806 = vunpack.c.l.b16 %v138
    %v807 = vunpack.c.h.b16 %v138
    %v808 = vunpack.c.l.b16 %v139
    %v809 = vunpack.c.h.b16 %v139
    %v810 = vunpack.c.l.b16 %v140
    %v811 = vunpack.c.h.b16 %v140
    %v812 = vunpack.c.l.b16 %v141
    %v813 = vunpack.c.h.b16 %v141
    %v814 = vunpack.c.l.b16 %v142
    %v815 = vunpack.c.h.b16 %v142
    %v816 = vunpack.c.l.b16 %v143
    %v817 = vunpack.c.h.b16 %v143
    %v818 = vunpack.c.l.b16 %v144
    %v819 = vunpack.c.h.b16 %v144
    %v820 = vunpack.c.l.b16 %v145
    %v821 = vunpack.c.h.b16 %v145
    %v822 = vunpack.c.l.b16 %v146
    %v823 = vunpack.c.h.b16 %v146
    %v824 = vunpack.c.l.b16 %v147
    %v825 = vunpack.c.h.b16 %v147
    %v826 = vunpack.c.l.b16 %v148
    %v827 = vunpack.c.h.b16 %v148
    %v828 = vunpack.c.l.b16 %v149
    %v829 = vunpack.c.h.b16 %v149
    %v830 = vunpack.c.l.b16 %v150
    %v831 = vunpack.c.h.b16 %v150
    %v832 = vunpack.c.l.b16 %v151
    %v833 = vunpack.c.h.b16 %v151
    %v834 = vunpack.c.l.b16 %v152
    %v835 = vunpack.c.h.b16 %v152
    %v836 = vunpack.c.l.b16 %v153
    %v837 = vunpack.c.h.b16 %v153
    %v838 = vunpack.c.l.b16 %v154
    %v839 = vunpack.c.h.b16 %v154
    %v840 = vunpack.c.l.b16 %v155
    %v841 = vunpack.c.h.b16 %v155
    %v842 = vunpack.c.l.b16 %v156
    %v843 = vunpack.c.h.b16 %v156
    %v844 = vunpack.c.l.b16 %v157
    %v845 = vunpack.c.h.b16 %v157
    %v846 = vunpack.c.l.b16 %v158
    %v847 = vunpack.c.h.b16 %v158
    %v848 = vunpack.c.l.b16 %v159
    %v849 = vunpack.c.h.b16 %v159
    %v850 = vunpack.c.l.b16 %v160
    %v851 = vunpack.c.h.b16 %v160
    %v852 = vunpack.c.l.b16 %v161
    %v853 = vunpack.c.h.b16 %v161
    %v854 = vunpack.c.l.b16 %v162
    %v855 = vunpack.c.h.b16 %v162
    %v856 = vunpack.c.l.b16 %v163
    %v857 = vunpack.c.h.b16 %v163
    %v858 = vunpack.c.l.b16 %v164
    %v859 = vunpack.c.h.b16 %v164
    %v860 = vunpack.c.l.b16 %v165
    %v861 = vunpack.c.h.b16 %v165
    %v862 = vunpack.c.l.b16 %v166
    %v863 = vunpack.c.h.b16 %v166
    %v864 = vunpack.c.l.b16 %v167
    %v865 = vunpack.c.h.b16 %v167
    %v866 = vunpack.c.l.b16 %v168
    %v867 = vunpack.c.h.b16 %v168
    %v868 = vunpack.c.l.b16 %v169
    %v869 = vunpack.c.h.b16 %v169
    %v870 = vunpack.c.l.b16 %v170
    %v871 = vunpack.c.h.b16 %v170
    %v872 = vunpack.c.l.b16 %v171
    %v873 = vunpack.c.h.b16 %v171
    %v874 = vunpack.c.l.b16 %v172
    %v875 = vunpack.c.h.b16 %v172
    %v876 = vunpack.c.l.b16 %v173
    %v877 = vunpack.c.h.b16 %v173
    %v878 = vunpack.c.l.b16 %v174
    %v879 = vunpack.c.h.b16 %v174
    %v880 = vunpack.c.l.b16 %v175
    %v881 = vunpack.c.h.b16 %v175
    %v882 = vunpack.c.l.b16 %v176
    %v883 = vunpack.c.h.b16 %v176
    %v884 = vunpack.c.l.b16 %v177
    %v885 = vunpack.c.h.b16 %v177
    %v886 = vunpack.c.l.b16 %v178
    %v887 = vunpack.c.h.b16 %v178
    %v888 = vunpack.c.l.b16 %v179
    %v889 = vunpack.c.h.b16 %v179
    %v890 = vunpack.c.l.b16 %v180
    %v891 = vunpack.c.h.b16 %v180
    %v892 = vunpack.c.l.b16 %v181
    %v893 = vunpack.c.h.b16 %v181
    %v894 = vunpack.c.l.b16 %v182
    %v895 = vunpack.c.h.b16 %v182
    %v896 = vunpack.c.l.b16 %v183
    %v897 = vunpack.c.h.b16 %v183
    %v898 = vunpack.c.l.b16 %v184
    %v899 = vunpack.c.h.b16 %v184
    %v900 = vunpack.c.l.b16 %v185
    %v901 = vunpack.c.h.b16 %v185
    %v902 = vunpack.c.l.b16 %v186
    %v903 = vunpack.c.h.b16 %v186
    %v904 = vunpack.c.l.b16 %v187
    %v905 = vunpack.c.h.b16 %v187
    %v906 = vunpack.c.l.b16 %v188
    %v907 = vunpack.c.h.b16 %v188
    %v908 = vunpack.c.l.b16 %v189
    %v909 = vunpack.c.h.b16 %v189
    %v910 = vunpack.c.l.b16 %v190
    %v911 = vunpack.c.h.b16 %v190
    %v912 = vunpack.c.l.b16 %v191
    %v913 = vunpack.c.h.b16 %v191
    %v914 = vunpack.c.l.b16 %v192
    %v915 = vunpack.c.h.b16 %v192
    %v916 = vunpack.c.l.b16 %v193
    %v917 = vunpack.c.h.b16 %v193
    %v918 = vunpack.c.l.b16 %v194
    %v919 = vunpack.c.h.b16 %v194
    %v920 = vunpack.c.l.b16 %v195
    %v921 = vunpack.c.h.b16 %v195
    %v922 = vunpack.c.l.b16 %v196
    %v923 = vunpack.c.h.b16 %v196
    %v924 = vunpack.c.l.b16 %v197
    %v925 = vunpack.c.h.b16 %v197
    %v926 = vunpack.c.l.b16 %v198
    %v927 = vunpack.c.h.b16 %v198
    %v928 = vunpack.c.l.b16 %v199
    %v929 = vunpack.c.h.b16 %v199
    %v930 = vunpack.c.l.b16 %v200
    %v931 = vunpack.c.h.b16 %v200
    %v932 = vunpack.c.l.b16 %v201
    %v933 = vunpack.c.h.b16 %v201
    %v934 = vunpack.c.l.b16 %v202
    %v935 = vunpack.c.h.b16 %v202
    %v936 = vunpack.c.l.b16 %v203
    %v937 = vunpack.c.h.b16 %v203
    %v938 = vunpack.c.l.b16 %v204
    %v939 = vunpack.c.h.b16 %v204
    %v940 = vunpack.c.l.b16 %v205
    %v941 = vunpack.c.h.b16 %v205
    %v942 = vunpack.c.l.b16 %v206
    %v943 = vunpack.c.h.b16 %v206
    %v944 = vunpack.c.l.b16 %v207
    %v945 = vunpack.c.h.b16 %v207
    %v946 = vunpack.c.l.b16 %v208
    %v947 = vunpack.c.h.b16 %v208
    %v948 = vunpack.c.l.b16 %v209
    %v949 = vunpack.c.h.b16 %v209
    %v950 = vunpack.c.l.b16 %v210
    %v951 = vunpack.c.h.b16 %v210
    %v952 = vunpack.c.l.b16 %v211
    %v953 = vunpack.c.h.b16 %v211
    %v954 = vunpack.c.l.b16 %v212
    %v955 = vunpack.c.h.b16 %v212
    %v956 = vunpack.c.l.b16 %v213
    %v957 = vunpack.c.h.b16 %v213
    %v958 = vunpack.c.l.b16 %v214
    %v959 = vunpack.c.h.b16 %v214
    %v960 = vunpack.c.l.b16 %v215
    %v961 = vunpack.c.h.b16 %v215
    %v962 = vunpack.c.l.b16 %v216
    %v963 = vunpack.c.h.b16 %v216
    %v964 = vunpack.c.l.b16 %v217
    %v965 = vunpack.c.h.b16 %v217
    %v966 = vunpack.c.l.b16 %v218
    %v967 = vunpack.c.h.b16 %v218
    %v968 = vunpack.c.l.b16 %v219
    %v969 = vunpack.c.h.b16 %v219
    %v970 = vunpack.c.l.b16 %v220
    %v971 = vunpack.c.h.b16 %v220
    %v972 = vunpack.c.l.b16 %v221
    %v973 = vunpack.c.h.b16 %v221
    %v974 = vunpack.c.l.b16 %v222
    %v975 = vunpack.c.h.b16 %v222
    %v976 = vunpack.c.l.b16 %v223
    %v977 = vunpack.c.h.b16 %v223
    %v978 = vunpack.c.l.b16 %v224
    %v979 = vunpack.c.h.b16 %v224
    %v980 = vunpack.c.l.b16 %v225
    %v981 = vunpack.c.h.b16 %v225
    %v982 = vunpack.c.l.b16 %v226
    %v983 = vunpack.c.h.b16 %v226
    %v984 = vunpack.c.l.b16 %v227
    %v985 = vunpack.c.h.b16 %v227
    %v986 = vunpack.c.l.b16 %v228
    %v987 = vunpack.c.h.b16 %v228
    %v988 = vunpack.c.l.b16 %v229
    %v989 = vunpack.c.h.b16 %v229
    %v990 = vunpack.c.l.b16 %v230
    %v991 = vunpack.c.h.b16 %v230
    %v992 = vunpack.c.l.b16 %v231
    %v993 = vunpack.c.h.b16 %v231
    %v994 = vunpack.c.l.b16 %v232
    %v995 = vunpack.c.h.b16 %v232
    %v996 = vunpack.c.l.b16 %v233
    %v997 = vunpack.c.h.b16 %v233
    %v998 = vunpack.c.l.b16 %v234
    %v999 = vunpack.c.h.b16 %v234
    %v1000 = vunpack.c.l.b16 %v235
    %v1001 = vunpack.c.h.b16 %v235
    %v1002 = vunpack.c.l.b16 %v236
    %v1003 = vunpack.c.h.b16 %v236
    %v1004 = vunpack.c.l.b16 %v237
    %v1005 = vunpack.c.h.b16 %v237
    %v1006 = vunpack.c.l.b16 %v238
    %v1007 = vunpack.c.h.b16 %v238
    %v1008 = vunpack.c.l.b16 %v239
    %v1009 = vunpack.c.h.b16 %v239
    %v1010 = vunpack.c.l.b16 %v240
    %v1011 = vunpack.c.h.b16 %v240
    %v1012 = vunpack.c.l.b16 %v241
    %v1013 = vunpack.c.h.b16 %v241
    %v1014 = vunpack.c.l.b16 %v242
    %v1015 = vunpack.c.h.b16 %v242
    %v1016 = vunpack.c.l.b16 %v243
    %v1017 = vunpack.c.h.b16 %v243
    %v1018 = vunpack.c.l.b16 %v244
    %v1019 = vunpack.c.h.b16 %v244
    %v1020 = vunpack.c.l.b16 %v245
    %v1021 = vunpack.c.h.b16 %v245
    %v1022 = vunpack.c.l.b16 %v246
    %v1023 = vunpack.c.h.b16 %v246
    %v1024 = vunpack.c.l.b16 %v247
    %v1025 = vunpack.c.h.b16 %v247
    %v1026 = vunpack.c.l.b16 %v248
    %v1027 = vunpack.c.h.b16 %v248
    %v1028 = vunpack.c.l.b16 %v249
    %v1029 = vunpack.c.h.b16 %v249
    %v1030 = vunpack.c.l.b16 %v250
    %v1031 = vunpack.c.h.b16 %v250
    %v1032 = vunpack.c.l.b16 %v251
    %v1033 = vunpack.c.h.b16 %v251
    %v1034 = vunpack.c.l.b16 %v252
    %v1035 = vunpack.c.h.b16 %v252
    %v1036 = vunpack.c.l.b16 %v253
    %v1037 = vunpack.c.h.b16 %v253
    %v1038 = vunpack.c.l.b16 %v254
    %v1039 = vunpack.c.h.b16 %v254
    %v1040 = vunpack.c.l.b16 %v255
    %v1041 = vunpack.c.h.b16 %v255
    %v1042 = vunpack.c.l.b16 %v256
    %v1043 = vunpack.c.h.b16 %v256
    %v1044 = vunpack.c.l.b16 %v257
    %v1045 = vunpack.c.h.b16 %v257
    %v1046 = vunpack.c.l.b16 %v258
    %v1047 = vunpack.c.h.b16 %v258
    %v1048 = vunpack.c.l.b16 %v259
    %v1049 = vunpack.c.h.b16 %v259
    %v1050 = vunpack.c.l.b16 %v260
    %v1051 = vunpack.c.h.b16 %v260
    %v1052 = vunpack.c.l.b16 %v261
    %v1053 = vunpack.c.h.b16 %v261
    %v1054 = vunpack.c.l.b16 %v262
    %v1055 = vunpack.c.h.b16 %v262
    %v1056 = vunpack.c.l.b16 %v263
    %v1057 = vunpack.c.h.b16 %v263
    %v1058 = vunpack.c.l.b16 %v264
    %v1059 = vunpack.c.h.b16 %v264
    %v1060 = vunpack.c.l.b16 %v265
    %v1061 = vunpack.c.h.b16 %v265
    %v1062 = vunpack.c.l.b16 %v266
    %v1063 = vunpack.c.h.b16 %v266
    %v1064 = vunpack.c.l.b16 %v267
    %v1065 = vunpack.c.h.b16 %v267
    %v1066 = vunpack.c.l.b16 %v268
    %v1067 = vunpack.c.h.b16 %v268
    %v1068 = vunpack.c.l.b16 %v269
    %v1069 = vunpack.c.h.b16 %v269
    %v1070 = vunpack.c.l.b16 %v270
    %v1071 = vunpack.c.h.b16 %v270
    %v1072 = vunpack.c.l.b16 %v271
    %v1073 = vunpack.c.h.b16 %v271
    %v1074 = vunpack.c.l.b16 %v272
    %v1075 = vunpack.c.h.b16 %v272
    %v1076 = vunpack.c.l.b16 %v273
    %v1077 = vunpack.c.h.b16 %v273
    %v1078 = vunpack.c.l.b16 %v274
    %v1079 = vunpack.c.h.b16 %v274
    %v1080 = vunpack.c.l.b16 %v275
    %v1081 = vunpack.c.h.b16 %v275
    %v1082 = vunpack.c.l.b16 %v276
    %v1083 = vunpack.c.h.b16 %v276
    %v1084 = vunpack.c.l.b16 %v277
    %v1085 = vunpack.c.h.b16 %v277
    %v1086 = vunpack.c.l.b16 %v278
    %v1087 = vunpack.c.h.b16 %v278
    %v1088 = vunpack.c.l.b16 %v279
    %v1089 = vunpack.c.h.b16 %v279
    %v1090 = vunpack.c.l.b16 %v280
    %v1091 = vunpack.c.h.b16 %v280
    %v1092 = vunpack.c.l.b16 %v281
    %v1093 = vunpack.c.h.b16 %v281
    %v1094 = vunpack.c.l.b16 %v282
    %v1095 = vunpack.c.h.b16 %v282
    %v1096 = vunpack.c.l.b16 %v283
    %v1097 = vunpack.c.h.b16 %v283
    %v1098 = vunpack.c.l.b16 %v284
    %v1099 = vunpack.c.h.b16 %v284
    %v1100 = vunpack.c.l.b16 %v285
    %v1101 = vunpack.c.h.b16 %v285
    %v1102 = vunpack.c.l.b16 %v286
    %v1103 = vunpack.c.h.b16 %v286
    %v1104 = vunpack.c.l.b16 %v287
    %v1105 = vunpack.c.h.b16 %v287
    %v1106 = vpack.c.b16 %v598, %v594
    %v1107 = vpack.c.b16 %v599, %v595
    %v1108 = vpack.c.b16 %v600, %v596
    %v1109 = vpack.c.b16 %v601, %v597
    %v1110 = vpack.c.b16 %v606, %v602
    %v1111 = vpack.c.b16 %v607, %v603
    %v1112 = vpack.c.b16 %v608, %v604
    %v1113 = vpack.c.b16 %v609, %v605
    %v1114 = vpack.c.b16 %v614, %v610
    %v1115 = vpack.c.b16 %v615, %v611
    %v1116 = vpack.c.b16 %v616, %v612
    %v1117 = vpack.c.b16 %v617, %v613
    %v1118 = vpack.c.b16 %v622, %v618
    %v1119 = vpack.c.b16 %v623, %v619
    %v1120 = vpack.c.b16 %v624, %v620
    %v1121 = vpack.c.b16 %v625, %v621
    %v1122 = vpack.c.b16 %v630, %v626
    %v1123 = vpack.c.b16 %v631, %v627
    %v1124 = vpack.c.b16 %v632, %v628
    %v1125 = vpack.c.b16 %v633, %v629
    %v1126 = vpack.c.b16 %v638, %v634
    %v1127 = vpack.c.b16 %v639, %v635
    %v1128 = vpack.c.b16 %v640, %v636
    %v1129 = vpack.c.b16 %v641, %v637
    %v1130 = vpack.c.b16 %v646, %v642
    %v1131 = vpack.c.b16 %v647, %v643
    %v1132 = vpack.c.b16 %v648, %v644
    %v1133 = vpack.c.b16 %v649, %v645
    %v1134 = vpack.c.b16 %v654, %v650
    %v1135 = vpack.c.b16 %v655, %v651
    %v1136 = vpack.c.b16 %v656, %v652
    %v1137 = vpack.c.b16 %v657, %v653
    %v1138 = vpack.c.b16 %v662, %v658
    %v1139 = vpack.c.b16 %v663, %v659
    %v1140 = vpack.c.b16 %v664, %v660
    %v1141 = vpack.c.b16 %v665, %v661
    %v1142 = vpack.c.b16 %v670, %v666
    %v1143 = vpack.c.b16 %v671, %v667
    %v1144 = vpack.c.b16 %v672, %v668
    %v1145 = vpack.c.b16 %v673, %v669
    %v1146 = vpack.c.b16 %v678, %v674
    %v1147 = vpack.c.b16 %v679, %v675
    %v1148 = vpack.c.b16 %v680, %v676
    %v1149 = vpack.c.b16 %v681, %v677
    %v1150 = vpack.c.b16 %v686, %v682
    %v1151 = vpack.c.b16 %v687, %v683
    %v1152 = vpack.c.b16 %v688, %v684
    %v1153 = vpack.c.b16 %v689, %v685
    %v1154 = vpack.c.b16 %v694, %v690
    %v1155 = vpack.c.b16 %v695, %v691
    %v1156 = vpack.c.b16 %v696, %v692
    %v1157 = vpack.c.b16 %v697, %v693
    %v1158 = vpack.c.b16 %v702, %v698
    %v1159 = vpack.c.b16 %v703, %v699
    %v1160 = vpack.c.b16 %v704, %v700
    %v1161 = vpack.c.b16 %v705, %v701
    %v1162 = vpack.c.b16 %v710, %v706
    %v1163 = vpack.c.b16 %v711, %v707
    %v1164 = vpack.c.b16 %v712, %v708
    %v1165 = vpack.c.b16 %v713, %v709
    %v1166 = vpack.c.b16 %v718, %v714
    %v1167 = vpack.c.b16 %v719, %v715
    %v1168 = vpack.c.b16 %v720, %v716
    %v1169 = vpack.c.b16 %v721, %v717
    %v1170 = vpack.c.b16 %v726, %v722
    %v1171 = vpack.c.b16 %v727, %v723
    %v1172 = vpack.c.b16 %v728, %v724
    %v1173 = vpack.c.b16 %v729, %v725
    %v1174 = vpack.c.b16 %v734, %v730
    %v1175 = vpack.c.b16 %v735, %v731
    %v1176 = vpack.c.b16 %v736, %v732
    %v1177 = vpack.c.b16 %v737, %v733
    %v1178 = vpack.c.b16 %v742, %v738
    %v1179 = vpack.c.b16 %v743, %v739
    %v1180 = vpack.c.b16 %v744, %v740
    %v1181 = vpack.c.b16 %v745, %v741
    %v1182 = vpack.c.b16 %v750, %v746
    %v1183 = vpack.c.b16 %v751, %v747
    %v1184 = vpack.c.b16 %v752, %v748
    %v1185 = vpack.c.b16 %v753, %v749
    %v1186 = vpack.c.b16 %v758, %v754
    %v1187 = vpack.c.b16 %v759, %v755
    %v1188 = vpack.c.b16 %v760, %v756
    %v1189 = vpack.c.b16 %v761, %v757
    %v1190 = vpack.c.b16 %v766, %v762
    %v1191 = vpack.c.b16 %v767, %v763
    %v1192 = vpack.c.b16 %v768, %v764
    %v1193 = vpack.c.b16 %v769, %v765
    %v1194 = vpack.c.b16 %v774, %v770
    %v1195 = vpack.c.b16 %v775, %v771
    %v1196 = vpack.c.b16 %v776, %v772
    %v1197 = vpack.c.b16 %v777, %v773
    %v1198 = vpack.c.b16 %v782, %v778
    %v1199 = vpack.c.b16 %v783, %v779
    %v1200 = vpack.c.b16 %v784, %v780
    %v1201 = vpack.c.b16 %v785, %v781
    %v1202 = vpack.c.b16 %v790, %v786
    %v1203 = vpack.c.b16 %v791, %v787
    %v1204 = vpack.c.b16 %v792, %v788
    %v1205 = vpack.c.b16 %v793, %v789
    %v1206 = vpack.c.b16 %v798, %v794
    %v1207 = vpack.c.b16 %v799, %v795
    %v1208 = vpack.c.b16 %v800, %v796
    %v1209 = vpack.c.b16 %v801, %v797
    %v1210 = vpack.c.b16 %v806, %v802
    %v1211 = vpack.c.b16 %v807, %v803
    %v1212 = vpack.c.b16 %v808, %v804
    %v1213 = vpack.c.b16 %v809, %v805
    %v1214 = vpack.c.b16 %v814, %v810
    %v1215 = vpack.c.b16 %v815, %v811
    %v1216 = vpack.c.b16 %v816, %v812
    %v1217 = vpack.c.b16 %v817, %v813
    %v1218 = vpack.c.b16 %v822, %v818
    %v1219 = vpack.c.b16 %v823, %v819
    %v1220 = vpack.c.b16 %v824, %v820
    %v1221 = vpack.c.b16 %v825, %v821
    %v1222 = vpack.c.b16 %v830, %v826
    %v1223 = vpack.c.b16 %v831, %v827
    %v1224 = vpack.c.b16 %v832, %v828
    %v1225 = vpack.c.b16 %v833, %v829
    %v1226 = vpack.c.b16 %v838, %v834
    %v1227 = vpack.c.b16 %v839, %v835
    %v1228 = vpack.c.b16 %v840, %v836
    %v1229 = vpack.c.b16 %v841, %v837
    %v1230 = vpack.c.b16 %v846, %v842
    %v1231 = vpack.c.b16 %v847, %v843
    %v1232 = vpack.c.b16 %v848, %v844
    %v1233 = vpack.c.b16 %v849, %v845
    %v1234 = vpack.c.b16 %v854, %v850
    %v1235 = vpack.c.b16 %v855, %v851
    %v1236 = vpack.c.b16 %v856, %v852
    %v1237 = vpack.c.b16 %v857, %v853
    %v1238 = vpack.c.b16 %v862, %v858
    %v1239 = vpack.c.b16 %v863, %v859
    %v1240 = vpack.c.b16 %v864, %v860
    %v1241 = vpack.c.b16 %v865, %v861
    %v1242 = vpack.c.b16 %v870, %v866
    %v1243 = vpack.c.b16 %v871, %v867
    %v1244 = vpack.c.b16 %v872, %v868
    %v1245 = vpack.c.b16 %v873, %v869
    %v1246 = vpack.c.b16 %v878, %v874
    %v1247 = vpack.c.b16 %v879, %v875
    %v1248 = vpack.c.b16 %v880, %v876
    %v1249 = vpack.c.b16 %v881, %v877
    %v1250 = vpack.c.b16 %v886, %v882
    %v1251 = vpack.c.b16 %v887, %v883
    %v1252 = vpack.c.b16 %v888, %v884
    %v1253 = vpack.c.b16 %v889, %v885
    %v1254 = vpack.c.b16 %v894, %v890
    %v1255 = vpack.c.b16 %v895, %v891
    %v1256 = vpack.c.b16 %v896, %v892
    %v1257 = vpack.c.b16 %v897, %v893
    %v1258 = vpack.c.b16 %v902, %v898
    %v1259 = vpack.c.b16 %v903, %v899
    %v1260 = vpack.c.b16 %v904, %v900
    %v1261 = vpack.c.b16 %v905, %v901
    %v1262 = vpack.c.b16 %v910, %v906
    %v1263 = vpack.c.b16 %v911, %v907
    %v1264 = vpack.c.b16 %v912, %v908
    %v1265 = vpack.c.b16 %v913, %v909
    %v1266 = vpack.c.b16 %v918, %v914
    %v1267 = vpack.c.b16 %v919, %v915
    %v1268 = vpack.c.b16 %v920, %v916
    %v1269 = vpack.c.b16 %v921, %v917
    %v1270 = vpack.c.b16 %v926, %v922
    %v1271 = vpack.c.b16 %v927, %v923
    %v1272 = vpack.c.b16 %v928, %v924
    %v1273 = vpack.c.b16 %v929, %v925
    %v1274 = vpack.c.b16 %v934, %v930
    %v1275 = vpack.c.b16 %v935, %v931
    %v1276 = vpack.c.b16 %v936, %v932
    %v1277 = vpack.c.b16 %v937, %v933
    %v1278 = vpack.c.b16 %v942, %v938
    %v1279 = vpack.c.b16 %v943, %v939
    %v1280 = vpack.c.b16 %v944, %v940
    %v1281 = vpack.c.b16 %v945, %v941
    %v1282 = vpack.c.b16 %v950, %v946
    %v1283 = vpack.c.b16 %v951, %v947
    %v1284 = vpack.c.b16 %v952, %v948
    %v1285 = vpack.c.b16 %v953, %v949
    %v1286 = vpack.c.b16 %v958, %v954
    %v1287 = vpack.c.b16 %v959, %v955
    %v1288 = vpack.c.b16 %v960, %v956
    %v1289 = vpack.c.b16 %v961, %v957
    %v1290 = vpack.c.b16 %v966, %v962
    %v1291 = vpack.c.b16 %v967, %v963
    %v1292 = vpack.c.b16 %v968, %v964
    %v1293 = vpack.c.b16 %v969, %v965
    %v1294 = vpack.c.b16 %v974, %v970
    %v1295 = vpack.c.b16 %v975, %v971
    %v1296 = vpack.c.b16 %v976, %v972
    %v1297 = vpack.c.b16 %v977, %v973
    %v1298 = vpack.c.b16 %v982, %v978
    %v1299 = vpack.c.b16 %v983, %v979
    %v1300 = vpack.c.b16 %v984, %v980
    %v1301 = vpack.c.b16 %v985, %v981
    %v1302 = vpack.c.b16 %v990, %v986
    %v1303 = vpack.c.b16 %v991, %v987
    %v1304 = vpack.c.b16 %v992, %v988
    %v1305 = vpack.c.b16 %v993, %v989
    %v1306 = vpack.c.b16 %v998, %v994
    %v1307 = vpack.c.b16 %v999, %v995
    %v1308 = vpack.c.b16 %v1000, %v996
    %v1309 = vpack.c.b16 %v1001, %v997
    %v1310 = vpack.c.b16 %v1006, %v1002
    %v1311 = vpack.c.b16 %v1007, %v1003
    %v1312 = vpack.c.b16 %v1008, %v1004
    %v1313 = vpack.c.b16 %v1009, %v1005
    %v1314 = vpack.c.b16 %v1014, %v1010
    %v1315 = vpack.c.b16 %v1015, %v1011
    %v1316 = vpack.c.b16 %v1016, %v1012
    %v1317 = vpack.c.b16 %v1017, %v1013
    %v1318 = vpack.c.b16 %v1022, %v1018
    %v1319 = vpack.c.b16 %v1023, %v1019
    %v1320 = vpack.c.b16 %v1024, %v1020
    %v1321 = vpack.c.b16 %v1025, %v1021
    %v1322 = vpack.c.b16 %v1030, %v1026
    %v1323 = vpack.c.b16 %v1031, %v1027
    %v1324 = vpack.c.b16 %v1032, %v1028
    %v1325 = vpack.c.b16 %v1033, %v1029
    %v1326 = vpack.c.b16 %v1038, %v1034
    %v1327 = vpack.c.b16 %v1039, %v1035
    %v1328 = vpack.c.b16 %v1040, %v1036
    %v1329 = vpack.c.b16 %v1041, %v1037
    %v1330 = vpack.c.b16 %v1046, %v1042
    %v1331 = vpack.c.b16 %v1047, %v1043
    %v1332 = vpack.c.b16 %v1048, %v1044
    %v1333 = vpack.c.b16 %v1049, %v1045
    %v1334 = vpack.c.b16 %v1054, %v1050
    %v1335 = vpack.c.b16 %v1055, %v1051
    %v1336 = vpack.c.b16 %v1056, %v1052
    %v1337 = vpack.c.b16 %v1057, %v1053
    %v1338 = vpack.c.b16 %v1062, %v1058
    %v1339 = vpack.c.b16 %v1063, %v1059
    %v1340 = vpack.c.b16 %v1064, %v1060
    %v1341 = vpack.c.b16 %v1065, %v1061
    %v1342 = vpack.c.b16 %v1070, %v1066
    %v1343 = vpack.c.b16 %v1071, %v1067
    %v1344 = vpack.c.b16 %v1072, %v1068
    %v1345 = vpack.c.b16 %v1073, %v1069
    %v1346 = vpack.c.b16 %v1078, %v1074
    %v1347 = vpack.c.b16 %v1079, %v1075
    %v1348 = vpack.c.b16 %v1080, %v1076
    %v1349 = vpack.c.b16 %v1081, %v1077
    %v1350 = vpack.c.b16 %v1086, %v1082
    %v1351 = vpack.c.b16 %v1087, %v1083
    %v1352 = vpack.c.b16 %v1088, %v1084
    %v1353 = vpack.c.b16 %v1089, %v1085
    %v1354 = vpack.c.b16 %v1094, %v1090
    %v1355 = vpack.c.b16 %v1095, %v1091
    %v1356 = vpack.c.b16 %v1096, %v1092
    %v1357 = vpack.c.b16 %v1097, %v1093
    %v1358 = vpack.c.b16 %v1102, %v1098
    %v1359 = vpack.c.b16 %v1103, %v1099
    %v1360 = vpack.c.b16 %v1104, %v1100
    %v1361 = vpack.c.b16 %v1105, %v1101
    %1618 = vmatprep.subr.bf16.mxu0 %v1107
    %1619 = vmatpush1.bf16.msra.mxu0 %v1106
    %1620 = vmatprep.subr.bf16.mxu0 %v1111
    %1621 = vmatpush1.bf16.msra.mxu0 %v1110
    %1622 = vmatprep.subr.bf16.mxu0 %v1115
    %1623 = vmatpush1.bf16.msra.mxu0 %v1114
    %1624 = vmatprep.subr.bf16.mxu0 %v1119
    %1625 = vmatpush1.bf16.msra.mxu0 %v1118
    %1626 = vmatprep.subr.bf16.mxu0 %v1123
    %1627 = vmatpush1.bf16.msra.mxu0 %v1122
    %1628 = vmatprep.subr.bf16.mxu0 %v1127
    %1629 = vmatpush1.bf16.msra.mxu0 %v1126
    %1630 = vmatprep.subr.bf16.mxu0 %v1131
    %1631 = vmatpush1.bf16.msra.mxu0 %v1130
    %1632 = vmatprep.subr.bf16.mxu0 %v1135
    %1633 = vmatpush1.bf16.msra.mxu0 %v1134
    %1634 = vmatprep.subr.bf16.mxu0 %v1139
    %1635 = vmatpush1.bf16.msra.mxu0 %v1138
    %1636 = vmatprep.subr.bf16.mxu0 %v1143
    %1637 = vmatpush1.bf16.msra.mxu0 %v1142
    %1638 = vmatprep.subr.bf16.mxu0 %v1147
    %1639 = vmatpush1.bf16.msra.mxu0 %v1146
    %1640 = vmatprep.subr.bf16.mxu0 %v1151
    %1641 = vmatpush1.bf16.msra.mxu0 %v1150
    %1642 = vmatprep.subr.bf16.mxu0 %v1155
    %1643 = vmatpush1.bf16.msra.mxu0 %v1154
    %1644 = vmatprep.subr.bf16.mxu0 %v1159
    %1645 = vmatpush1.bf16.msra.mxu0 %v1158
    %1646 = vmatprep.subr.bf16.mxu0 %v1163
    %1647 = vmatpush1.bf16.msra.mxu0 %v1162
    %1648 = vmatprep.subr.bf16.mxu0 %v1167
    %1649 = vmatpush1.bf16.msra.mxu0 %v1166
    %1650 = vmatprep.mubr.bf16.mxu0 %v323
    %1651 = vmatmul.mubr.bf16.gmra.mrb[0].mxu0 %v322
    %v1652 = vpop.f32.mrb[0].mxu0
    %v1653 = vadd.f32 %v293, %v1652
    %v1654 = vpop.f32.mrb[0].mxu0
    %v1655 = vadd.f32 %v297, %v1654
    %v1656 = vpop.f32.mrb[0].mxu0
    %v1657 = vpop.f32.mrb[0].mxu0
    %1658 = vdwg.mxu0
    %1659 = vmatprep.subr.bf16.mxu0 %v1171
    %1660 = vmatpush1.bf16.msra.mxu0 %v1170
    %1661 = vmatprep.subr.bf16.mxu0 %v1175
    %1662 = vmatpush1.bf16.msra.mxu0 %v1174
    %1663 = vmatprep.subr.bf16.mxu0 %v1179
    %1664 = vmatpush1.bf16.msra.mxu0 %v1178
    %1665 = vmatprep.subr.bf16.mxu0 %v1183
    %1666 = vmatpush1.bf16.msra.mxu0 %v1182
    %1667 = vmatprep.subr.bf16.mxu0 %v1187
    %1668 = vmatpush1.bf16.msra.mxu0 %v1186
    %1669 = vmatprep.subr.bf16.mxu0 %v1191
    %1670 = vmatpush1.bf16.msra.mxu0 %v1190
    %1671 = vmatprep.subr.bf16.mxu0 %v1195
    %1672 = vmatpush1.bf16.msra.mxu0 %v1194
    %1673 = vmatprep.subr.bf16.mxu0 %v1199
    %1674 = vmatpush1.bf16.msra.mxu0 %v1198
    %1675 = vmatprep.subr.bf16.mxu0 %v1203
    %1676 = vmatpush1.bf16.msra.mxu0 %v1202
    %1677 = vmatprep.subr.bf16.mxu0 %v1207
    %1678 = vmatpush1.bf16.msra.mxu0 %v1206
    %1679 = vmatprep.subr.bf16.mxu0 %v1211
    %1680 = vmatpush1.bf16.msra.mxu0 %v1210
    %1681 = vmatprep.subr.bf16.mxu0 %v1215
    %1682 = vmatpush1.bf16.msra.mxu0 %v1214
    %1683 = vmatprep.subr.bf16.mxu0 %v1219
    %1684 = vmatpush1.bf16.msra.mxu0 %v1218
    %1685 = vmatprep.subr.bf16.mxu0 %v1223
    %1686 = vmatpush1.bf16.msra.mxu0 %v1222
    %1687 = vmatprep.subr.bf16.mxu0 %v1227
    %1688 = vmatpush1.bf16.msra.mxu0 %v1226
    %1689 = vmatprep.subr.bf16.mxu0 %v1231
    %1690 = vmatpush1.bf16.msra.mxu0 %v1230
    %1691 = vmatprep.mubr.bf16.mxu0 %v325
    %1692 = vmatmul.mubr.bf16.gmra.mrb[0].mxu0 %v324
    %v1693 = vpop.f32.mrb[0].mxu0
    %v1694 = vadd.f32 %v1653, %v1693
    %v1695 = vpop.f32.mrb[0].mxu0
    %v1696 = vadd.f32 %v1655, %v1695
    %v1697 = vpop.f32.mrb[0].mxu0
    %v1698 = vpop.f32.mrb[0].mxu0
    %1699 = vdwg.mxu0
    %1700 = vmatprep.subr.bf16.mxu0 %v1235
    %1701 = vmatpush1.bf16.msra.mxu0 %v1234
    %1702 = vmatprep.subr.bf16.mxu0 %v1239
    %1703 = vmatpush1.bf16.msra.mxu0 %v1238
    %1704 = vmatprep.subr.bf16.mxu0 %v1243
    %1705 = vmatpush1.bf16.msra.mxu0 %v1242
    %1706 = vmatprep.subr.bf16.mxu0 %v1247
    %1707 = vmatpush1.bf16.msra.mxu0 %v1246
    %1708 = vmatprep.subr.bf16.mxu0 %v1251
    %1709 = vmatpush1.bf16.msra.mxu0 %v1250
    %1710 = vmatprep.subr.bf16.mxu0 %v1255
    %1711 = vmatpush1.bf16.msra.mxu0 %v1254
    %1712 = vmatprep.subr.bf16.mxu0 %v1259
    %1713 = vmatpush1.bf16.msra.mxu0 %v1258
    %1714 = vmatprep.subr.bf16.mxu0 %v1263
    %1715 = vmatpush1.bf16.msra.mxu0 %v1262
    %1716 = vmatprep.subr.bf16.mxu0 %v1267
    %1717 = vmatpush1.bf16.msra.mxu0 %v1266
    %1718 = vmatprep.subr.bf16.mxu0 %v1271
    %1719 = vmatpush1.bf16.msra.mxu0 %v1270
    %1720 = vmatprep.subr.bf16.mxu0 %v1275
    %1721 = vmatpush1.bf16.msra.mxu0 %v1274
    %1722 = vmatprep.subr.bf16.mxu0 %v1279
    %1723 = vmatpush1.bf16.msra.mxu0 %v1278
    %1724 = vmatprep.subr.bf16.mxu0 %v1283
    %1725 = vmatpush1.bf16.msra.mxu0 %v1282
    %1726 = vmatprep.subr.bf16.mxu0 %v1287
    %1727 = vmatpush1.bf16.msra.mxu0 %v1286
    %1728 = vmatprep.subr.bf16.mxu0 %v1291
    %1729 = vmatpush1.bf16.msra.mxu0 %v1290
    %1730 = vmatprep.subr.bf16.mxu0 %v1295
    %1731 = vmatpush1.bf16.msra.mxu0 %v1294
    %1732 = vmatprep.mubr.bf16.mxu0 %v327
    %1733 = vmatmul.mubr.bf16.gmra.mrb[0].mxu0 %v326
    %v1734 = vpop.f32.mrb[0].mxu0
    %v1735 = vadd.f32 %v1694, %v1734
    %v1736 = vpop.f32.mrb[0].mxu0
    %v1737 = vadd.f32 %v1696, %v1736
    %v1738 = vpop.f32.mrb[0].mxu0
    %v1739 = vpop.f32.mrb[0].mxu0
    %1740 = vdwg.mxu0
    %1741 = vmatprep.subr.bf16.mxu0 %v1299
    %1742 = vmatpush1.bf16.msra.mxu0 %v1298
    %1743 = vmatprep.subr.bf16.mxu0 %v1303
    %1744 = vmatpush1.bf16.msra.mxu0 %v1302
    %1745 = vmatprep.subr.bf16.mxu0 %v1307
    %1746 = vmatpush1.bf16.msra.mxu0 %v1306
    %1747 = vmatprep.subr.bf16.mxu0 %v1311
    %1748 = vmatpush1.bf16.msra.mxu0 %v1310
    %1749 = vmatprep.subr.bf16.mxu0 %v1315
    %1750 = vmatpush1.bf16.msra.mxu0 %v1314
    %1751 = vmatprep.subr.bf16.mxu0 %v1319
    %1752 = vmatpush1.bf16.msra.mxu0 %v1318
    %1753 = vmatprep.subr.bf16.mxu0 %v1323
    %1754 = vmatpush1.bf16.msra.mxu0 %v1322
    %1755 = vmatprep.subr.bf16.mxu0 %v1327
    %1756 = vmatpush1.bf16.msra.mxu0 %v1326
    %1757 = vmatprep.subr.bf16.mxu0 %v1331
    %1758 = vmatpush1.bf16.msra.mxu0 %v1330
    %1759 = vmatprep.subr.bf16.mxu0 %v1335
    %1760 = vmatpush1.bf16.msra.mxu0 %v1334
    %1761 = vmatprep.subr.bf16.mxu0 %v1339
    %1762 = vmatpush1.bf16.msra.mxu0 %v1338
    %1763 = vmatprep.subr.bf16.mxu0 %v1343
    %1764 = vmatpush1.bf16.msra.mxu0 %v1342
    %1765 = vmatprep.subr.bf16.mxu0 %v1347
    %1766 = vmatpush1.bf16.msra.mxu0 %v1346
    %1767 = vmatprep.subr.bf16.mxu0 %v1351
    %1768 = vmatpush1.bf16.msra.mxu0 %v1350
    %1769 = vmatprep.subr.bf16.mxu0 %v1355
    %1770 = vmatpush1.bf16.msra.mxu0 %v1354
    %1771 = vmatprep.subr.bf16.mxu0 %v1359
    %1772 = vmatpush1.bf16.msra.mxu0 %v1358
    %1773 = vmatprep.mubr.bf16.mxu0 %v329
    %1774 = vmatmul.mubr.bf16.gmra.mrb[0].mxu0 %v328
    %v1775 = vpop.f32.mrb[0].mxu0
    %v1776 = vadd.f32 %v1735, %v1775
    %v1777 = vpop.f32.mrb[0].mxu0
    %v1778 = vadd.f32 %v1737, %v1777
    %v1779 = vpop.f32.mrb[0].mxu0
    %v1780 = vpop.f32.mrb[0].mxu0
    %1781 = vdwg.mxu0
    %1782 = vmatprep.subr.bf16.mxu0 %v1109
    %1783 = vmatpush1.bf16.msra.mxu0 %v1108
    %1784 = vmatprep.subr.bf16.mxu0 %v1113
    %1785 = vmatpush1.bf16.msra.mxu0 %v1112
    %1786 = vmatprep.subr.bf16.mxu0 %v1117
    %1787 = vmatpush1.bf16.msra.mxu0 %v1116
    %1788 = vmatprep.subr.bf16.mxu0 %v1121
    %1789 = vmatpush1.bf16.msra.mxu0 %v1120
    %1790 = vmatprep.subr.bf16.mxu0 %v1125
    %1791 = vmatpush1.bf16.msra.mxu0 %v1124
    %1792 = vmatprep.subr.bf16.mxu0 %v1129
    %1793 = vmatpush1.bf16.msra.mxu0 %v1128
    %1794 = vmatprep.subr.bf16.mxu0 %v1133
    %1795 = vmatpush1.bf16.msra.mxu0 %v1132
    %1796 = vmatprep.subr.bf16.mxu0 %v1137
    %1797 = vmatpush1.bf16.msra.mxu0 %v1136
    %1798 = vmatprep.subr.bf16.mxu0 %v1141
    %1799 = vmatpush1.bf16.msra.mxu0 %v1140
    %1800 = vmatprep.subr.bf16.mxu0 %v1145
    %1801 = vmatpush1.bf16.msra.mxu0 %v1144
    %1802 = vmatprep.subr.bf16.mxu0 %v1149
    %1803 = vmatpush1.bf16.msra.mxu0 %v1148
    %1804 = vmatprep.subr.bf16.mxu0 %v1153
    %1805 = vmatpush1.bf16.msra.mxu0 %v1152
    %1806 = vmatprep.subr.bf16.mxu0 %v1157
    %1807 = vmatpush1.bf16.msra.mxu0 %v1156
    %1808 = vmatprep.subr.bf16.mxu0 %v1161
    %1809 = vmatpush1.bf16.msra.mxu0 %v1160
    %1810 = vmatprep.subr.bf16.mxu0 %v1165
    %1811 = vmatpush1.bf16.msra.mxu0 %v1164
    %1812 = vmatprep.subr.bf16.mxu0 %v1169
    %1813 = vmatpush1.bf16.msra.mxu0 %v1168
    %1814 = vmatprep.mubr.bf16.mxu0 %v323
    %1815 = vmatmul.mubr.bf16.gmra.mrb[0].mxu0 %v322
    %v1816 = vpop.f32.mrb[0].mxu0
    %v1817 = vadd.f32 %v301, %v1816
    %v1818 = vpop.f32.mrb[0].mxu0
    %v1819 = vadd.f32 %v305, %v1818
    %v1820 = vpop.f32.mrb[0].mxu0
    %v1821 = vpop.f32.mrb[0].mxu0
    %1822 = vdwg.mxu0
    %1823 = vmatprep.subr.bf16.mxu0 %v1173
    %1824 = vmatpush1.bf16.msra.mxu0 %v1172
    %1825 = vmatprep.subr.bf16.mxu0 %v1177
    %1826 = vmatpush1.bf16.msra.mxu0 %v1176
    %1827 = vmatprep.subr.bf16.mxu0 %v1181
    %1828 = vmatpush1.bf16.msra.mxu0 %v1180
    %1829 = vmatprep.subr.bf16.mxu0 %v1185
    %1830 = vmatpush1.bf16.msra.mxu0 %v1184
    %1831 = vmatprep.subr.bf16.mxu0 %v1189
    %1832 = vmatpush1.bf16.msra.mxu0 %v1188
    %1833 = vmatprep.subr.bf16.mxu0 %v1193
    %1834 = vmatpush1.bf16.msra.mxu0 %v1192
    %1835 = vmatprep.subr.bf16.mxu0 %v1197
    %1836 = vmatpush1.bf16.msra.mxu0 %v1196
    %1837 = vmatprep.subr.bf16.mxu0 %v1201
    %1838 = vmatpush1.bf16.msra.mxu0 %v1200
    %1839 = vmatprep.subr.bf16.mxu0 %v1205
    %1840 = vmatpush1.bf16.msra.mxu0 %v1204
    %1841 = vmatprep.subr.bf16.mxu0 %v1209
    %1842 = vmatpush1.bf16.msra.mxu0 %v1208
    %1843 = vmatprep.subr.bf16.mxu0 %v1213
    %1844 = vmatpush1.bf16.msra.mxu0 %v1212
    %1845 = vmatprep.subr.bf16.mxu0 %v1217
    %1846 = vmatpush1.bf16.msra.mxu0 %v1216
    %1847 = vmatprep.subr.bf16.mxu0 %v1221
    %1848 = vmatpush1.bf16.msra.mxu0 %v1220
    %1849 = vmatprep.subr.bf16.mxu0 %v1225
    %1850 = vmatpush1.bf16.msra.mxu0 %v1224
    %1851 = vmatprep.subr.bf16.mxu0 %v1229
    %1852 = vmatpush1.bf16.msra.mxu0 %v1228
    %1853 = vmatprep.subr.bf16.mxu0 %v1233
    %1854 = vmatpush1.bf16.msra.mxu0 %v1232
    %1855 = vmatprep.mubr.bf16.mxu0 %v325
    %1856 = vmatmul.mubr.bf16.gmra.mrb[0].mxu0 %v324
    %v1857 = vpop.f32.mrb[0].mxu0
    %v1858 = vadd.f32 %v1817, %v1857
    %v1859 = vpop.f32.mrb[0].mxu0
    %v1860 = vadd.f32 %v1819, %v1859
    %v1861 = vpop.f32.mrb[0].mxu0
    %v1862 = vpop.f32.mrb[0].mxu0
    %1863 = vdwg.mxu0
    %1864 = vmatprep.subr.bf16.mxu0 %v1237
    %1865 = vmatpush1.bf16.msra.mxu0 %v1236
    %1866 = vmatprep.subr.bf16.mxu0 %v1241
    %1867 = vmatpush1.bf16.msra.mxu0 %v1240
    %1868 = vmatprep.subr.bf16.mxu0 %v1245
    %1869 = vmatpush1.bf16.msra.mxu0 %v1244
    %1870 = vmatprep.subr.bf16.mxu0 %v1249
    %1871 = vmatpush1.bf16.msra.mxu0 %v1248
    %1872 = vmatprep.subr.bf16.mxu0 %v1253
    %1873 = vmatpush1.bf16.msra.mxu0 %v1252
    %1874 = vmatprep.subr.bf16.mxu0 %v1257
    %1875 = vmatpush1.bf16.msra.mxu0 %v1256
    %1876 = vmatprep.subr.bf16.mxu0 %v1261
    %1877 = vmatpush1.bf16.msra.mxu0 %v1260
    %1878 = vmatprep.subr.bf16.mxu0 %v1265
    %1879 = vmatpush1.bf16.msra.mxu0 %v1264
    %1880 = vmatprep.subr.bf16.mxu0 %v1269
    %1881 = vmatpush1.bf16.msra.mxu0 %v1268
    %1882 = vmatprep.subr.bf16.mxu0 %v1273
    %1883 = vmatpush1.bf16.msra.mxu0 %v1272
    %1884 = vmatprep.subr.bf16.mxu0 %v1277
    %1885 = vmatpush1.bf16.msra.mxu0 %v1276
    %1886 = vmatprep.subr.bf16.mxu0 %v1281
    %1887 = vmatpush1.bf16.msra.mxu0 %v1280
    %1888 = vmatprep.subr.bf16.mxu0 %v1285
    %1889 = vmatpush1.bf16.msra.mxu0 %v1284
    %1890 = vmatprep.subr.bf16.mxu0 %v1289
    %1891 = vmatpush1.bf16.msra.mxu0 %v1288
    %1892 = vmatprep.subr.bf16.mxu0 %v1293
    %1893 = vmatpush1.bf16.msra.mxu0 %v1292
    %1894 = vmatprep.subr.bf16.mxu0 %v1297
    %1895 = vmatpush1.bf16.msra.mxu0 %v1296
    %1896 = vmatprep.mubr.bf16.mxu0 %v327
    %1897 = vmatmul.mubr.bf16.gmra.mrb[0].mxu0 %v326
    %v1898 = vpop.f32.mrb[0].mxu0
    %v1899 = vadd.f32 %v1858, %v1898
    %v1900 = vpop.f32.mrb[0].mxu0
    %v1901 = vadd.f32 %v1860, %v1900
    %v1902 = vpop.f32.mrb[0].mxu0
    %v1903 = vpop.f32.mrb[0].mxu0
    %1904 = vdwg.mxu0
    %1905 = vmatprep.subr.bf16.mxu0 %v1301
    %1906 = vmatpush1.bf16.msra.mxu0 %v1300
    %1907 = vmatprep.subr.bf16.mxu0 %v1305
    %1908 = vmatpush1.bf16.msra.mxu0 %v1304
    %1909 = vmatprep.subr.bf16.mxu0 %v1309
    %1910 = vmatpush1.bf16.msra.mxu0 %v1308
    %1911 = vmatprep.subr.bf16.mxu0 %v1313
    %1912 = vmatpush1.bf16.msra.mxu0 %v1312
    %1913 = vmatprep.subr.bf16.mxu0 %v1317
    %1914 = vmatpush1.bf16.msra.mxu0 %v1316
    %1915 = vmatprep.subr.bf16.mxu0 %v1321
    %1916 = vmatpush1.bf16.msra.mxu0 %v1320
    %1917 = vmatprep.subr.bf16.mxu0 %v1325
    %1918 = vmatpush1.bf16.msra.mxu0 %v1324
    %1919 = vmatprep.subr.bf16.mxu0 %v1329
    %1920 = vmatpush1.bf16.msra.mxu0 %v1328
    %1921 = vmatprep.subr.bf16.mxu0 %v1333
    %1922 = vmatpush1.bf16.msra.mxu0 %v1332
    %1923 = vmatprep.subr.bf16.mxu0 %v1337
    %1924 = vmatpush1.bf16.msra.mxu0 %v1336
    %1925 = vmatprep.subr.bf16.mxu0 %v1341
    %1926 = vmatpush1.bf16.msra.mxu0 %v1340
    %1927 = vmatprep.subr.bf16.mxu0 %v1345
    %1928 = vmatpush1.bf16.msra.mxu0 %v1344
    %1929 = vmatprep.subr.bf16.mxu0 %v1349
    %1930 = vmatpush1.bf16.msra.mxu0 %v1348
    %1931 = vmatprep.subr.bf16.mxu0 %v1353
    %1932 = vmatpush1.bf16.msra.mxu0 %v1352
    %1933 = vmatprep.subr.bf16.mxu0 %v1357
    %1934 = vmatpush1.bf16.msra.mxu0 %v1356
    %1935 = vmatprep.subr.bf16.mxu0 %v1361
    %1936 = vmatpush1.bf16.msra.mxu0 %v1360
    %1937 = vmatprep.mubr.bf16.mxu0 %v329
    %1938 = vmatmul.mubr.bf16.gmra.mrb[0].mxu0 %v328
    %v1939 = vpop.f32.mrb[0].mxu0
    %v1940 = vadd.f32 %v1899, %v1939
    %v1941 = vpop.f32.mrb[0].mxu0
    %v1942 = vadd.f32 %v1901, %v1941
    %v1943 = vpop.f32.mrb[0].mxu0
    %v1944 = vpop.f32.mrb[0].mxu0
    %1945 = vdwg.mxu0
    %v1946 = vmax.f32 %v1776, 0.0
    %v1947 = vmax.f32 %v1778, 0.0
    %v1948 = vmax.f32 %v1940, 0.0
    %v1949 = vmax.f32 %v1942, 0.0
    %1950 = vst [vmem:[%s3] sm:$0xff] %v1946
    %1951 = vst [vmem:[%s3 + $0x8] sm:$0xff] %v1947
    %1952 = vst [vmem:[%s3 + $0x10] sm:$0xff] %v1948
    %1953 = vst [vmem:[%s3 + $0x18] sm:$0xff] %v1949
    // Predicated region
    $region18: #{decoder_forward.6} parent=1 // pred_check
      _
    $region19: #{decoder_forward.6} parent=1 // pred_check_branch
      %1955 = sbr.rel (0) target = $region21
    $region20: #{decoder_forward.6} parent=1 // pred_region
      _
    $region21: #{decoder_forward.6} parent=1 // pred_fallthru
      _
    // Predicated region
    $region22: #{decoder_forward.6} parent=1 // pred_check
      _
    $region23: #{decoder_forward.6} parent=1 // pred_check_branch
      %1957 = sbr.rel (0) target = $region25
    $region24: #{decoder_forward.6} parent=1 // pred_region
      _
    $region25: #{decoder_forward.6} parent=1 // pred_fallthru
      _
    %1958 = vsyncpa [#allocation3], 1

// kernel: decoder_forward.8
$region0: #{decoder_forward.8}
  #allocation0 [shape = 'u32[]', space=smem, size = 0x4, offset = 0x4, fixed_abs, tag = 'smem constant byte address 0x4 - core index']
  #allocation1 [shape = 'u32[144,128]{1,0:T(1,128)}', space=vmem, size = 0x12000, scoped, tag = 'internal scratch']
  %s0 = inlined_call_operand.vmem [shape: bf16[128,256], index: 0, kind: input, shape index: {}]
  %s1 = inlined_call_operand.vmem [shape: bf16[256,128], index: 1, kind: input, shape index: {}]
  %s2 = inlined_call_operand.vmem [shape: f32[1,128], index: 2, kind: input, shape index: {}]
  %s3 = inlined_call_operand.vmem [shape: f32[128,128], index: 3, kind: output, shape index: {}]
  %s4 = sld [smem:[#allocation0]]
  $region22: #{decoder_forward.8} parent=0
    _
  %s6 = ssub.s32 1, %s4
  %s7 = scalar_select 0, %s6, %s4
  // Predicated region
  $region2: #{decoder_forward.8} parent=0 // pred_check
    _
  $region3: #{decoder_forward.8} parent=0 // pred_check_branch
    %9 = sbr.rel (0) target = $region5
  $region4: #{decoder_forward.8} parent=0 // pred_region
    _
  $region5: #{decoder_forward.8} parent=0 // pred_fallthru
    _
  // Predicated region
  $region6: #{decoder_forward.8} parent=0 // pred_check
    _
  $region7: #{decoder_forward.8} parent=0 // pred_check_branch
    %11 = sbr.rel (0) target = $region9
  $region8: #{decoder_forward.8} parent=0 // pred_region
    _
  $region9: #{decoder_forward.8} parent=0 // pred_fallthru
    _
  // Predicated region
  $region10: #{decoder_forward.8} parent=0 // pred_check
    _
  $region11: #{decoder_forward.8} parent=0 // pred_check_branch
    %13 = sbr.rel (0) target = $region13
  $region12: #{decoder_forward.8} parent=0 // pred_region
    _
  $region13: #{decoder_forward.8} parent=0 // pred_fallthru
    _
  %v15 = vld [vmem:[%s0] sm:$0xff]
  %v16 = vld [vmem:[%s0 + $0x8] sm:$0xff]
  %v17 = vld [vmem:[%s0 + $0x10] sm:$0xff]
  %v18 = vld [vmem:[%s0 + $0x18] sm:$0xff]
  %v19 = vld [vmem:[%s0 + $0x20] sm:$0xff]
  %v20 = vld [vmem:[%s0 + $0x28] sm:$0xff]
  %v21 = vld [vmem:[%s0 + $0x30] sm:$0xff]
  %v22 = vld [vmem:[%s0 + $0x38] sm:$0xff]
  %v23 = vld [vmem:[%s0 + $0x40] sm:$0xff]
  %v24 = vld [vmem:[%s0 + $0x48] sm:$0xff]
  %v25 = vld [vmem:[%s0 + $0x50] sm:$0xff]
  %v26 = vld [vmem:[%s0 + $0x58] sm:$0xff]
  %v27 = vld [vmem:[%s0 + $0x60] sm:$0xff]
  %v28 = vld [vmem:[%s0 + $0x68] sm:$0xff]
  %v29 = vld [vmem:[%s0 + $0x70] sm:$0xff]
  %v30 = vld [vmem:[%s0 + $0x78] sm:$0xff]
  %v31 = vld [vmem:[%s1] sm:$0xf]
  %v32 = vld [vmem:[%s1 + $0x4] sm:$0xf]
  %v33 = vld [vmem:[%s1 + $0x8] sm:$0xf]
  %v34 = vld [vmem:[%s1 + $0xc] sm:$0xf]
  %v35 = vld [vmem:[%s1 + $0x10] sm:$0xf]
  %v36 = vld [vmem:[%s1 + $0x14] sm:$0xf]
  %v37 = vld [vmem:[%s1 + $0x18] sm:$0xf]
  %v38 = vld [vmem:[%s1 + $0x1c] sm:$0xf]
  %v39 = vld [vmem:[%s1 + $0x20] sm:$0xf]
  %v40 = vld [vmem:[%s1 + $0x24] sm:$0xf]
  %v41 = vld [vmem:[%s1 + $0x28] sm:$0xf]
  %v42 = vld [vmem:[%s1 + $0x2c] sm:$0xf]
  %v43 = vld [vmem:[%s1 + $0x30] sm:$0xf]
  %v44 = vld [vmem:[%s1 + $0x34] sm:$0xf]
  %v45 = vld [vmem:[%s1 + $0x38] sm:$0xf]
  %v46 = vld [vmem:[%s1 + $0x3c] sm:$0xf]
  %v47 = vld [vmem:[%s1 + $0x40] sm:$0xf]
  %v48 = vld [vmem:[%s1 + $0x44] sm:$0xf]
  %v49 = vld [vmem:[%s1 + $0x48] sm:$0xf]
  %v50 = vld [vmem:[%s1 + $0x4c] sm:$0xf]
  %v51 = vld [vmem:[%s1 + $0x50] sm:$0xf]
  %v52 = vld [vmem:[%s1 + $0x54] sm:$0xf]
  %v53 = vld [vmem:[%s1 + $0x58] sm:$0xf]
  %v54 = vld [vmem:[%s1 + $0x5c] sm:$0xf]
  %v55 = vld [vmem:[%s1 + $0x60] sm:$0xf]
  %v56 = vld [vmem:[%s1 + $0x64] sm:$0xf]
  %v57 = vld [vmem:[%s1 + $0x68] sm:$0xf]
  %v58 = vld [vmem:[%s1 + $0x6c] sm:$0xf]
  %v59 = vld [vmem:[%s1 + $0x70] sm:$0xf]
  %v60 = vld [vmem:[%s1 + $0x74] sm:$0xf]
  %v61 = vld [vmem:[%s1 + $0x78] sm:$0xf]
  %v62 = vld [vmem:[%s1 + $0x7c] sm:$0xf]
  %v63 = vld [vmem:[%s2] sm:$0x1]
  %v65 = vlaneseq
  %v66 = vshrl.u32 %v65, 7
  %v67 = vsub.s32 0, %v66
  %v68 = vrot.slane %v63, %v67
  %v86 = vunpack.c.l.b16 %v15
  %v87 = vunpack.c.h.b16 %v15
  %v88 = vunpack.c.l.b16 %v16
  %v89 = vunpack.c.h.b16 %v16
  %v90 = vunpack.c.l.b16 %v17
  %v91 = vunpack.c.h.b16 %v17
  %v92 = vunpack.c.l.b16 %v18
  %v93 = vunpack.c.h.b16 %v18
  %v94 = vunpack.c.l.b16 %v19
  %v95 = vunpack.c.h.b16 %v19
  %v96 = vunpack.c.l.b16 %v20
  %v97 = vunpack.c.h.b16 %v20
  %v98 = vunpack.c.l.b16 %v21
  %v99 = vunpack.c.h.b16 %v21
  %v100 = vunpack.c.l.b16 %v22
  %v101 = vunpack.c.h.b16 %v22
  %v102 = vunpack.c.l.b16 %v23
  %v103 = vunpack.c.h.b16 %v23
  %v104 = vunpack.c.l.b16 %v24
  %v105 = vunpack.c.h.b16 %v24
  %v106 = vunpack.c.l.b16 %v25
  %v107 = vunpack.c.h.b16 %v25
  %v108 = vunpack.c.l.b16 %v26
  %v109 = vunpack.c.h.b16 %v26
  %v110 = vunpack.c.l.b16 %v27
  %v111 = vunpack.c.h.b16 %v27
  %v112 = vunpack.c.l.b16 %v28
  %v113 = vunpack.c.h.b16 %v28
  %v114 = vunpack.c.l.b16 %v29
  %v115 = vunpack.c.h.b16 %v29
  %v116 = vunpack.c.l.b16 %v30
  %v117 = vunpack.c.h.b16 %v30
  %v118 = vpack.c.b16 %v88, %v86
  %v119 = vpack.c.b16 %v89, %v87
  %v120 = vpack.c.b16 %v92, %v90
  %v121 = vpack.c.b16 %v93, %v91
  %v122 = vpack.c.b16 %v96, %v94
  %v123 = vpack.c.b16 %v97, %v95
  %v124 = vpack.c.b16 %v100, %v98
  %v125 = vpack.c.b16 %v101, %v99
  %v126 = vpack.c.b16 %v104, %v102
  %v127 = vpack.c.b16 %v105, %v103
  %v128 = vpack.c.b16 %v108, %v106
  %v129 = vpack.c.b16 %v109, %v107
  %v130 = vpack.c.b16 %v112, %v110
  %v131 = vpack.c.b16 %v113, %v111
  %v132 = vpack.c.b16 %v116, %v114
  %v133 = vpack.c.b16 %v117, %v115
  %v182 = vunpack.c.l.b16 %v31
  %v183 = vunpack.c.l.b16 %v32
  %v184 = vunpack.c.l.b16 %v33
  %v185 = vunpack.c.l.b16 %v34
  %v186 = vunpack.c.l.b16 %v35
  %v187 = vunpack.c.l.b16 %v36
  %v188 = vunpack.c.l.b16 %v37
  %v189 = vunpack.c.l.b16 %v38
  %v190 = vunpack.c.l.b16 %v39
  %v191 = vunpack.c.l.b16 %v40
  %v192 = vunpack.c.l.b16 %v41
  %v193 = vunpack.c.l.b16 %v42
  %v194 = vunpack.c.l.b16 %v43
  %v195 = vunpack.c.l.b16 %v44
  %v196 = vunpack.c.l.b16 %v45
  %v197 = vunpack.c.l.b16 %v46
  %v198 = vunpack.c.l.b16 %v47
  %v199 = vunpack.c.l.b16 %v48
  %v200 = vunpack.c.l.b16 %v49
  %v201 = vunpack.c.l.b16 %v50
  %v202 = vunpack.c.l.b16 %v51
  %v203 = vunpack.c.l.b16 %v52
  %v204 = vunpack.c.l.b16 %v53
  %v205 = vunpack.c.l.b16 %v54
  %v206 = vunpack.c.l.b16 %v55
  %v207 = vunpack.c.l.b16 %v56
  %v208 = vunpack.c.l.b16 %v57
  %v209 = vunpack.c.l.b16 %v58
  %v210 = vunpack.c.l.b16 %v59
  %v211 = vunpack.c.l.b16 %v60
  %v212 = vunpack.c.l.b16 %v61
  %v213 = vunpack.c.l.b16 %v62
  %v214 = vpack.c.b16 %v183, %v182
  %v215 = vpack.c.b16 %v185, %v184
  %v216 = vpack.c.b16 %v187, %v186
  %v217 = vpack.c.b16 %v189, %v188
  %v218 = vpack.c.b16 %v191, %v190
  %v219 = vpack.c.b16 %v193, %v192
  %v220 = vpack.c.b16 %v195, %v194
  %v221 = vpack.c.b16 %v197, %v196
  %v222 = vpack.c.b16 %v199, %v198
  %v223 = vpack.c.b16 %v201, %v200
  %v224 = vpack.c.b16 %v203, %v202
  %v225 = vpack.c.b16 %v205, %v204
  %v226 = vpack.c.b16 %v207, %v206
  %v227 = vpack.c.b16 %v209, %v208
  %v228 = vpack.c.b16 %v211, %v210
  %v229 = vpack.c.b16 %v213, %v212
  %246 = vmatprep.subr.bf16.mxu0 0
  %247 = vmatpush1.bf16.msra.mxu0 %v214
  %248 = vmatprep.subr.bf16.mxu0 0
  %249 = vmatpush1.bf16.msra.mxu0 %v215
  %250 = vmatprep.subr.bf16.mxu0 0
  %251 = vmatpush1.bf16.msra.mxu0 %v216
  %252 = vmatprep.subr.bf16.mxu0 0
  %253 = vmatpush1.bf16.msra.mxu0 %v217
  %254 = vmatprep.subr.bf16.mxu0 0
  %255 = vmatpush1.bf16.msra.mxu0 %v218
  %256 = vmatprep.subr.bf16.mxu0 0
  %257 = vmatpush1.bf16.msra.mxu0 %v219
  %258 = vmatprep.subr.bf16.mxu0 0
  %259 = vmatpush1.bf16.msra.mxu0 %v220
  %260 = vmatprep.subr.bf16.mxu0 0
  %261 = vmatpush1.bf16.msra.mxu0 %v221
  %262 = vmatprep.subr.bf16.mxu0 0
  %263 = vmatpush1.bf16.msra.mxu0 %v222
  %264 = vmatprep.subr.bf16.mxu0 0
  %265 = vmatpush1.bf16.msra.mxu0 %v223
  %266 = vmatprep.subr.bf16.mxu0 0
  %267 = vmatpush1.bf16.msra.mxu0 %v224
  %268 = vmatprep.subr.bf16.mxu0 0
  %269 = vmatpush1.bf16.msra.mxu0 %v225
  %270 = vmatprep.subr.bf16.mxu0 0
  %271 = vmatpush1.bf16.msra.mxu0 %v226
  %272 = vmatprep.subr.bf16.mxu0 0
  %273 = vmatpush1.bf16.msra.mxu0 %v227
  %274 = vmatprep.subr.bf16.mxu0 0
  %275 = vmatpush1.bf16.msra.mxu0 %v228
  %276 = vmatprep.subr.bf16.mxu0 0
  %277 = vmatpush1.bf16.msra.mxu0 %v229
  %278 = vmatprep.mubr.bf16.mxu0 %v119
  %279 = vmatmul.mubr.bf16.gmra.mrb[0].mxu0 %v118
  %v280 = vpop.f32.mrb[0].mxu0
  %v281 = vadd.f32 %v68, %v280
  %v282 = vpop.f32.mrb[0].mxu0
  %v283 = vpop.f32.mrb[0].mxu0
  %v284 = vadd.f32 %v68, %v283
  %v285 = vpop.f32.mrb[0].mxu0
  %286 = vmatprep.mubr.bf16.mxu0 %v121
  %287 = vmatmul.mubr.bf16.gmra.mrb[0].mxu0 %v120
  %v288 = vpop.f32.mrb[0].mxu0
  %v289 = vadd.f32 %v68, %v288
  %v290 = vpop.f32.mrb[0].mxu0
  %v291 = vpop.f32.mrb[0].mxu0
  %v292 = vadd.f32 %v68, %v291
  %v293 = vpop.f32.mrb[0].mxu0
  %294 = vmatprep.mubr.bf16.mxu0 %v123
  %295 = vmatmul.mubr.bf16.gmra.mrb[0].mxu0 %v122
  %v296 = vpop.f32.mrb[0].mxu0
  %v297 = vadd.f32 %v68, %v296
  %v298 = vpop.f32.mrb[0].mxu0
  %v299 = vpop.f32.mrb[0].mxu0
  %v300 = vadd.f32 %v68, %v299
  %v301 = vpop.f32.mrb[0].mxu0
  %302 = vmatprep.mubr.bf16.mxu0 %v125
  %303 = vmatmul.mubr.bf16.gmra.mrb[0].mxu0 %v124
  %v304 = vpop.f32.mrb[0].mxu0
  %v305 = vadd.f32 %v68, %v304
  %v306 = vpop.f32.mrb[0].mxu0
  %v307 = vpop.f32.mrb[0].mxu0
  %v308 = vadd.f32 %v68, %v307
  %v309 = vpop.f32.mrb[0].mxu0
  %310 = vmatprep.mubr.bf16.mxu0 %v127
  %311 = vmatmul.mubr.bf16.gmra.mrb[0].mxu0 %v126
  %v312 = vpop.f32.mrb[0].mxu0
  %v313 = vadd.f32 %v68, %v312
  %v314 = vpop.f32.mrb[0].mxu0
  %v315 = vpop.f32.mrb[0].mxu0
  %v316 = vadd.f32 %v68, %v315
  %v317 = vpop.f32.mrb[0].mxu0
  %318 = vmatprep.mubr.bf16.mxu0 %v129
  %319 = vmatmul.mubr.bf16.gmra.mrb[0].mxu0 %v128
  %v320 = vpop.f32.mrb[0].mxu0
  %v321 = vadd.f32 %v68, %v320
  %v322 = vpop.f32.mrb[0].mxu0
  %v323 = vpop.f32.mrb[0].mxu0
  %v324 = vadd.f32 %v68, %v323
  %v325 = vpop.f32.mrb[0].mxu0
  %326 = vmatprep.mubr.bf16.mxu0 %v131
  %327 = vmatmul.mubr.bf16.gmra.mrb[0].mxu0 %v130
  %v328 = vpop.f32.mrb[0].mxu0
  %v329 = vadd.f32 %v68, %v328
  %v330 = vpop.f32.mrb[0].mxu0
  %v331 = vpop.f32.mrb[0].mxu0
  %v332 = vadd.f32 %v68, %v331
  %v333 = vpop.f32.mrb[0].mxu0
  %334 = vmatprep.mubr.bf16.mxu0 %v133
  %335 = vmatmul.mubr.bf16.gmra.mrb[0].mxu0 %v132
  %v336 = vpop.f32.mrb[0].mxu0
  %v337 = vadd.f32 %v68, %v336
  %v338 = vpop.f32.mrb[0].mxu0
  %v339 = vpop.f32.mrb[0].mxu0
  %v340 = vadd.f32 %v68, %v339
  %v341 = vpop.f32.mrb[0].mxu0
  %342 = vdwg.mxu0
  %v343 = vmax.f32 %v281, 0.0
  %v344 = vmax.f32 %v284, 0.0
  %v345 = vmax.f32 %v289, 0.0
  %v346 = vmax.f32 %v292, 0.0
  %v347 = vmax.f32 %v297, 0.0
  %v348 = vmax.f32 %v300, 0.0
  %v349 = vmax.f32 %v305, 0.0
  %v350 = vmax.f32 %v308, 0.0
  %v351 = vmax.f32 %v313, 0.0
  %v352 = vmax.f32 %v316, 0.0
  %v353 = vmax.f32 %v321, 0.0
  %v354 = vmax.f32 %v324, 0.0
  %v355 = vmax.f32 %v329, 0.0
  %v356 = vmax.f32 %v332, 0.0
  %v357 = vmax.f32 %v337, 0.0
  %v358 = vmax.f32 %v340, 0.0
  %359 = vst [vmem:[%s3] sm:$0xff] %v343
  %360 = vst [vmem:[%s3 + $0x8] sm:$0xff] %v344
  %361 = vst [vmem:[%s3 + $0x10] sm:$0xff] %v345
  %362 = vst [vmem:[%s3 + $0x18] sm:$0xff] %v346
  %363 = vst [vmem:[%s3 + $0x20] sm:$0xff] %v347
  %364 = vst [vmem:[%s3 + $0x28] sm:$0xff] %v348
  %365 = vst [vmem:[%s3 + $0x30] sm:$0xff] %v349
  %366 = vst [vmem:[%s3 + $0x38] sm:$0xff] %v350
  %367 = vst [vmem:[%s3 + $0x40] sm:$0xff] %v351
  %368 = vst [vmem:[%s3 + $0x48] sm:$0xff] %v352
  %369 = vst [vmem:[%s3 + $0x50] sm:$0xff] %v353
  %370 = vst [vmem:[%s3 + $0x58] sm:$0xff] %v354
  %371 = vst [vmem:[%s3 + $0x60] sm:$0xff] %v355
  %372 = vst [vmem:[%s3 + $0x68] sm:$0xff] %v356
  %373 = vst [vmem:[%s3 + $0x70] sm:$0xff] %v357
  %374 = vst [vmem:[%s3 + $0x78] sm:$0xff] %v358
  // Predicated region
  $region14: #{decoder_forward.8} parent=0 // pred_check
    _
  $region15: #{decoder_forward.8} parent=0 // pred_check_branch
    %376 = sbr.rel (0) target = $region17
  $region16: #{decoder_forward.8} parent=0 // pred_region
    _
  $region17: #{decoder_forward.8} parent=0 // pred_fallthru
    _
  // Predicated region
  $region18: #{decoder_forward.8} parent=0 // pred_check
    _
  $region19: #{decoder_forward.8} parent=0 // pred_check_branch
    %378 = sbr.rel (0) target = $region21
  $region20: #{decoder_forward.8} parent=0 // pred_region
    _
  $region21: #{decoder_forward.8} parent=0 // pred_fallthru
    _

// kernel: decoder_forward.9
$region0: #{decoder_forward.9}
  #allocation0 [shape = 'u32[]', space=smem, size = 0x4, offset = 0x4, fixed_abs, tag = 'smem constant byte address 0x4 - core index']
  #allocation1 [shape = 'u32[144,128]{1,0:T(1,128)}', space=vmem, size = 0x12000, scoped, tag = 'internal scratch']
  %s0 = inlined_call_operand.vmem [shape: bf16[512,128], index: 0, kind: input, shape index: {}]
  %s1 = inlined_call_operand.vmem [shape: bf16[128,128], index: 1, kind: input, shape index: {}]
  %s2 = inlined_call_operand.vmem [shape: f32[1,128], index: 2, kind: input, shape index: {}]
  %s3 = inlined_call_operand.vmem [shape: f32[512,128], index: 3, kind: output, shape index: {}]
  %s4 = sld [smem:[#allocation0]]
  $region45: #{decoder_forward.9} parent=0
    _
  %s6 = ssub.s32 1, %s4
  %s7 = scalar_select 0, %s6, %s4
  loop: start=0, step=1, limit=4
  $region2: #{decoder_forward.9} parent=0 // loop_pre_header
    _
  $region3: #{decoder_forward.9} parent=0 // loop_header
    %s9 = sphi 0, %s13
    %p10 = scmp.ge.s32.totalorder %s9, 4
    %s19 = sphi 0, %s21
    %s22 = sphi 0, %s19
    %s23 = sphi 0, %s22
    %s39 = sphi 0, %s23
    %s43 = sphi 0, %s43
    %s45 = sphi 0, %s43
    %s46 = sphi 0, %s45
    %s60 = sphi 0, %s46
    %s64 = sphi 0, %s64
    %s66 = sphi 0, %s64
    %s67 = sphi 0, %s66
    %s81 = sphi 0, %s67
    %s87 = sphi 0, %s89
    %s90 = sphi 0, %s87
    %s91 = sphi 0, %s90
    %s107 = sphi 0, %s91
  $region4: #{decoder_forward.9} parent=0 // loop_header_branch
    %12 = sbr.rel (%p10) target = $region8
  $region5: #{decoder_forward.9} parent=0 // loop_body
    %s14 = ssub.s32 %s9, 1
    %s15 = ssub.s32 %s9, 2
    %s16 = sadd.s32 %s9, 1
    %s17 = ssub.s32 %s9, %s16
    %p18 = scmp.eq.s32.totalorder %s17, 0
    %s20 = sadd.s32 %s19, 1
    %s21 = scalar_select %p18, %s19, %s20
    %p24 = pneg %p18
    %p25 = scmp.eq.s32.totalorder %s9, 1
    %p26 = por %p24, %p25
    %p27 = scmp.ne.s32.totalorder %s19, %s22
    %p28 = scmp.eq.s32.totalorder %s9, 0
    %p29 = por %p27, %p28
    %p30 = scmp.ne.s32.totalorder %s19, %s22
    %p31 = scmp.eq.s32.totalorder %s14, 1
    %p32 = por %p30, %p31
    %p33 = scmp.ne.s32.totalorder %s22, %s23
    %p34 = scmp.eq.s32.totalorder %s14, 0
    %p35 = por %p33, %p34
    %p36 = scmp.ne.s32.totalorder %s22, %s23
    %p37 = scmp.eq.s32.totalorder %s15, 1
    %p38 = por %p36, %p37
    %p40 = scmp.ne.s32.totalorder %s23, %s39
    %p41 = scmp.eq.s32.totalorder %s15, 0
    %p42 = por %p40, %p41
    %s44 = sadd.s32 %s43, 1
    %p47 = scmp.eq.s32.totalorder %s9, 1
    %p48 = scmp.ne.s32.totalorder %s43, %s45
    %p49 = scmp.eq.s32.totalorder %s9, 0
    %p50 = por %p48, %p49
    %p51 = scmp.ne.s32.totalorder %s43, %s45
    %p52 = scmp.eq.s32.totalorder %s14, 1
    %p53 = por %p51, %p52
    %p54 = scmp.ne.s32.totalorder %s45, %s46
    %p55 = scmp.eq.s32.totalorder %s14, 0
    %p56 = por %p54, %p55
    %p57 = scmp.ne.s32.totalorder %s45, %s46
    %p58 = scmp.eq.s32.totalorder %s15, 1
    %p59 = por %p57, %p58
    %p61 = scmp.ne.s32.totalorder %s46, %s60
    %p62 = scmp.eq.s32.totalorder %s15, 0
    %p63 = por %p61, %p62
    %s65 = sadd.s32 %s64, 1
    %p68 = scmp.eq.s32.totalorder %s9, 1
    %p69 = scmp.ne.s32.totalorder %s64, %s66
    %p70 = scmp.eq.s32.totalorder %s9, 0
    %p71 = por %p69, %p70
    %p72 = scmp.ne.s32.totalorder %s64, %s66
    %p73 = scmp.eq.s32.totalorder %s14, 1
    %p74 = por %p72, %p73
    %p75 = scmp.ne.s32.totalorder %s66, %s67
    %p76 = scmp.eq.s32.totalorder %s14, 0
    %p77 = por %p75, %p76
    %p78 = scmp.ne.s32.totalorder %s66, %s67
    %p79 = scmp.eq.s32.totalorder %s15, 1
    %p80 = por %p78, %p79
    %p82 = scmp.ne.s32.totalorder %s67, %s81
    %p83 = scmp.eq.s32.totalorder %s15, 0
    %p84 = por %p82, %p83
    %s85 = ssub.s32 %s9, %s16
    %p86 = scmp.eq.s32.totalorder %s85, 0
    %s88 = sadd.s32 %s87, 1
    %s89 = scalar_select %p86, %s87, %s88
    %p92 = pneg %p86
    %p93 = scmp.eq.s32.totalorder %s9, 1
    %p94 = por %p92, %p93
    %p95 = scmp.ne.s32.totalorder %s87, %s90
    %p96 = scmp.eq.s32.totalorder %s9, 0
    %p97 = por %p95, %p96
    %p98 = scmp.ne.s32.totalorder %s87, %s90
    %p99 = scmp.eq.s32.totalorder %s14, 1
    %p100 = por %p98, %p99
    %p101 = scmp.ne.s32.totalorder %s90, %s91
    %p102 = scmp.eq.s32.totalorder %s14, 0
    %p103 = por %p101, %p102
    %p104 = scmp.ne.s32.totalorder %s90, %s91
    %p105 = scmp.eq.s32.totalorder %s15, 1
    %p106 = por %p104, %p105
    %p108 = scmp.ne.s32.totalorder %s91, %s107
    %p109 = scmp.eq.s32.totalorder %s15, 0
    %p110 = por %p108, %p109
    %p111 = scmp.le.s32.totalorder 1, %s9
    %p112 = scmp.lt.s32.totalorder %s9, 3
    %p113 = pnand %p111, %p112
    %p114 = pneg %p113
    // Predicated region
    $region9: #{decoder_forward.9} parent=5 // pred_check
      _
    $region10: #{decoder_forward.9} parent=5 // pred_check_branch
      %116 = sbr.rel (%p113) target = $region12
    $region11: #{decoder_forward.9} parent=5 // pred_region
      %s117 = ssub.s32 %s9, 1
      // Predicated region
      $region13: #{decoder_forward.9} parent=11 // pred_check
        %p118 = pneg %p56
      $region14: #{decoder_forward.9} parent=11 // pred_check_branch
        %120 = sbr.rel (%p118) target = $region16
      $region15: #{decoder_forward.9} parent=11 // pred_region
        _
      $region16: #{decoder_forward.9} parent=11 // pred_fallthru
        _
      // Predicated region
      $region17: #{decoder_forward.9} parent=11 // pred_check
        %p121 = pneg %p77
      $region18: #{decoder_forward.9} parent=11 // pred_check_branch
        %123 = sbr.rel (%p121) target = $region20
      $region19: #{decoder_forward.9} parent=11 // pred_region
        _
      $region20: #{decoder_forward.9} parent=11 // pred_fallthru
        _
    $region12: #{decoder_forward.9} parent=5 // pred_fallthru
      _
    %p124 = scmp.lt.s32.totalorder %s9, 2
    // Predicated region
    $region21: #{decoder_forward.9} parent=5 // pred_check
      %p125 = pneg %p124
    $region22: #{decoder_forward.9} parent=5 // pred_check_branch
      %127 = sbr.rel (%p125) target = $region24
    $region23: #{decoder_forward.9} parent=5 // pred_region
      // Predicated region
      $region25: #{decoder_forward.9} parent=23 // pred_check
        %p128 = pneg %p29
      $region26: #{decoder_forward.9} parent=23 // pred_check_branch
        %130 = sbr.rel (%p128) target = $region28
      $region27: #{decoder_forward.9} parent=23 // pred_region
        %s131 = smul.u32 32, %s9
        %p132 = scmp.lt.s32.totalorder %s131, 63
        %s133 = scalar_select %p132, %s131, 63
        %s134 = smul.addr %s133, 4
        %s135 = scalar_lea.vmem %s0, %s134
        %s136 = smul.u32 32, %s9
      $region28: #{decoder_forward.9} parent=23 // pred_fallthru
        _
    $region24: #{decoder_forward.9} parent=5 // pred_fallthru
      _
    %p137 = scmp.le.s32.totalorder 1, %s9
    %p138 = scmp.lt.s32.totalorder %s9, 3
    %p139 = pnand %p137, %p138
    %p140 = pneg %p139
    // Predicated region
    $region29: #{decoder_forward.9} parent=5 // pred_check
      _
    $region30: #{decoder_forward.9} parent=5 // pred_check_branch
      %142 = sbr.rel (%p139) target = $region32
    $region31: #{decoder_forward.9} parent=5 // pred_region
      %s143 = ssub.s32 %s9, 1
      %s144 = smul.u32 32, %s14
      %p145 = scmp.lt.s32.totalorder %s144, 63
      %s146 = scalar_select %p145, %s144, 63
      %s147 = smul.addr %s146, 4
      %s148 = scalar_lea.vmem %s0, %s147
      %p149 = pneg %p35
      %p150 = pneg %p32
      %p151 = pneg %p56
      %p152 = pneg %p53
      %p153 = pneg %p77
      %p154 = pneg %p74
      %p155 = pneg %p103
      %p156 = pneg %p100
      %s157 = smul.u32 32, %s14
      %p158 = scmp.lt.s32.totalorder %s157, 63
      %s159 = scalar_select %p158, %s157, 63
      %s160 = smul.addr %s159, 8
      %s161 = scalar_lea.vmem %s3, %s160
      %s162 = smul.u32 32, %s14
      %p163 = scmp.lt.s32.totalorder %s162, 63
      %s164 = scalar_select %p163, %s162, 63
      %s165 = smul.addr %s164, 4
      %s166 = scalar_lea.vmem %s0, %s165
      %s167 = smul.u32 32, %s14
      %s168 = smul.u32 32, %s14
      %p169 = scmp.lt.s32.totalorder %s168, 63
      %s170 = scalar_select %p169, %s168, 63
      %s171 = smul.addr %s170, 8
      %s172 = scalar_lea.vmem %s3, %s171
      %s173 = smul.u32 32, %s14
      %v175 = vld [vmem:[%s166] sm:$0xf]
      %v176 = vld [vmem:[%s166 + $0x4] sm:$0xf]
      %v177 = vld [vmem:[%s166 + $0x8] sm:$0xf]
      %v178 = vld [vmem:[%s166 + $0xc] sm:$0xf]
      %v179 = vld [vmem:[%s166 + $0x10] sm:$0xf]
      %v180 = vld [vmem:[%s166 + $0x14] sm:$0xf]
      %v181 = vld [vmem:[%s166 + $0x18] sm:$0xf]
      %v182 = vld [vmem:[%s166 + $0x1c] sm:$0xf]
      %v183 = vld [vmem:[%s166 + $0x20] sm:$0xf]
      %v184 = vld [vmem:[%s166 + $0x24] sm:$0xf]
      %v185 = vld [vmem:[%s166 + $0x28] sm:$0xf]
      %v186 = vld [vmem:[%s166 + $0x2c] sm:$0xf]
      %v187 = vld [vmem:[%s166 + $0x30] sm:$0xf]
      %v188 = vld [vmem:[%s166 + $0x34] sm:$0xf]
      %v189 = vld [vmem:[%s166 + $0x38] sm:$0xf]
      %v190 = vld [vmem:[%s166 + $0x3c] sm:$0xf]
      %v191 = vld [vmem:[%s166 + $0x40] sm:$0xf]
      %v192 = vld [vmem:[%s166 + $0x44] sm:$0xf]
      %v193 = vld [vmem:[%s166 + $0x48] sm:$0xf]
      %v194 = vld [vmem:[%s166 + $0x4c] sm:$0xf]
      %v195 = vld [vmem:[%s166 + $0x50] sm:$0xf]
      %v196 = vld [vmem:[%s166 + $0x54] sm:$0xf]
      %v197 = vld [vmem:[%s166 + $0x58] sm:$0xf]
      %v198 = vld [vmem:[%s166 + $0x5c] sm:$0xf]
      %v199 = vld [vmem:[%s166 + $0x60] sm:$0xf]
      %v200 = vld [vmem:[%s166 + $0x64] sm:$0xf]
      %v201 = vld [vmem:[%s166 + $0x68] sm:$0xf]
      %v202 = vld [vmem:[%s166 + $0x6c] sm:$0xf]
      %v203 = vld [vmem:[%s166 + $0x70] sm:$0xf]
      %v204 = vld [vmem:[%s166 + $0x74] sm:$0xf]
      %v205 = vld [vmem:[%s166 + $0x78] sm:$0xf]
      %v206 = vld [vmem:[%s166 + $0x7c] sm:$0xf]
      %v207 = vld [vmem:[%s1] sm:$0xf]
      %v208 = vld [vmem:[%s1 + $0x4] sm:$0xf]
      %v209 = vld [vmem:[%s1 + $0x8] sm:$0xf]
      %v210 = vld [vmem:[%s1 + $0xc] sm:$0xf]
      %v211 = vld [vmem:[%s1 + $0x10] sm:$0xf]
      %v212 = vld [vmem:[%s1 + $0x14] sm:$0xf]
      %v213 = vld [vmem:[%s1 + $0x18] sm:$0xf]
      %v214 = vld [vmem:[%s1 + $0x1c] sm:$0xf]
      %v215 = vld [vmem:[%s1 + $0x20] sm:$0xf]
      %v216 = vld [vmem:[%s1 + $0x24] sm:$0xf]
      %v217 = vld [vmem:[%s1 + $0x28] sm:$0xf]
      %v218 = vld [vmem:[%s1 + $0x2c] sm:$0xf]
      %v219 = vld [vmem:[%s1 + $0x30] sm:$0xf]
      %v220 = vld [vmem:[%s1 + $0x34] sm:$0xf]
      %v221 = vld [vmem:[%s1 + $0x38] sm:$0xf]
      %v222 = vld [vmem:[%s1 + $0x3c] sm:$0xf]
      %v223 = vld [vmem:[%s2] sm:$0x1]
      %v225 = vlaneseq
      %v226 = vshrl.u32 %v225, 7
      %v227 = vsub.s32 0, %v226
      %v228 = vrot.slane %v223, %v227
      %v262 = vunpack.c.l.b16 %v175
      %v263 = vunpack.c.l.b16 %v176
      %v264 = vunpack.c.l.b16 %v177
      %v265 = vunpack.c.l.b16 %v178
      %v266 = vunpack.c.l.b16 %v179
      %v267 = vunpack.c.l.b16 %v180
      %v268 = vunpack.c.l.b16 %v181
      %v269 = vunpack.c.l.b16 %v182
      %v270 = vunpack.c.l.b16 %v183
      %v271 = vunpack.c.l.b16 %v184
      %v272 = vunpack.c.l.b16 %v185
      %v273 = vunpack.c.l.b16 %v186
      %v274 = vunpack.c.l.b16 %v187
      %v275 = vunpack.c.l.b16 %v188
      %v276 = vunpack.c.l.b16 %v189
      %v277 = vunpack.c.l.b16 %v190
      %v278 = vunpack.c.l.b16 %v191
      %v279 = vunpack.c.l.b16 %v192
      %v280 = vunpack.c.l.b16 %v193
      %v281 = vunpack.c.l.b16 %v194
      %v282 = vunpack.c.l.b16 %v195
      %v283 = vunpack.c.l.b16 %v196
      %v284 = vunpack.c.l.b16 %v197
      %v285 = vunpack.c.l.b16 %v198
      %v286 = vunpack.c.l.b16 %v199
      %v287 = vunpack.c.l.b16 %v200
      %v288 = vunpack.c.l.b16 %v201
      %v289 = vunpack.c.l.b16 %v202
      %v290 = vunpack.c.l.b16 %v203
      %v291 = vunpack.c.l.b16 %v204
      %v292 = vunpack.c.l.b16 %v205
      %v293 = vunpack.c.l.b16 %v206
      %v294 = vpack.c.b16 %v263, %v262
      %v295 = vpack.c.b16 %v265, %v264
      %v296 = vpack.c.b16 %v267, %v266
      %v297 = vpack.c.b16 %v269, %v268
      %v298 = vpack.c.b16 %v271, %v270
      %v299 = vpack.c.b16 %v273, %v272
      %v300 = vpack.c.b16 %v275, %v274
      %v301 = vpack.c.b16 %v277, %v276
      %v302 = vpack.c.b16 %v279, %v278
      %v303 = vpack.c.b16 %v281, %v280
      %v304 = vpack.c.b16 %v283, %v282
      %v305 = vpack.c.b16 %v285, %v284
      %v306 = vpack.c.b16 %v287, %v286
      %v307 = vpack.c.b16 %v289, %v288
      %v308 = vpack.c.b16 %v291, %v290
      %v309 = vpack.c.b16 %v293, %v292
      %v342 = vunpack.c.l.b16 %v207
      %v343 = vunpack.c.l.b16 %v208
      %v344 = vunpack.c.l.b16 %v209
      %v345 = vunpack.c.l.b16 %v210
      %v346 = vunpack.c.l.b16 %v211
      %v347 = vunpack.c.l.b16 %v212
      %v348 = vunpack.c.l.b16 %v213
      %v349 = vunpack.c.l.b16 %v214
      %v350 = vunpack.c.l.b16 %v215
      %v351 = vunpack.c.l.b16 %v216
      %v352 = vunpack.c.l.b16 %v217
      %v353 = vunpack.c.l.b16 %v218
      %v354 = vunpack.c.l.b16 %v219
      %v355 = vunpack.c.l.b16 %v220
      %v356 = vunpack.c.l.b16 %v221
      %v357 = vunpack.c.l.b16 %v222
      %v358 = vpack.c.b16 %v343, %v342
      %v359 = vpack.c.b16 %v345, %v344
      %v360 = vpack.c.b16 %v347, %v346
      %v361 = vpack.c.b16 %v349, %v348
      %v362 = vpack.c.b16 %v351, %v350
      %v363 = vpack.c.b16 %v353, %v352
      %v364 = vpack.c.b16 %v355, %v354
      %v365 = vpack.c.b16 %v357, %v356
      %374 = vmatprep.subr.bf16.mxu0 0
      %375 = vmatpush1.bf16.msra.mxu0 %v358
      %376 = vmatprep.subr.bf16.mxu0 0
      %377 = vmatpush1.bf16.msra.mxu0 %v359
      %378 = vmatprep.subr.bf16.mxu0 0
      %379 = vmatpush1.bf16.msra.mxu0 %v360
      %380 = vmatprep.subr.bf16.mxu0 0
      %381 = vmatpush1.bf16.msra.mxu0 %v361
      %382 = vmatprep.subr.bf16.mxu0 0
      %383 = vmatpush1.bf16.msra.mxu0 %v362
      %384 = vmatprep.subr.bf16.mxu0 0
      %385 = vmatpush1.bf16.msra.mxu0 %v363
      %386 = vmatprep.subr.bf16.mxu0 0
      %387 = vmatpush1.bf16.msra.mxu0 %v364
      %388 = vmatprep.subr.bf16.mxu0 0
      %389 = vmatpush1.bf16.msra.mxu0 %v365
      %390 = vmatprep.subr.bf16.mxu0 0
      %391 = vmatpush1.bf16.msra.mxu0 0
      %392 = vmatprep.subr.bf16.mxu0 0
      %393 = vmatpush1.bf16.msra.mxu0 0
      %394 = vmatprep.subr.bf16.mxu0 0
      %395 = vmatpush1.bf16.msra.mxu0 0
      %396 = vmatprep.subr.bf16.mxu0 0
      %397 = vmatpush1.bf16.msra.mxu0 0
      %398 = vmatprep.subr.bf16.mxu0 0
      %399 = vmatpush1.bf16.msra.mxu0 0
      %400 = vmatprep.subr.bf16.mxu0 0
      %401 = vmatpush1.bf16.msra.mxu0 0
      %402 = vmatprep.subr.bf16.mxu0 0
      %403 = vmatpush1.bf16.msra.mxu0 0
      %404 = vmatprep.subr.bf16.mxu0 0
      %405 = vmatpush1.bf16.msra.mxu0 0
      %406 = vmatprep.mubr.bf16.mxu0 0
      %407 = vmatmul.mubr.bf16.gmra.mrb[0].mxu0 %v294
      %v408 = vpop.f32.mrb[0].mxu0
      %v409 = vadd.f32 %v228, %v408
      %v410 = vpop.f32.mrb[0].mxu0
      %v411 = vpop.f32.mrb[0].mxu0
      %v412 = vadd.f32 %v228, %v411
      %v413 = vpop.f32.mrb[0].mxu0
      %414 = vmatprep.mubr.bf16.mxu0 0
      %415 = vmatmul.mubr.bf16.gmra.mrb[0].mxu0 %v295
      %v416 = vpop.f32.mrb[0].mxu0
      %v417 = vadd.f32 %v228, %v416
      %v418 = vpop.f32.mrb[0].mxu0
      %v419 = vpop.f32.mrb[0].mxu0
      %v420 = vadd.f32 %v228, %v419
      %v421 = vpop.f32.mrb[0].mxu0
      %422 = vmatprep.mubr.bf16.mxu0 0
      %423 = vmatmul.mubr.bf16.gmra.mrb[0].mxu0 %v296
      %v424 = vpop.f32.mrb[0].mxu0
      %v425 = vadd.f32 %v228, %v424
      %v426 = vpop.f32.mrb[0].mxu0
      %v427 = vpop.f32.mrb[0].mxu0
      %v428 = vadd.f32 %v228, %v427
      %v429 = vpop.f32.mrb[0].mxu0
      %430 = vmatprep.mubr.bf16.mxu0 0
      %431 = vmatmul.mubr.bf16.gmra.mrb[0].mxu0 %v297
      %v432 = vpop.f32.mrb[0].mxu0
      %v433 = vadd.f32 %v228, %v432
      %v434 = vpop.f32.mrb[0].mxu0
      %v435 = vpop.f32.mrb[0].mxu0
      %v436 = vadd.f32 %v228, %v435
      %v437 = vpop.f32.mrb[0].mxu0
      %438 = vmatprep.mubr.bf16.mxu0 0
      %439 = vmatmul.mubr.bf16.gmra.mrb[0].mxu0 %v298
      %v440 = vpop.f32.mrb[0].mxu0
      %v441 = vadd.f32 %v228, %v440
      %v442 = vpop.f32.mrb[0].mxu0
      %v443 = vpop.f32.mrb[0].mxu0
      %v444 = vadd.f32 %v228, %v443
      %v445 = vpop.f32.mrb[0].mxu0
      %446 = vmatprep.mubr.bf16.mxu0 0
      %447 = vmatmul.mubr.bf16.gmra.mrb[0].mxu0 %v299
      %v448 = vpop.f32.mrb[0].mxu0
      %v449 = vadd.f32 %v228, %v448
      %v450 = vpop.f32.mrb[0].mxu0
      %v451 = vpop.f32.mrb[0].mxu0
      %v452 = vadd.f32 %v228, %v451
      %v453 = vpop.f32.mrb[0].mxu0
      %454 = vmatprep.mubr.bf16.mxu0 0
      %455 = vmatmul.mubr.bf16.gmra.mrb[0].mxu0 %v300
      %v456 = vpop.f32.mrb[0].mxu0
      %v457 = vadd.f32 %v228, %v456
      %v458 = vpop.f32.mrb[0].mxu0
      %v459 = vpop.f32.mrb[0].mxu0
      %v460 = vadd.f32 %v228, %v459
      %v461 = vpop.f32.mrb[0].mxu0
      %462 = vmatprep.mubr.bf16.mxu0 0
      %463 = vmatmul.mubr.bf16.gmra.mrb[0].mxu0 %v301
      %v464 = vpop.f32.mrb[0].mxu0
      %v465 = vadd.f32 %v228, %v464
      %v466 = vpop.f32.mrb[0].mxu0
      %v467 = vpop.f32.mrb[0].mxu0
      %v468 = vadd.f32 %v228, %v467
      %v469 = vpop.f32.mrb[0].mxu0
      %470 = vmatprep.mubr.bf16.mxu0 0
      %471 = vmatmul.mubr.bf16.gmra.mrb[0].mxu0 %v302
      %v472 = vpop.f32.mrb[0].mxu0
      %v473 = vadd.f32 %v228, %v472
      %v474 = vpop.f32.mrb[0].mxu0
      %v475 = vpop.f32.mrb[0].mxu0
      %v476 = vadd.f32 %v228, %v475
      %v477 = vpop.f32.mrb[0].mxu0
      %478 = vmatprep.mubr.bf16.mxu0 0
      %479 = vmatmul.mubr.bf16.gmra.mrb[0].mxu0 %v303
      %v480 = vpop.f32.mrb[0].mxu0
      %v481 = vadd.f32 %v228, %v480
      %v482 = vpop.f32.mrb[0].mxu0
      %v483 = vpop.f32.mrb[0].mxu0
      %v484 = vadd.f32 %v228, %v483
      %v485 = vpop.f32.mrb[0].mxu0
      %486 = vmatprep.mubr.bf16.mxu0 0
      %487 = vmatmul.mubr.bf16.gmra.mrb[0].mxu0 %v304
      %v488 = vpop.f32.mrb[0].mxu0
      %v489 = vadd.f32 %v228, %v488
      %v490 = vpop.f32.mrb[0].mxu0
      %v491 = vpop.f32.mrb[0].mxu0
      %v492 = vadd.f32 %v228, %v491
      %v493 = vpop.f32.mrb[0].mxu0
      %494 = vmatprep.mubr.bf16.mxu0 0
      %495 = vmatmul.mubr.bf16.gmra.mrb[0].mxu0 %v305
      %v496 = vpop.f32.mrb[0].mxu0
      %v497 = vadd.f32 %v228, %v496
      %v498 = vpop.f32.mrb[0].mxu0
      %v499 = vpop.f32.mrb[0].mxu0
      %v500 = vadd.f32 %v228, %v499
      %v501 = vpop.f32.mrb[0].mxu0
      %502 = vmatprep.mubr.bf16.mxu0 0
      %503 = vmatmul.mubr.bf16.gmra.mrb[0].mxu0 %v306
      %v504 = vpop.f32.mrb[0].mxu0
      %v505 = vadd.f32 %v228, %v504
      %v506 = vpop.f32.mrb[0].mxu0
      %v507 = vpop.f32.mrb[0].mxu0
      %v508 = vadd.f32 %v228, %v507
      %v509 = vpop.f32.mrb[0].mxu0
      %510 = vmatprep.mubr.bf16.mxu0 0
      %511 = vmatmul.mubr.bf16.gmra.mrb[0].mxu0 %v307
      %v512 = vpop.f32.mrb[0].mxu0
      %v513 = vadd.f32 %v228, %v512
      %v514 = vpop.f32.mrb[0].mxu0
      %v515 = vpop.f32.mrb[0].mxu0
      %v516 = vadd.f32 %v228, %v515
      %v517 = vpop.f32.mrb[0].mxu0
      %518 = vmatprep.mubr.bf16.mxu0 0
      %519 = vmatmul.mubr.bf16.gmra.mrb[0].mxu0 %v308
      %v520 = vpop.f32.mrb[0].mxu0
      %v521 = vadd.f32 %v228, %v520
      %v522 = vpop.f32.mrb[0].mxu0
      %v523 = vpop.f32.mrb[0].mxu0
      %v524 = vadd.f32 %v228, %v523
      %v525 = vpop.f32.mrb[0].mxu0
      %526 = vmatprep.mubr.bf16.mxu0 0
      %527 = vmatmul.mubr.bf16.gmra.mrb[0].mxu0 %v309
      %v528 = vpop.f32.mrb[0].mxu0
      %v529 = vadd.f32 %v228, %v528
      %v530 = vpop.f32.mrb[0].mxu0
      %v531 = vpop.f32.mrb[0].mxu0
      %v532 = vadd.f32 %v228, %v531
      %v533 = vpop.f32.mrb[0].mxu0
      %534 = vdwg.mxu0
      %535 = vst [vmem:[%s172] sm:$0xff] %v409
      %536 = vst [vmem:[%s172 + $0x8] sm:$0xff] %v412
      %537 = vst [vmem:[%s172 + $0x10] sm:$0xff] %v417
      %538 = vst [vmem:[%s172 + $0x18] sm:$0xff] %v420
      %539 = vst [vmem:[%s172 + $0x20] sm:$0xff] %v425
      %540 = vst [vmem:[%s172 + $0x28] sm:$0xff] %v428
      %541 = vst [vmem:[%s172 + $0x30] sm:$0xff] %v433
      %542 = vst [vmem:[%s172 + $0x38] sm:$0xff] %v436
      %543 = vst [vmem:[%s172 + $0x40] sm:$0xff] %v441
      %544 = vst [vmem:[%s172 + $0x48] sm:$0xff] %v444
      %545 = vst [vmem:[%s172 + $0x50] sm:$0xff] %v449
      %546 = vst [vmem:[%s172 + $0x58] sm:$0xff] %v452
      %547 = vst [vmem:[%s172 + $0x60] sm:$0xff] %v457
      %548 = vst [vmem:[%s172 + $0x68] sm:$0xff] %v460
      %549 = vst [vmem:[%s172 + $0x70] sm:$0xff] %v465
      %550 = vst [vmem:[%s172 + $0x78] sm:$0xff] %v468
      %551 = vst [vmem:[%s172 + $0x80] sm:$0xff] %v473
      %552 = vst [vmem:[%s172 + $0x88] sm:$0xff] %v476
      %553 = vst [vmem:[%s172 + $0x90] sm:$0xff] %v481
      %554 = vst [vmem:[%s172 + $0x98] sm:$0xff] %v484
      %555 = vst [vmem:[%s172 + $0xa0] sm:$0xff] %v489
      %556 = vst [vmem:[%s172 + $0xa8] sm:$0xff] %v492
      %557 = vst [vmem:[%s172 + $0xb0] sm:$0xff] %v497
      %558 = vst [vmem:[%s172 + $0xb8] sm:$0xff] %v500
      %559 = vst [vmem:[%s172 + $0xc0] sm:$0xff] %v505
      %560 = vst [vmem:[%s172 + $0xc8] sm:$0xff] %v508
      %561 = vst [vmem:[%s172 + $0xd0] sm:$0xff] %v513
      %562 = vst [vmem:[%s172 + $0xd8] sm:$0xff] %v516
      %563 = vst [vmem:[%s172 + $0xe0] sm:$0xff] %v521
      %564 = vst [vmem:[%s172 + $0xe8] sm:$0xff] %v524
      %565 = vst [vmem:[%s172 + $0xf0] sm:$0xff] %v529
      %566 = vst [vmem:[%s172 + $0xf8] sm:$0xff] %v532
      %s567 = smul.u32 32, %s14
      %p568 = scmp.lt.s32.totalorder %s567, 63
      %s569 = scalar_select %p568, %s567, 63
      %s570 = smul.addr %s569, 8
      %s571 = scalar_lea.vmem %s3, %s570
      // Predicated region
      $region33: #{decoder_forward.9} parent=31 // pred_check
        %p572 = pneg %p100
      $region34: #{decoder_forward.9} parent=31 // pred_check_branch
        %574 = sbr.rel (%p572) target = $region36
      $region35: #{decoder_forward.9} parent=31 // pred_region
        %s575 = smul.u32 32, %s14
      $region36: #{decoder_forward.9} parent=31 // pred_fallthru
        _
    $region32: #{decoder_forward.9} parent=5 // pred_fallthru
      _
    %p576 = scmp.le.s32.totalorder 2, %s9
    // Predicated region
    $region37: #{decoder_forward.9} parent=5 // pred_check
      %p577 = pneg %p576
    $region38: #{decoder_forward.9} parent=5 // pred_check_branch
      %579 = sbr.rel (%p577) target = $region40
    $region39: #{decoder_forward.9} parent=5 // pred_region
      %s580 = ssub.s32 %s9, 2
      // Predicated region
      $region41: #{decoder_forward.9} parent=39 // pred_check
        %p581 = pneg %p106
      $region42: #{decoder_forward.9} parent=39 // pred_check_branch
        %583 = sbr.rel (%p581) target = $region44
      $region43: #{decoder_forward.9} parent=39 // pred_region
        %s584 = smul.u32 32, %s15
        %p585 = scmp.lt.s32.totalorder %s584, 63
        %s586 = scalar_select %p585, %s584, 63
        %s587 = smul.addr %s586, 8
        %s588 = scalar_lea.vmem %s3, %s587
      $region44: #{decoder_forward.9} parent=39 // pred_fallthru
        _
    $region40: #{decoder_forward.9} parent=5 // pred_fallthru
      _
  $region6: #{decoder_forward.9} parent=0 // loop_footer
    %s13 = sadd.s32 1, %s9
  $region7: #{decoder_forward.9} parent=0 // loop_footer_branch
    %8 = sbr.rel target = $region3
  $region8: #{decoder_forward.9} parent=0 // loop_exit
    _

</llo_original>
